<compile_context>
chip_gen: v6e
topology: v6e:2x2x1
jax: 0.10.0
libtpu: 0.0.40
codegen_flags: <defaults>
</compile_context>

<pallas_src>
import functools

import jax
import jax.numpy as jnp
from jax.experimental import pallas as pl
from jax.experimental.pallas import tpu as pltpu

_INV_SQRT2 = 0.7071067811865476


def _round_up(n, m):
    return ((n + m - 1) // m) * m


# ----------------------------------------------------------------------------
# In-kernel math helpers (only ops with guaranteed Mosaic lowerings).
# ----------------------------------------------------------------------------
def _erf_approx(x):
    # Abramowitz & Stegun 7.1.26, max abs error ~1.5e-7 (vs torch's exact erf).
    a1, a2, a3, a4, a5 = (0.254829592, -0.284496736, 1.421413741,
                          -1.453152027, 1.061405429)
    p = 0.3275911
    ax = jnp.abs(x)
    t = 1.0 / (1.0 + p * ax)
    poly = ((((a5 * t + a4) * t + a3) * t + a2) * t + a1) * t
    y = 1.0 - poly * jnp.exp(-ax * ax)
    return jnp.where(x < 0.0, -y, y)


def _gelu_k(x):
    # Exact (erf-based) GELU, matching torch.nn.GELU() default up to ~1e-7.
    return 0.5 * x * (1.0 + _erf_approx(x * _INV_SQRT2))


def _sigmoid_k(x):
    return 1.0 / (1.0 + jnp.exp(-x))


# ----------------------------------------------------------------------------
# Kernel A: conv3d (as im2col matmul) + bias + GELU + per-(batch,chan) SE scale
# ----------------------------------------------------------------------------
def _conv_gelu_kernel(scale_ref, patch_ref, w_ref, bias_ref, o_ref, *,
                      dhw, tm, mpad):
    # scale_ref: (1, 1, K) bf16  per-(batch, in-channel) scale tiled over taps
    # patch_ref: (tm, K)   bf16  im2col patches, K = 27*C (tap-major, C minor)
    # w_ref:     (K, C)    bf16  conv weight, resident across the grid
    # bias_ref:  (1, C)    f32
    # o_ref:     (tm, C)   f32
    p = patch_ref[...] * scale_ref[0]
    y = jnp.dot(p, w_ref[...], preferred_element_type=jnp.float32)
    y = _gelu_k(y + bias_ref[...])
    if mpad != dhw:  # zero the padded rows so downstream GroupNorm stats stay clean
        i = pl.program_id(1)
        row = i * tm + jax.lax.broadcasted_iota(jnp.int32, (tm, 1), 0)
        y = jnp.where(row < dhw, y, 0.0)
    o_ref[...] = y


# ----------------------------------------------------------------------------
# Kernel B: GroupNorm(1, C) (+ optional fused avg-pool + squeeze-excite MLP)
# ----------------------------------------------------------------------------
def _gn_stats(y, dhw):
    # y: (mpad, C) f32, padded rows are zero.  Single fused pass: sum & sumsq.
    c = y.shape[-1]
    cnt = float(dhw * c)
    col_sum = jnp.sum(y, axis=0, keepdims=True)          # (1, C)
    s1 = jnp.sum(col_sum)
    s2 = jnp.sum(y * y)
    mu = s1 / cnt
    var = s2 / cnt - mu * mu
    inv = jax.lax.rsqrt(var + 1e-5)                      # torch GroupNorm eps
    return col_sum, mu, inv


def _gn_kernel(y_ref, g_ref, b_ref, o_ref, *, dhw):
    y = y_ref[...]
    _, mu, inv = _gn_stats(y, dhw)
    o_ref[...] = (y - mu) * inv * g_ref[...] + b_ref[...]


def _gn_se_kernel(y_ref, g_ref, b_ref, w1_ref, b1_ref, w2_ref, b2_ref,
                  data_ref, scale_ref, *, dhw):
    y = y_ref[...]
    col_sum, mu, inv = _gn_stats(y, dhw)
    g = g_ref[...]
    b = b_ref[...]
    data_ref[...] = (y - mu) * inv * g + b
    # AdaptiveAvgPool3d(1) of the normalized data == affine of the column mean
    pool = (col_sum * (1.0 / float(dhw)) - mu) * inv * g + b          # (1, C)
    h = _gelu_k(jnp.dot(pool, w1_ref[...],
                        preferred_element_type=jnp.float32) + b1_ref[...])
    s = _gelu_k(jnp.dot(h, w2_ref[...],
                        preferred_element_type=jnp.float32) + b2_ref[...])
    scale_ref[...] = _sigmoid_k(s).reshape(scale_ref.shape)


# ----------------------------------------------------------------------------
# Host-side glue (im2col, pallas_call wrappers)
# ----------------------------------------------------------------------------
def _im2col_k3s1p1(x_ndhwc, mpad):
    """[B,D,H,W,C] -> [B*mpad, 27*C] bf16 patches.

    Flat K index = tap*C + c with tap = kd*9 + kh*3 + kw: the stack keeps C on
    the minor axis, so the big patches tensor is never transposed (the small
    weight is permuted instead)."""
    B, D, H, W, C = x_ndhwc.shape
    xp = jnp.pad(x_ndhwc, ((0, 0), (1, 1), (1, 1), (1, 1), (0, 0)))
    taps = [xp[:, kd:kd + D, kh:kh + H, kw:kw + W, :]
            for kd in range(3) for kh in range(3) for kw in range(3)]
    p = jnp.stack(taps, axis=4).reshape(B, D * H * W, 27 * C)
    if mpad != D * H * W:
        p = jnp.pad(p, ((0, 0), (0, mpad - D * H * W), (0, 0)))
    return p.reshape(B * mpad, 27 * C).astype(jnp.bfloat16)


def _conv3x3x3_gelu(patches, w_mat, bias_row, scale_tiled, *, B, C, dhw, mpad, tm):
    K = patches.shape[1]
    T = mpad // tm
    kern = functools.partial(_conv_gelu_kernel, dhw=dhw, tm=tm, mpad=mpad)
    return pl.pallas_call(
        kern,
        out_shape=jax.ShapeDtypeStruct((B * mpad, C), jnp.float32),
        grid=(B, T),
        in_specs=[
            pl.BlockSpec((1, 1, K), lambda b, i: (b, 0, 0)),      # SE scale (tiled)
            pl.BlockSpec((tm, K), lambda b, i: (b * T + i, 0)),   # patches
            pl.BlockSpec((K, C), lambda b, i: (0, 0)),            # weight (resident)
            pl.BlockSpec((1, C), lambda b, i: (0, 0)),            # bias
        ],
        out_specs=pl.BlockSpec((tm, C), lambda b, i: (b * T + i, 0)),
        compiler_params=pltpu.CompilerParams(
            dimension_semantics=("parallel", "parallel"),
            vmem_limit_bytes=48 * 1024 * 1024,
        ),
    )(scale_tiled, patches, w_mat, bias_row)


def _gn_se(y, gamma, beta, w1, b1, w2, b2, *, B, C, dhw, mpad):
    csq = C // 8
    kern = functools.partial(_gn_se_kernel, dhw=dhw)
    return pl.pallas_call(
        kern,
        out_shape=(jax.ShapeDtypeStruct((B * mpad, C), jnp.float32),
                   jax.ShapeDtypeStruct((B, 1, C), jnp.float32)),
        grid=(B,),
        in_specs=[
            pl.BlockSpec((mpad, C), lambda b: (b, 0)),
            pl.BlockSpec((1, C), lambda b: (0, 0)),
            pl.BlockSpec((1, C), lambda b: (0, 0)),
            pl.BlockSpec((C, csq), lambda b: (0, 0)),
            pl.BlockSpec((1, csq), lambda b: (0, 0)),
            pl.BlockSpec((csq, C), lambda b: (0, 0)),
            pl.BlockSpec((1, C), lambda b: (0, 0)),
        ],
        out_specs=(pl.BlockSpec((mpad, C), lambda b: (b, 0)),
                   pl.BlockSpec((1, 1, C), lambda b: (b, 0, 0))),
        compiler_params=pltpu.CompilerParams(dimension_semantics=("parallel",)),
    )(y, gamma, beta, w1, b1, w2, b2)


def _gn(y, gamma, beta, *, B, C, dhw, mpad):
    kern = functools.partial(_gn_kernel, dhw=dhw)
    return pl.pallas_call(
        kern,
        out_shape=jax.ShapeDtypeStruct((B * mpad, C), jnp.float32),
        grid=(B,),
        in_specs=[pl.BlockSpec((mpad, C), lambda b: (b, 0)),
                  pl.BlockSpec((1, C), lambda b: (0, 0)),
                  pl.BlockSpec((1, C), lambda b: (0, 0))],
        out_specs=pl.BlockSpec((mpad, C), lambda b: (b, 0)),
        compiler_params=pltpu.CompilerParams(dimension_semantics=("parallel",)),
    )(y, gamma, beta)


# ----------------------------------------------------------------------------
# Full CA3D forward
# ----------------------------------------------------------------------------
def ca3d_forward(x_ncdhw, params, *, tm=256):
    """CA3D forward.  x: [B, C, D, H, W] (NCDHW, as in the PyTorch module)."""
    B, C, D, H, W = x_ncdhw.shape
    dhw = D * H * W
    tm_eff = min(tm, _round_up(dhw, 8))
    mpad = _round_up(dhw, tm_eff)
    taps = 27

    x = jnp.transpose(x_ncdhw, (0, 2, 3, 4, 1))                  # NDHWC (C on lanes)

    # Conv weights [O, I, kd, kh, kw] -> [27*I, O] with row index tap*I + i
    # (the cheap weight permutation replaces the big patches transpose).
    wm1 = jnp.transpose(params["conv1_w"], (2, 3, 4, 1, 0)).reshape(taps * C, C).astype(jnp.bfloat16)
    wm2 = jnp.transpose(params["conv3_w"], (2, 3, 4, 1, 0)).reshape(taps * C, C).astype(jnp.bfloat16)
    bm1 = params["conv1_b"].reshape(1, C).astype(jnp.float32)
    bm2 = params["conv3_b"].reshape(1, C).astype(jnp.float32)
    g1 = params["gn1_g"].reshape(1, C).astype(jnp.float32)
    be1 = params["gn1_b"].reshape(1, C).astype(jnp.float32)
    g2 = params["gn2_g"].reshape(1, C).astype(jnp.float32)
    be2 = params["gn2_b"].reshape(1, C).astype(jnp.float32)
    w_se1 = params["se_w1"].reshape(C // 8, C).T.astype(jnp.float32)   # (C, C//8)
    b_se1 = params["se_b1"].reshape(1, C // 8).astype(jnp.float32)
    w_se2 = params["se_w2"].reshape(C, C // 8).T.astype(jnp.float32)   # (C//8, C)
    b_se2 = params["se_b2"].reshape(1, C).astype(jnp.float32)

    # --- conv1 -> GELU -> GroupNorm(1,C), fused with avg-pool + SE + sigmoid ---
    ones_scale = jnp.ones((B, 1, taps * C), jnp.bfloat16)
    p1 = _im2col_k3s1p1(x, mpad)
    y1 = _conv3x3x3_gelu(p1, wm1, bm1, ones_scale,
                         B=B, C=C, dhw=dhw, mpad=mpad, tm=tm_eff)
    data1, se_scale = _gn_se(y1, g1, be1, w_se1, b_se1, w_se2, b_se2,
                             B=B, C=C, dhw=dhw, mpad=mpad)

    # --- out = sigmoid(SE) * data  ->  conv -> GELU -> GroupNorm(1,C) ---
    data1_ndhwc = data1.reshape(B, mpad, C)[:, :dhw, :].reshape(B, D, H, W, C)
    p2 = _im2col_k3s1p1(data1_ndhwc, mpad)
    # Per-(batch, input-channel) SE scale is folded into the conv kernel by
    # scaling the patch columns (tap-major layout -> column k gets scale[k % C]).
    se_tiled = jnp.tile(se_scale, (1, 1, taps)).astype(jnp.bfloat16)   # (B,1,27C)
    y2 = _conv3x3x3_gelu(p2, wm2, bm2, se_tiled,
                         B=B, C=C, dhw=dhw, mpad=mpad, tm=tm_eff)
    data2 = _gn(y2, g2, be2, B=B, C=C, dhw=dhw, mpad=mpad)

    out = data2.reshape(B, mpad, C)[:, :dhw, :].reshape(B, D, H, W, C)
    return jnp.transpose(out, (0, 4, 1, 2, 3))                   # back to NCDHW


# ----------------------------------------------------------------------------
# Pure-JAX reference (mirrors the PyTorch module; conv inputs/weights rounded
# to bf16 to match the kernel's MXU feed, all other arithmetic f32).
# ----------------------------------------------------------------------------
def _reference(x_ncdhw, params):
    C = x_ncdhw.shape[1]

    def conv3(x_, w, b):
        y = jax.lax.conv_general_dilated(
            x_.astype(jnp.bfloat16), w.astype(jnp.bfloat16),
            window_strides=(1, 1, 1), padding=((1, 1), (1, 1), (1, 1)),
            dimension_numbers=("NCDHW", "OIDHW", "NCDHW"),
            preferred_element_type=jnp.float32)
        return y + b.reshape(1, -1, 1, 1, 1)

    def gelu(x_):
        return 0.5 * x_ * (1.0 + jax.lax.erf(x_ * _INV_SQRT2))

    def gn(x_, g, b):
        mu = jnp.mean(x_, axis=(1, 2, 3, 4), keepdims=True)
        var = jnp.mean((x_ - mu) ** 2, axis=(1, 2, 3, 4), keepdims=True)
        xn = (x_ - mu) * jax.lax.rsqrt(var + 1e-5)
        return xn * g.reshape(1, -1, 1, 1, 1) + b.reshape(1, -1, 1, 1, 1)

    data = gn(gelu(conv3(x_ncdhw, params["conv1_w"], params["conv1_b"])),
              params["gn1_g"], params["gn1_b"])
    pool = jnp.mean(data, axis=(2, 3, 4))                         # (B, C)
    w1 = params["se_w1"].reshape(C // 8, C)
    w2 = params["se_w2"].reshape(C, C // 8)
    h = gelu(pool @ w1.T + params["se_b1"])
    s = gelu(h @ w2.T + params["se_b2"])
    se = jax.nn.sigmoid(s)                                        # (B, C)
    scaled = (data.astype(jnp.bfloat16)
              * se[:, :, None, None, None].astype(jnp.bfloat16)).astype(jnp.float32)
    out = gn(gelu(conv3(scaled, params["conv3_w"], params["conv3_b"])),
             params["gn2_g"], params["gn2_b"])
    return out


if __name__ == "__main__":
    key = jax.random.PRNGKey(0)
    ks = jax.random.split(key, 13)

    B, C, D, H, W = 2, 16, 8, 8, 8
    x = jax.random.normal(ks[0], (B, C, D, H, W), dtype=jnp.float32)

    params = {
        "conv1_w": 0.1 * jax.random.normal(ks[1], (C, C, 3, 3, 3), jnp.float32),
        "conv1_b": 0.05 * jax.random.normal(ks[2], (C,), jnp.float32),
        "gn1_g": 1.0 + 0.05 * jax.random.normal(ks[3], (C,), jnp.float32),
        "gn1_b": 0.05 * jax.random.normal(ks[4], (C,), jnp.float32),
        "se_w1": 0.2 * jax.random.normal(ks[5], (C // 8, C, 1, 1, 1), jnp.float32),
        "se_b1": 0.05 * jax.random.normal(ks[6], (C // 8,), jnp.float32),
        "se_w2": 0.2 * jax.random.normal(ks[7], (C, C // 8, 1, 1, 1), jnp.float32),
        "se_b2": 0.05 * jax.random.normal(ks[8], (C,), jnp.float32),
        "conv3_w": 0.1 * jax.random.normal(ks[9], (C, C, 3, 3, 3), jnp.float32),
        "conv3_b": 0.05 * jax.random.normal(ks[10], (C,), jnp.float32),
        "gn2_g": 1.0 + 0.05 * jax.random.normal(ks[11], (C,), jnp.float32),
        "gn2_b": 0.05 * jax.random.normal(ks[12], (C,), jnp.float32),
    }

    out = jax.jit(ca3d_forward)(x, params)
    out = jax.block_until_ready(out)

    ref = _reference(x, params)
    assert out.shape == (B, C, D, H, W), out.shape
    max_err = float(jnp.max(jnp.abs(out - ref)))
    assert jnp.allclose(out, ref, atol=1e-2, rtol=1e-2), (
        f"mismatch vs reference (max abs err {max_err})")

    print("KERNEL_OK")
</pallas_src>

<mosaic_0001>
module attributes {stable_mosaic.version = 11 : i64} {
  func.func @_conv_gelu_kernel(%arg0: i32, %arg1: i32, %arg2: memref<1x1x432xbf16, #tpu.memory_space<vmem>>, %arg3: memref<256x432xbf16, #tpu.memory_space<vmem>>, %arg4: memref<432x16xbf16, #tpu.memory_space<vmem>>, %arg5: memref<1x16xf32, #tpu.memory_space<vmem>>, %arg6: memref<256x16xf32, #tpu.memory_space<vmem>>) attributes {dimension_semantics = [#tpu.dimension_semantics<parallel>, #tpu.dimension_semantics<parallel>], iteration_bounds = array<i64: 2, 2>, scalar_prefetch = 0 : i64, scratch_operands = 0 : i64, tpu.core_type = #tpu.core_type<tc>, window_params = [{transform_indices = @transform_0, window_bounds = array<i64: 1, 1, 432>}, {transform_indices = @transform_1, window_bounds = array<i64: 256, 432>}, {pipeline_mode = #tpu.pipeline_mode<synchronous>, transform_indices = @transform_2, window_bounds = array<i64: 432, 16>}, {pipeline_mode = #tpu.pipeline_mode<synchronous>, transform_indices = @transform_3, window_bounds = array<i64: 1, 16>}, {transform_indices = @transform_4, window_bounds = array<i64: 256, 16>}]} {
    %c0 = arith.constant 0 : index
    %c0_0 = arith.constant 0 : index
    %0 = vector.load %arg3[%c0, %c0_0] : memref<256x432xbf16, #tpu.memory_space<vmem>>, vector<256x432xbf16>
    %c0_1 = arith.constant 0 : index
    %c0_2 = arith.constant 0 : index
    %c0_3 = arith.constant 0 : index
    %1 = vector.load %arg2[%c0_1, %c0_2, %c0_3] : memref<1x1x432xbf16, #tpu.memory_space<vmem>>, vector<1x1x432xbf16>
    %2 = vector.shape_cast %1 : vector<1x1x432xbf16> to vector<1x432xbf16>
    %3 = vector.broadcast %2 : vector<1x432xbf16> to vector<256x432xbf16>
    %4 = arith.mulf %0, %3 : vector<256x432xbf16>
    %c0_4 = arith.constant 0 : index
    %c0_5 = arith.constant 0 : index
    %5 = vector.load %arg4[%c0_4, %c0_5] : memref<432x16xbf16, #tpu.memory_space<vmem>>, vector<432x16xbf16>
    %cst = arith.constant dense<0.000000e+00> : vector<256x16xf32>
    %6 = tpu.matmul %4, %5, %cst {dimension_numbers = #tpu.dot_dimension_numbers<[1], [0], [0], [1], [0, 0, 1, 1], [], []>} : vector<256x432xbf16>, vector<432x16xbf16>, vector<256x16xf32> -> vector<256x16xf32>
    %c0_6 = arith.constant 0 : index
    %c0_7 = arith.constant 0 : index
    %7 = vector.load %arg5[%c0_6, %c0_7] : memref<1x16xf32, #tpu.memory_space<vmem>>, vector<1x16xf32>
    %8 = vector.broadcast %7 : vector<1x16xf32> to vector<256x16xf32>
    %9 = arith.addf %6, %8 : vector<256x16xf32>
    %cst_8 = arith.constant 5.000000e-01 : f32
    %10 = vector.broadcast %cst_8 : f32 to vector<256x16xf32>
    %11 = arith.mulf %10, %9 : vector<256x16xf32>
    %cst_9 = arith.constant 0.707106769 : f32
    %12 = vector.broadcast %cst_9 : f32 to vector<256x16xf32>
    %13 = arith.mulf %9, %12 : vector<256x16xf32>
    %14 = math.absf %13 : vector<256x16xf32>
    %cst_10 = arith.constant 0.327591091 : f32
    %15 = vector.broadcast %cst_10 : f32 to vector<256x16xf32>
    %16 = arith.mulf %15, %14 : vector<256x16xf32>
    %cst_11 = arith.constant 1.000000e+00 : f32
    %17 = vector.broadcast %cst_11 : f32 to vector<256x16xf32>
    %18 = arith.addf %17, %16 : vector<256x16xf32>
    %cst_12 = arith.constant 1.000000e+00 : f32
    %19 = vector.broadcast %cst_12 : f32 to vector<256x16xf32>
    %20 = arith.divf %19, %18 : vector<256x16xf32>
    %cst_13 = arith.constant 1.06140542 : f32
    %21 = vector.broadcast %cst_13 : f32 to vector<256x16xf32>
    %22 = arith.mulf %21, %20 : vector<256x16xf32>
    %cst_14 = arith.constant -1.45315206 : f32
    %23 = vector.broadcast %cst_14 : f32 to vector<256x16xf32>
    %24 = arith.addf %22, %23 : vector<256x16xf32>
    %25 = arith.mulf %24, %20 : vector<256x16xf32>
    %cst_15 = arith.constant 1.42141378 : f32
    %26 = vector.broadcast %cst_15 : f32 to vector<256x16xf32>
    %27 = arith.addf %25, %26 : vector<256x16xf32>
    %28 = arith.mulf %27, %20 : vector<256x16xf32>
    %cst_16 = arith.constant -0.284496725 : f32
    %29 = vector.broadcast %cst_16 : f32 to vector<256x16xf32>
    %30 = arith.addf %28, %29 : vector<256x16xf32>
    %31 = arith.mulf %30, %20 : vector<256x16xf32>
    %cst_17 = arith.constant 0.254829586 : f32
    %32 = vector.broadcast %cst_17 : f32 to vector<256x16xf32>
    %33 = arith.addf %31, %32 : vector<256x16xf32>
    %34 = arith.mulf %33, %20 : vector<256x16xf32>
    %cst_18 = arith.constant 0.000000e+00 : f32
    %35 = vector.broadcast %cst_18 : f32 to vector<256x16xf32>
    %36 = arith.subf %35, %14 : vector<256x16xf32>
    %37 = arith.mulf %36, %14 : vector<256x16xf32>
    %38 = math.exp %37 : vector<256x16xf32>
    %39 = arith.mulf %34, %38 : vector<256x16xf32>
    %cst_19 = arith.constant 1.000000e+00 : f32
    %40 = vector.broadcast %cst_19 : f32 to vector<256x16xf32>
    %41 = arith.subf %40, %39 : vector<256x16xf32>
    %cst_20 = arith.constant 0.000000e+00 : f32
    %42 = vector.broadcast %cst_20 : f32 to vector<256x16xf32>
    %43 = arith.cmpf olt, %13, %42 : vector<256x16xf32>
    %cst_21 = arith.constant 0.000000e+00 : f32
    %44 = vector.broadcast %cst_21 : f32 to vector<256x16xf32>
    %45 = arith.subf %44, %41 : vector<256x16xf32>
    %46 = arith.select %43, %45, %41 : vector<256x16xi1>, vector<256x16xf32>
    %cst_22 = arith.constant 1.000000e+00 : f32
    %47 = vector.broadcast %cst_22 : f32 to vector<256x16xf32>
    %48 = arith.addf %47, %46 : vector<256x16xf32>
    %49 = arith.mulf %11, %48 : vector<256x16xf32>
    %c0_23 = arith.constant 0 : index
    %c0_24 = arith.constant 0 : index
    %50 = vector.load %arg6[%c0_23, %c0_24] : memref<256x16xf32, #tpu.memory_space<vmem>>, vector<256x16xf32>
    tpu.vector_store %arg6[%c0_23, %c0_24], %49 {strides = array<i32>} : memref<256x16xf32, #tpu.memory_space<vmem>>, vector<256x16xf32>,
    return
  }
  func.func @transform_0(%arg0: i32, %arg1: i32) -> (i32, i32, i32) {
    %c0_i32 = arith.constant 0 : i32
    %c0_i32_0 = arith.constant 0 : i32
    %c0_i32_1 = arith.constant 0 : i32
    return %arg0, %c0_i32, %c0_i32_0 : i32, i32, i32
  }
  func.func @transform_1(%arg0: i32, %arg1: i32) -> (i32, i32) {
    %c2_i32 = arith.constant 2 : i32
    %0 = arith.muli %arg0, %c2_i32 : i32
    %1 = arith.addi %0, %arg1 : i32
    %c0_i32 = arith.constant 0 : i32
    %c0_i32_0 = arith.constant 0 : i32
    return %1, %c0_i32 : i32, i32
  }
  func.func @transform_2(%arg0: i32, %arg1: i32) -> (i32, i32) {
    %c0_i32 = arith.constant 0 : i32
    %c0_i32_0 = arith.constant 0 : i32
    %c0_i32_1 = arith.constant 0 : i32
    return %c0_i32, %c0_i32_0 : i32, i32
  }
  func.func @transform_3(%arg0: i32, %arg1: i32) -> (i32, i32) {
    %c0_i32 = arith.constant 0 : i32
    %c0_i32_0 = arith.constant 0 : i32
    %c0_i32_1 = arith.constant 0 : i32
    return %c0_i32, %c0_i32_0 : i32, i32
  }
  func.func @transform_4(%arg0: i32, %arg1: i32) -> (i32, i32) {
    %c2_i32 = arith.constant 2 : i32
    %0 = arith.muli %arg0, %c2_i32 : i32
    %1 = arith.addi %0, %arg1 : i32
    %c0_i32 = arith.constant 0 : i32
    %c0_i32_0 = arith.constant 0 : i32
    return %1, %c0_i32 : i32, i32
  }
}

module attributes {stable_mosaic.version = 11 : i64} {
  func.func @_gn_se_kernel(%arg0: i32, %arg1: memref<512x16xf32, #tpu.memory_space<vmem>>, %arg2: memref<1x16xf32, #tpu.memory_space<vmem>>, %arg3: memref<1x16xf32, #tpu.memory_space<vmem>>, %arg4: memref<16x2xf32, #tpu.memory_space<vmem>>, %arg5: memref<1x2xf32, #tpu.memory_space<vmem>>, %arg6: memref<2x16xf32, #tpu.memory_space<vmem>>, %arg7: memref<1x16xf32, #tpu.memory_space<vmem>>, %arg8: memref<512x16xf32, #tpu.memory_space<vmem>>, %arg9: memref<1x1x16xf32, #tpu.memory_space<vmem>>) attributes {dimension_semantics = [#tpu.dimension_semantics<parallel>], iteration_bounds = array<i64: 2>, scalar_prefetch = 0 : i64, scratch_operands = 0 : i64, tpu.core_type = #tpu.core_type<tc>, window_params = [{transform_indices = @transform_0, window_bounds = array<i64: 512, 16>}, {pipeline_mode = #tpu.pipeline_mode<synchronous>, transform_indices = @transform_1, window_bounds = array<i64: 1, 16>}, {pipeline_mode = #tpu.pipeline_mode<synchronous>, transform_indices = @transform_2, window_bounds = array<i64: 1, 16>}, {pipeline_mode = #tpu.pipeline_mode<synchronous>, transform_indices = @transform_3, window_bounds = array<i64: 16, 2>}, {pipeline_mode = #tpu.pipeline_mode<synchronous>, transform_indices = @transform_4, window_bounds = array<i64: 1, 2>}, {pipeline_mode = #tpu.pipeline_mode<synchronous>, transform_indices = @transform_5, window_bounds = array<i64: 2, 16>}, {pipeline_mode = #tpu.pipeline_mode<synchronous>, transform_indices = @transform_6, window_bounds = array<i64: 1, 16>}, {transform_indices = @transform_7, window_bounds = array<i64: 512, 16>}, {transform_indices = @transform_8, window_bounds = array<i64: 1, 1, 16>}]} {
    %c0 = arith.constant 0 : index
    %c0_0 = arith.constant 0 : index
    %0 = vector.load %arg1[%c0, %c0_0] : memref<512x16xf32, #tpu.memory_space<vmem>>, vector<512x16xf32>
    %cst = arith.constant dense<0.000000e+00> : vector<16xf32>
    %1 = vector.multi_reduction <add>, %0, %cst [0] : vector<512x16xf32> to vector<16xf32>
    %2 = vector.shape_cast %1 : vector<16xf32> to vector<1x16xf32>
    %3 = vector.shape_cast %2 : vector<1x16xf32> to vector<1x1x16xf32>
    %cst_1 = arith.constant dense<0.000000e+00> : vector<1xf32>
    %4 = vector.multi_reduction <add>, %3, %cst_1 [1, 2] : vector<1x1x16xf32> to vector<1xf32>
    %5 = vector.shape_cast %4 : vector<1xf32> to vector<1x1x1xf32>
    %6 = vector.extract %5[0, 0, 0] : f32 from vector<1x1x1xf32>
    %7 = arith.mulf %0, %0 : vector<512x16xf32>
    %8 = vector.shape_cast %7 : vector<512x16xf32> to vector<1x512x16xf32>
    %cst_2 = arith.constant dense<0.000000e+00> : vector<1xf32>
    %9 = vector.multi_reduction <add>, %8, %cst_2 [1, 2] : vector<1x512x16xf32> to vector<1xf32>
    %10 = vector.shape_cast %9 : vector<1xf32> to vector<1x1x1xf32>
    %11 = vector.extract %10[0, 0, 0] : f32 from vector<1x1x1xf32>
    %cst_3 = arith.constant 8.192000e+03 : f32
    %12 = arith.divf %6, %cst_3 : f32
    %cst_4 = arith.constant 8.192000e+03 : f32
    %13 = arith.divf %11, %cst_4 : f32
    %14 = arith.mulf %12, %12 : f32
    %15 = arith.subf %13, %14 : f32
    %cst_5 = arith.constant 9.99999974E-6 : f32
    %16 = arith.addf %15, %cst_5 : f32
    %17 = math.rsqrt %16 : f32
    %c0_6 = arith.constant 0 : index
    %c0_7 = arith.constant 0 : index
    %18 = vector.load %arg2[%c0_6, %c0_7] : memref<1x16xf32, #tpu.memory_space<vmem>>, vector<1x16xf32>
    %c0_8 = arith.constant 0 : index
    %c0_9 = arith.constant 0 : index
    %19 = vector.load %arg3[%c0_8, %c0_9] : memref<1x16xf32, #tpu.memory_space<vmem>>, vector<1x16xf32>
    %20 = vector.broadcast %12 : f32 to vector<512x16xf32>
    %21 = arith.subf %0, %20 : vector<512x16xf32>
    %22 = vector.broadcast %17 : f32 to vector<512x16xf32>
    %23 = arith.mulf %21, %22 : vector<512x16xf32>
    %24 = vector.broadcast %18 : vector<1x16xf32> to vector<512x16xf32>
    %25 = arith.mulf %23, %24 : vector<512x16xf32>
    %26 = vector.broadcast %19 : vector<1x16xf32> to vector<512x16xf32>
    %27 = arith.addf %25, %26 : vector<512x16xf32>
    %c0_10 = arith.constant 0 : index
    %c0_11 = arith.constant 0 : index
    %28 = vector.load %arg8[%c0_10, %c0_11] : memref<512x16xf32, #tpu.memory_space<vmem>>, vector<512x16xf32>
    tpu.vector_store %arg8[%c0_10, %c0_11], %27 {strides = array<i32>} : memref<512x16xf32, #tpu.memory_space<vmem>>, vector<512x16xf32>,
    %cst_12 = arith.constant 0.001953125 : f32
    %29 = vector.broadcast %cst_12 : f32 to vector<1x16xf32>
    %30 = arith.mulf %2, %29 : vector<1x16xf32>
    %31 = vector.broadcast %12 : f32 to vector<1x16xf32>
    %32 = arith.subf %30, %31 : vector<1x16xf32>
    %33 = vector.broadcast %17 : f32 to vector<1x16xf32>
    %34 = arith.mulf %32, %33 : vector<1x16xf32>
    %35 = arith.mulf %34, %18 : vector<1x16xf32>
    %36 = arith.addf %35, %19 : vector<1x16xf32>
    %c0_13 = arith.constant 0 : index
    %c0_14 = arith.constant 0 : index
    %37 = vector.load %arg4[%c0_13, %c0_14] : memref<16x2xf32, #tpu.memory_space<vmem>>, vector<16x2xf32>
    %cst_15 = arith.constant dense<0.000000e+00> : vector<1x2xf32>
    %38 = tpu.matmul %36, %37, %cst_15 {dimension_numbers = #tpu.dot_dimension_numbers<[1], [0], [0], [1], [0, 0, 1, 1], [], []>} : vector<1x16xf32>, vector<16x2xf32>, vector<1x2xf32> -> vector<1x2xf32>
    %c0_16 = arith.constant 0 : index
    %c0_17 = arith.constant 0 : index
    %39 = vector.load %arg5[%c0_16, %c0_17] : memref<1x2xf32, #tpu.memory_space<vmem>>, vector<1x2xf32>
    %40 = arith.addf %38, %39 : vector<1x2xf32>
    %cst_18 = arith.constant 5.000000e-01 : f32
    %41 = vector.broadcast %cst_18 : f32 to vector<1x2xf32>
    %42 = arith.mulf %41, %40 : vector<1x2xf32>
    %cst_19 = arith.constant 0.707106769 : f32
    %43 = vector.broadcast %cst_19 : f32 to vector<1x2xf32>
    %44 = arith.mulf %40, %43 : vector<1x2xf32>
    %45 = math.absf %44 : vector<1x2xf32>
    %cst_20 = arith.constant 0.327591091 : f32
    %46 = vector.broadcast %cst_20 : f32 to vector<1x2xf32>
    %47 = arith.mulf %46, %45 : vector<1x2xf32>
    %cst_21 = arith.constant 1.000000e+00 : f32
    %48 = vector.broadcast %cst_21 : f32 to vector<1x2xf32>
    %49 = arith.addf %48, %47 : vector<1x2xf32>
    %cst_22 = arith.constant 1.000000e+00 : f32
    %50 = vector.broadcast %cst_22 : f32 to vector<1x2xf32>
    %51 = arith.divf %50, %49 : vector<1x2xf32>
    %cst_23 = arith.constant 1.06140542 : f32
    %52 = vector.broadcast %cst_23 : f32 to vector<1x2xf32>
    %53 = arith.mulf %52, %51 : vector<1x2xf32>
    %cst_24 = arith.constant -1.45315206 : f32
    %54 = vector.broadcast %cst_24 : f32 to vector<1x2xf32>
    %55 = arith.addf %53, %54 : vector<1x2xf32>
    %56 = arith.mulf %55, %51 : vector<1x2xf32>
    %cst_25 = arith.constant 1.42141378 : f32
    %57 = vector.broadcast %cst_25 : f32 to vector<1x2xf32>
    %58 = arith.addf %56, %57 : vector<1x2xf32>
    %59 = arith.mulf %58, %51 : vector<1x2xf32>
    %cst_26 = arith.constant -0.284496725 : f32
    %60 = vector.broadcast %cst_26 : f32 to vector<1x2xf32>
    %61 = arith.addf %59, %60 : vector<1x2xf32>
    %62 = arith.mulf %61, %51 : vector<1x2xf32>
    %cst_27 = arith.constant 0.254829586 : f32
    %63 = vector.broadcast %cst_27 : f32 to vector<1x2xf32>
    %64 = arith.addf %62, %63 : vector<1x2xf32>
    %65 = arith.mulf %64, %51 : vector<1x2xf32>
    %cst_28 = arith.constant 0.000000e+00 : f32
    %66 = vector.broadcast %cst_28 : f32 to vector<1x2xf32>
    %67 = arith.subf %66, %45 : vector<1x2xf32>
    %68 = arith.mulf %67, %45 : vector<1x2xf32>
    %69 = math.exp %68 : vector<1x2xf32>
    %70 = arith.mulf %65, %69 : vector<1x2xf32>
    %cst_29 = arith.constant 1.000000e+00 : f32
    %71 = vector.broadcast %cst_29 : f32 to vector<1x2xf32>
    %72 = arith.subf %71, %70 : vector<1x2xf32>
    %cst_30 = arith.constant 0.000000e+00 : f32
    %73 = vector.broadcast %cst_30 : f32 to vector<1x2xf32>
    %74 = arith.cmpf olt, %44, %73 : vector<1x2xf32>
    %cst_31 = arith.constant 0.000000e+00 : f32
    %75 = vector.broadcast %cst_31 : f32 to vector<1x2xf32>
    %76 = arith.subf %75, %72 : vector<1x2xf32>
    %77 = arith.select %74, %76, %72 : vector<1x2xi1>, vector<1x2xf32>
    %cst_32 = arith.constant 1.000000e+00 : f32
    %78 = vector.broadcast %cst_32 : f32 to vector<1x2xf32>
    %79 = arith.addf %78, %77 : vector<1x2xf32>
    %80 = arith.mulf %42, %79 : vector<1x2xf32>
    %c0_33 = arith.constant 0 : index
    %c0_34 = arith.constant 0 : index
    %81 = vector.load %arg6[%c0_33, %c0_34] : memref<2x16xf32, #tpu.memory_space<vmem>>, vector<2x16xf32>
    %cst_35 = arith.constant dense<0.000000e+00> : vector<1x16xf32>
    %82 = tpu.matmul %80, %81, %cst_35 {dimension_numbers = #tpu.dot_dimension_numbers<[1], [0], [0], [1], [0, 0, 1, 1], [], []>} : vector<1x2xf32>, vector<2x16xf32>, vector<1x16xf32> -> vector<1x16xf32>
    %c0_36 = arith.constant 0 : index
    %c0_37 = arith.constant 0 : index
    %83 = vector.load %arg7[%c0_36, %c0_37] : memref<1x16xf32, #tpu.memory_space<vmem>>, vector<1x16xf32>
    %84 = arith.addf %82, %83 : vector<1x16xf32>
    %cst_38 = arith.constant 5.000000e-01 : f32
    %85 = vector.broadcast %cst_38 : f32 to vector<1x16xf32>
    %86 = arith.mulf %85, %84 : vector<1x16xf32>
    %cst_39 = arith.constant 0.707106769 : f32
    %87 = vector.broadcast %cst_39 : f32 to vector<1x16xf32>
    %88 = arith.mulf %84, %87 : vector<1x16xf32>
    %89 = math.absf %88 : vector<1x16xf32>
    %cst_40 = arith.constant 0.327591091 : f32
    %90 = vector.broadcast %cst_40 : f32 to vector<1x16xf32>
    %91 = arith.mulf %90, %89 : vector<1x16xf32>
    %cst_41 = arith.constant 1.000000e+00 : f32
    %92 = vector.broadcast %cst_41 : f32 to vector<1x16xf32>
    %93 = arith.addf %92, %91 : vector<1x16xf32>
    %cst_42 = arith.constant 1.000000e+00 : f32
    %94 = vector.broadcast %cst_42 : f32 to vector<1x16xf32>
    %95 = arith.divf %94, %93 : vector<1x16xf32>
    %cst_43 = arith.constant 1.06140542 : f32
    %96 = vector.broadcast %cst_43 : f32 to vector<1x16xf32>
    %97 = arith.mulf %96, %95 : vector<1x16xf32>
    %cst_44 = arith.constant -1.45315206 : f32
    %98 = vector.broadcast %cst_44 : f32 to vector<1x16xf32>
    %99 = arith.addf %97, %98 : vector<1x16xf32>
    %100 = arith.mulf %99, %95 : vector<1x16xf32>
    %cst_45 = arith.constant 1.42141378 : f32
    %101 = vector.broadcast %cst_45 : f32 to vector<1x16xf32>
    %102 = arith.addf %100, %101 : vector<1x16xf32>
    %103 = arith.mulf %102, %95 : vector<1x16xf32>
    %cst_46 = arith.constant -0.284496725 : f32
    %104 = vector.broadcast %cst_46 : f32 to vector<1x16xf32>
    %105 = arith.addf %103, %104 : vector<1x16xf32>
    %106 = arith.mulf %105, %95 : vector<1x16xf32>
    %cst_47 = arith.constant 0.254829586 : f32
    %107 = vector.broadcast %cst_47 : f32 to vector<1x16xf32>
    %108 = arith.addf %106, %107 : vector<1x16xf32>
    %109 = arith.mulf %108, %95 : vector<1x16xf32>
    %cst_48 = arith.constant 0.000000e+00 : f32
    %110 = vector.broadcast %cst_48 : f32 to vector<1x16xf32>
    %111 = arith.subf %110, %89 : vector<1x16xf32>
    %112 = arith.mulf %111, %89 : vector<1x16xf32>
    %113 = math.exp %112 : vector<1x16xf32>
    %114 = arith.mulf %109, %113 : vector<1x16xf32>
    %cst_49 = arith.constant 1.000000e+00 : f32
    %115 = vector.broadcast %cst_49 : f32 to vector<1x16xf32>
    %116 = arith.subf %115, %114 : vector<1x16xf32>
    %cst_50 = arith.constant 0.000000e+00 : f32
    %117 = vector.broadcast %cst_50 : f32 to vector<1x16xf32>
    %118 = arith.cmpf olt, %88, %117 : vector<1x16xf32>
    %cst_51 = arith.constant 0.000000e+00 : f32
    %119 = vector.broadcast %cst_51 : f32 to vector<1x16xf32>
    %120 = arith.subf %119, %116 : vector<1x16xf32>
    %121 = arith.select %118, %120, %116 : vector<1x16xi1>, vector<1x16xf32>
    %cst_52 = arith.constant 1.000000e+00 : f32
    %122 = vector.broadcast %cst_52 : f32 to vector<1x16xf32>
    %123 = arith.addf %122, %121 : vector<1x16xf32>
    %124 = arith.mulf %86, %123 : vector<1x16xf32>
    %cst_53 = arith.constant 0.000000e+00 : f32
    %125 = vector.broadcast %cst_53 : f32 to vector<1x16xf32>
    %126 = arith.subf %125, %124 : vector<1x16xf32>
    %127 = math.exp %126 : vector<1x16xf32>
    %cst_54 = arith.constant 1.000000e+00 : f32
    %128 = vector.broadcast %cst_54 : f32 to vector<1x16xf32>
    %129 = arith.addf %128, %127 : vector<1x16xf32>
    %cst_55 = arith.constant 1.000000e+00 : f32
    %130 = vector.broadcast %cst_55 : f32 to vector<1x16xf32>
    %131 = arith.divf %130, %129 : vector<1x16xf32>
    %132 = vector.shape_cast %131 : vector<1x16xf32> to vector<1x1x16xf32>
    %c0_56 = arith.constant 0 : index
    %c0_57 = arith.constant 0 : index
    %c0_58 = arith.constant 0 : index
    %133 = vector.load %arg9[%c0_56, %c0_57, %c0_58] : memref<1x1x16xf32, #tpu.memory_space<vmem>>, vector<1x1x16xf32>
    tpu.vector_store %arg9[%c0_56, %c0_57, %c0_58], %132 {strides = array<i32>} : memref<1x1x16xf32, #tpu.memory_space<vmem>>, vector<1x1x16xf32>,
    return
  }
  func.func @transform_0(%arg0: i32) -> (i32, i32) {
    %c0_i32 = arith.constant 0 : i32
    %c0_i32_0 = arith.constant 0 : i32
    return %arg0, %c0_i32 : i32, i32
  }
  func.func @transform_1(%arg0: i32) -> (i32, i32) {
    %c0_i32 = arith.constant 0 : i32
    %c0_i32_0 = arith.constant 0 : i32
    %c0_i32_1 = arith.constant 0 : i32
    return %c0_i32, %c0_i32_0 : i32, i32
  }
  func.func @transform_2(%arg0: i32) -> (i32, i32) {
    %c0_i32 = arith.constant 0 : i32
    %c0_i32_0 = arith.constant 0 : i32
    %c0_i32_1 = arith.constant 0 : i32
    return %c0_i32, %c0_i32_0 : i32, i32
  }
  func.func @transform_3(%arg0: i32) -> (i32, i32) {
    %c0_i32 = arith.constant 0 : i32
    %c0_i32_0 = arith.constant 0 : i32
    %c0_i32_1 = arith.constant 0 : i32
    return %c0_i32, %c0_i32_0 : i32, i32
  }
  func.func @transform_4(%arg0: i32) -> (i32, i32) {
    %c0_i32 = arith.constant 0 : i32
    %c0_i32_0 = arith.constant 0 : i32
    %c0_i32_1 = arith.constant 0 : i32
    return %c0_i32, %c0_i32_0 : i32, i32
  }
  func.func @transform_5(%arg0: i32) -> (i32, i32) {
    %c0_i32 = arith.constant 0 : i32
    %c0_i32_0 = arith.constant 0 : i32
    %c0_i32_1 = arith.constant 0 : i32
    return %c0_i32, %c0_i32_0 : i32, i32
  }
  func.func @transform_6(%arg0: i32) -> (i32, i32) {
    %c0_i32 = arith.constant 0 : i32
    %c0_i32_0 = arith.constant 0 : i32
    %c0_i32_1 = arith.constant 0 : i32
    return %c0_i32, %c0_i32_0 : i32, i32
  }
  func.func @transform_7(%arg0: i32) -> (i32, i32) {
    %c0_i32 = arith.constant 0 : i32
    %c0_i32_0 = arith.constant 0 : i32
    return %arg0, %c0_i32 : i32, i32
  }
  func.func @transform_8(%arg0: i32) -> (i32, i32, i32) {
    %c0_i32 = arith.constant 0 : i32
    %c0_i32_0 = arith.constant 0 : i32
    %c0_i32_1 = arith.constant 0 : i32
    return %arg0, %c0_i32, %c0_i32_0 : i32, i32, i32
  }
}

module attributes {stable_mosaic.version = 11 : i64} {
  func.func @_gn_kernel(%arg0: i32, %arg1: memref<512x16xf32, #tpu.memory_space<vmem>>, %arg2: memref<1x16xf32, #tpu.memory_space<vmem>>, %arg3: memref<1x16xf32, #tpu.memory_space<vmem>>, %arg4: memref<512x16xf32, #tpu.memory_space<vmem>>) attributes {dimension_semantics = [#tpu.dimension_semantics<parallel>], iteration_bounds = array<i64: 2>, scalar_prefetch = 0 : i64, scratch_operands = 0 : i64, tpu.core_type = #tpu.core_type<tc>, window_params = [{transform_indices = @transform_0, window_bounds = array<i64: 512, 16>}, {pipeline_mode = #tpu.pipeline_mode<synchronous>, transform_indices = @transform_1, window_bounds = array<i64: 1, 16>}, {pipeline_mode = #tpu.pipeline_mode<synchronous>, transform_indices = @transform_2, window_bounds = array<i64: 1, 16>}, {transform_indices = @transform_3, window_bounds = array<i64: 512, 16>}]} {
    %c0 = arith.constant 0 : index
    %c0_0 = arith.constant 0 : index
    %0 = vector.load %arg1[%c0, %c0_0] : memref<512x16xf32, #tpu.memory_space<vmem>>, vector<512x16xf32>
    %cst = arith.constant dense<0.000000e+00> : vector<16xf32>
    %1 = vector.multi_reduction <add>, %0, %cst [0] : vector<512x16xf32> to vector<16xf32>
    %2 = vector.shape_cast %1 : vector<16xf32> to vector<1x16xf32>
    %3 = vector.shape_cast %2 : vector<1x16xf32> to vector<1x1x16xf32>
    %cst_1 = arith.constant dense<0.000000e+00> : vector<1xf32>
    %4 = vector.multi_reduction <add>, %3, %cst_1 [1, 2] : vector<1x1x16xf32> to vector<1xf32>
    %5 = vector.shape_cast %4 : vector<1xf32> to vector<1x1x1xf32>
    %6 = vector.extract %5[0, 0, 0] : f32 from vector<1x1x1xf32>
    %7 = arith.mulf %0, %0 : vector<512x16xf32>
    %8 = vector.shape_cast %7 : vector<512x16xf32> to vector<1x512x16xf32>
    %cst_2 = arith.constant dense<0.000000e+00> : vector<1xf32>
    %9 = vector.multi_reduction <add>, %8, %cst_2 [1, 2] : vector<1x512x16xf32> to vector<1xf32>
    %10 = vector.shape_cast %9 : vector<1xf32> to vector<1x1x1xf32>
    %11 = vector.extract %10[0, 0, 0] : f32 from vector<1x1x1xf32>
    %cst_3 = arith.constant 8.192000e+03 : f32
    %12 = arith.divf %6, %cst_3 : f32
    %cst_4 = arith.constant 8.192000e+03 : f32
    %13 = arith.divf %11, %cst_4 : f32
    %14 = arith.mulf %12, %12 : f32
    %15 = arith.subf %13, %14 : f32
    %cst_5 = arith.constant 9.99999974E-6 : f32
    %16 = arith.addf %15, %cst_5 : f32
    %17 = math.rsqrt %16 : f32
    %18 = vector.broadcast %12 : f32 to vector<512x16xf32>
    %19 = arith.subf %0, %18 : vector<512x16xf32>
    %20 = vector.broadcast %17 : f32 to vector<512x16xf32>
    %21 = arith.mulf %19, %20 : vector<512x16xf32>
    %c0_6 = arith.constant 0 : index
    %c0_7 = arith.constant 0 : index
    %22 = vector.load %arg2[%c0_6, %c0_7] : memref<1x16xf32, #tpu.memory_space<vmem>>, vector<1x16xf32>
    %23 = vector.broadcast %22 : vector<1x16xf32> to vector<512x16xf32>
    %24 = arith.mulf %21, %23 : vector<512x16xf32>
    %c0_8 = arith.constant 0 : index
    %c0_9 = arith.constant 0 : index
    %25 = vector.load %arg3[%c0_8, %c0_9] : memref<1x16xf32, #tpu.memory_space<vmem>>, vector<1x16xf32>
    %26 = vector.broadcast %25 : vector<1x16xf32> to vector<512x16xf32>
    %27 = arith.addf %24, %26 : vector<512x16xf32>
    %c0_10 = arith.constant 0 : index
    %c0_11 = arith.constant 0 : index
    %28 = vector.load %arg4[%c0_10, %c0_11] : memref<512x16xf32, #tpu.memory_space<vmem>>, vector<512x16xf32>
    tpu.vector_store %arg4[%c0_10, %c0_11], %27 {strides = array<i32>} : memref<512x16xf32, #tpu.memory_space<vmem>>, vector<512x16xf32>,
    return
  }
  func.func @transform_0(%arg0: i32) -> (i32, i32) {
    %c0_i32 = arith.constant 0 : i32
    %c0_i32_0 = arith.constant 0 : i32
    return %arg0, %c0_i32 : i32, i32
  }
  func.func @transform_1(%arg0: i32) -> (i32, i32) {
    %c0_i32 = arith.constant 0 : i32
    %c0_i32_0 = arith.constant 0 : i32
    %c0_i32_1 = arith.constant 0 : i32
    return %c0_i32, %c0_i32_0 : i32, i32
  }
  func.func @transform_2(%arg0: i32) -> (i32, i32) {
    %c0_i32 = arith.constant 0 : i32
    %c0_i32_0 = arith.constant 0 : i32
    %c0_i32_1 = arith.constant 0 : i32
    return %c0_i32, %c0_i32_0 : i32, i32
  }
  func.func @transform_3(%arg0: i32) -> (i32, i32) {
    %c0_i32 = arith.constant 0 : i32
    %c0_i32_0 = arith.constant 0 : i32
    return %arg0, %c0_i32 : i32, i32
  }
}

</mosaic_0001>

<llo_original>
// kernel: ca3d_forward.5
$region0: #{ca3d_forward.5}
  #allocation0 [shape = 'u32[]', space=smem, size = 0x4, offset = 0x4, fixed_abs, tag = 'smem constant byte address 0x4 - core index']
  #allocation1 [shape = 'u32[144,128]{1,0:T(1,128)}', space=vmem, size = 0x12000, scoped, tag = 'internal scratch']
  %s0 = inlined_call_operand.vmem [shape: f32[1024,16], index: 0, kind: input, shape index: {}]
  %s1 = inlined_call_operand.vmem [shape: f32[1,16], index: 1, kind: input, shape index: {}]
  %s2 = inlined_call_operand.vmem [shape: f32[1,16], index: 2, kind: input, shape index: {}]
  %s3 = inlined_call_operand.vmem [shape: f32[16,2], index: 3, kind: input, shape index: {}]
  %s4 = inlined_call_operand.vmem [shape: f32[1,2], index: 4, kind: input, shape index: {}]
  %s5 = inlined_call_operand.vmem [shape: f32[2,16], index: 5, kind: input, shape index: {}]
  %s6 = inlined_call_operand.vmem [shape: f32[1,16], index: 6, kind: input, shape index: {}]
  %s7 = inlined_call_operand.vmem [shape: f32[1024,16], index: 7, kind: output, shape index: {0}]
  %s8 = inlined_call_operand.vmem [shape: f32[2,1,16], index: 8, kind: output, shape index: {1}]
  %9 = xla_tuple %s7, %s8
  %s10 = sld [smem:[#allocation0]]
  $region69: #{ca3d_forward.5} parent=0
    _
  %s12 = ssub.s32 1, %s10
  %s13 = scalar_select 0, %s12, %s10
  loop: start=0, step=1, limit=4
  $region2: #{ca3d_forward.5} parent=0 // loop_pre_header
    _
  $region3: #{ca3d_forward.5} parent=0 // loop_header
    %s15 = sphi 0, %s19
    %p16 = scmp.ge.s32.totalorder %s15, 4
    %s25 = sphi 0, %s27
    %s28 = sphi 0, %s25
    %s29 = sphi 0, %s28
    %s45 = sphi 0, %s29
    %s49 = sphi 0, %s49
    %s51 = sphi 0, %s49
    %s52 = sphi 0, %s51
    %s66 = sphi 0, %s52
    %s70 = sphi 0, %s70
    %s72 = sphi 0, %s70
    %s73 = sphi 0, %s72
    %s87 = sphi 0, %s73
    %s91 = sphi 0, %s91
    %s93 = sphi 0, %s91
    %s94 = sphi 0, %s93
    %s108 = sphi 0, %s94
    %s112 = sphi 0, %s112
    %s114 = sphi 0, %s112
    %s115 = sphi 0, %s114
    %s129 = sphi 0, %s115
    %s133 = sphi 0, %s133
    %s135 = sphi 0, %s133
    %s136 = sphi 0, %s135
    %s150 = sphi 0, %s136
    %s154 = sphi 0, %s154
    %s156 = sphi 0, %s154
    %s157 = sphi 0, %s156
    %s171 = sphi 0, %s157
    %s177 = sphi 0, %s179
    %s180 = sphi 0, %s177
    %s181 = sphi 0, %s180
    %s197 = sphi 0, %s181
    %s203 = sphi 0, %s205
    %s206 = sphi 0, %s203
    %s207 = sphi 0, %s206
    %s223 = sphi 0, %s207
  $region4: #{ca3d_forward.5} parent=0 // loop_header_branch
    %18 = sbr.rel (%p16) target = $region8
  $region5: #{ca3d_forward.5} parent=0 // loop_body
    %s20 = ssub.s32 %s15, 1
    %s21 = ssub.s32 %s15, 2
    %s22 = sadd.s32 %s15, 1
    %s23 = ssub.s32 %s15, %s22
    %p24 = scmp.eq.s32.totalorder %s23, 0
    %s26 = sadd.s32 %s25, 1
    %s27 = scalar_select %p24, %s25, %s26
    %p30 = pneg %p24
    %p31 = scmp.eq.s32.totalorder %s15, 1
    %p32 = por %p30, %p31
    %p33 = scmp.ne.s32.totalorder %s25, %s28
    %p34 = scmp.eq.s32.totalorder %s15, 0
    %p35 = por %p33, %p34
    %p36 = scmp.ne.s32.totalorder %s25, %s28
    %p37 = scmp.eq.s32.totalorder %s20, 1
    %p38 = por %p36, %p37
    %p39 = scmp.ne.s32.totalorder %s28, %s29
    %p40 = scmp.eq.s32.totalorder %s20, 0
    %p41 = por %p39, %p40
    %p42 = scmp.ne.s32.totalorder %s28, %s29
    %p43 = scmp.eq.s32.totalorder %s21, 1
    %p44 = por %p42, %p43
    %p46 = scmp.ne.s32.totalorder %s29, %s45
    %p47 = scmp.eq.s32.totalorder %s21, 0
    %p48 = por %p46, %p47
    %s50 = sadd.s32 %s49, 1
    %p53 = scmp.eq.s32.totalorder %s15, 1
    %p54 = scmp.ne.s32.totalorder %s49, %s51
    %p55 = scmp.eq.s32.totalorder %s15, 0
    %p56 = por %p54, %p55
    %p57 = scmp.ne.s32.totalorder %s49, %s51
    %p58 = scmp.eq.s32.totalorder %s20, 1
    %p59 = por %p57, %p58
    %p60 = scmp.ne.s32.totalorder %s51, %s52
    %p61 = scmp.eq.s32.totalorder %s20, 0
    %p62 = por %p60, %p61
    %p63 = scmp.ne.s32.totalorder %s51, %s52
    %p64 = scmp.eq.s32.totalorder %s21, 1
    %p65 = por %p63, %p64
    %p67 = scmp.ne.s32.totalorder %s52, %s66
    %p68 = scmp.eq.s32.totalorder %s21, 0
    %p69 = por %p67, %p68
    %s71 = sadd.s32 %s70, 1
    %p74 = scmp.eq.s32.totalorder %s15, 1
    %p75 = scmp.ne.s32.totalorder %s70, %s72
    %p76 = scmp.eq.s32.totalorder %s15, 0
    %p77 = por %p75, %p76
    %p78 = scmp.ne.s32.totalorder %s70, %s72
    %p79 = scmp.eq.s32.totalorder %s20, 1
    %p80 = por %p78, %p79
    %p81 = scmp.ne.s32.totalorder %s72, %s73
    %p82 = scmp.eq.s32.totalorder %s20, 0
    %p83 = por %p81, %p82
    %p84 = scmp.ne.s32.totalorder %s72, %s73
    %p85 = scmp.eq.s32.totalorder %s21, 1
    %p86 = por %p84, %p85
    %p88 = scmp.ne.s32.totalorder %s73, %s87
    %p89 = scmp.eq.s32.totalorder %s21, 0
    %p90 = por %p88, %p89
    %s92 = sadd.s32 %s91, 1
    %p95 = scmp.eq.s32.totalorder %s15, 1
    %p96 = scmp.ne.s32.totalorder %s91, %s93
    %p97 = scmp.eq.s32.totalorder %s15, 0
    %p98 = por %p96, %p97
    %p99 = scmp.ne.s32.totalorder %s91, %s93
    %p100 = scmp.eq.s32.totalorder %s20, 1
    %p101 = por %p99, %p100
    %p102 = scmp.ne.s32.totalorder %s93, %s94
    %p103 = scmp.eq.s32.totalorder %s20, 0
    %p104 = por %p102, %p103
    %p105 = scmp.ne.s32.totalorder %s93, %s94
    %p106 = scmp.eq.s32.totalorder %s21, 1
    %p107 = por %p105, %p106
    %p109 = scmp.ne.s32.totalorder %s94, %s108
    %p110 = scmp.eq.s32.totalorder %s21, 0
    %p111 = por %p109, %p110
    %s113 = sadd.s32 %s112, 1
    %p116 = scmp.eq.s32.totalorder %s15, 1
    %p117 = scmp.ne.s32.totalorder %s112, %s114
    %p118 = scmp.eq.s32.totalorder %s15, 0
    %p119 = por %p117, %p118
    %p120 = scmp.ne.s32.totalorder %s112, %s114
    %p121 = scmp.eq.s32.totalorder %s20, 1
    %p122 = por %p120, %p121
    %p123 = scmp.ne.s32.totalorder %s114, %s115
    %p124 = scmp.eq.s32.totalorder %s20, 0
    %p125 = por %p123, %p124
    %p126 = scmp.ne.s32.totalorder %s114, %s115
    %p127 = scmp.eq.s32.totalorder %s21, 1
    %p128 = por %p126, %p127
    %p130 = scmp.ne.s32.totalorder %s115, %s129
    %p131 = scmp.eq.s32.totalorder %s21, 0
    %p132 = por %p130, %p131
    %s134 = sadd.s32 %s133, 1
    %p137 = scmp.eq.s32.totalorder %s15, 1
    %p138 = scmp.ne.s32.totalorder %s133, %s135
    %p139 = scmp.eq.s32.totalorder %s15, 0
    %p140 = por %p138, %p139
    %p141 = scmp.ne.s32.totalorder %s133, %s135
    %p142 = scmp.eq.s32.totalorder %s20, 1
    %p143 = por %p141, %p142
    %p144 = scmp.ne.s32.totalorder %s135, %s136
    %p145 = scmp.eq.s32.totalorder %s20, 0
    %p146 = por %p144, %p145
    %p147 = scmp.ne.s32.totalorder %s135, %s136
    %p148 = scmp.eq.s32.totalorder %s21, 1
    %p149 = por %p147, %p148
    %p151 = scmp.ne.s32.totalorder %s136, %s150
    %p152 = scmp.eq.s32.totalorder %s21, 0
    %p153 = por %p151, %p152
    %s155 = sadd.s32 %s154, 1
    %p158 = scmp.eq.s32.totalorder %s15, 1
    %p159 = scmp.ne.s32.totalorder %s154, %s156
    %p160 = scmp.eq.s32.totalorder %s15, 0
    %p161 = por %p159, %p160
    %p162 = scmp.ne.s32.totalorder %s154, %s156
    %p163 = scmp.eq.s32.totalorder %s20, 1
    %p164 = por %p162, %p163
    %p165 = scmp.ne.s32.totalorder %s156, %s157
    %p166 = scmp.eq.s32.totalorder %s20, 0
    %p167 = por %p165, %p166
    %p168 = scmp.ne.s32.totalorder %s156, %s157
    %p169 = scmp.eq.s32.totalorder %s21, 1
    %p170 = por %p168, %p169
    %p172 = scmp.ne.s32.totalorder %s157, %s171
    %p173 = scmp.eq.s32.totalorder %s21, 0
    %p174 = por %p172, %p173
    %s175 = ssub.s32 %s15, %s22
    %p176 = scmp.eq.s32.totalorder %s175, 0
    %s178 = sadd.s32 %s177, 1
    %s179 = scalar_select %p176, %s177, %s178
    %p182 = pneg %p176
    %p183 = scmp.eq.s32.totalorder %s15, 1
    %p184 = por %p182, %p183
    %p185 = scmp.ne.s32.totalorder %s177, %s180
    %p186 = scmp.eq.s32.totalorder %s15, 0
    %p187 = por %p185, %p186
    %p188 = scmp.ne.s32.totalorder %s177, %s180
    %p189 = scmp.eq.s32.totalorder %s20, 1
    %p190 = por %p188, %p189
    %p191 = scmp.ne.s32.totalorder %s180, %s181
    %p192 = scmp.eq.s32.totalorder %s20, 0
    %p193 = por %p191, %p192
    %p194 = scmp.ne.s32.totalorder %s180, %s181
    %p195 = scmp.eq.s32.totalorder %s21, 1
    %p196 = por %p194, %p195
    %p198 = scmp.ne.s32.totalorder %s181, %s197
    %p199 = scmp.eq.s32.totalorder %s21, 0
    %p200 = por %p198, %p199
    %s201 = ssub.s32 %s15, %s22
    %p202 = scmp.eq.s32.totalorder %s201, 0
    %s204 = sadd.s32 %s203, 1
    %s205 = scalar_select %p202, %s203, %s204
    %p208 = pneg %p202
    %p209 = scmp.eq.s32.totalorder %s15, 1
    %p210 = por %p208, %p209
    %p211 = scmp.ne.s32.totalorder %s203, %s206
    %p212 = scmp.eq.s32.totalorder %s15, 0
    %p213 = por %p211, %p212
    %p214 = scmp.ne.s32.totalorder %s203, %s206
    %p215 = scmp.eq.s32.totalorder %s20, 1
    %p216 = por %p214, %p215
    %p217 = scmp.ne.s32.totalorder %s206, %s207
    %p218 = scmp.eq.s32.totalorder %s20, 0
    %p219 = por %p217, %p218
    %p220 = scmp.ne.s32.totalorder %s206, %s207
    %p221 = scmp.eq.s32.totalorder %s21, 1
    %p222 = por %p220, %p221
    %p224 = scmp.ne.s32.totalorder %s207, %s223
    %p225 = scmp.eq.s32.totalorder %s21, 0
    %p226 = por %p224, %p225
    %p227 = scmp.le.s32.totalorder 1, %s15
    %p228 = scmp.lt.s32.totalorder %s15, 3
    %p229 = pnand %p227, %p228
    %p230 = pneg %p229
    // Predicated region
    $region9: #{ca3d_forward.5} parent=5 // pred_check
      _
    $region10: #{ca3d_forward.5} parent=5 // pred_check_branch
      %232 = sbr.rel (%p229) target = $region12
    $region11: #{ca3d_forward.5} parent=5 // pred_region
      %s233 = ssub.s32 %s15, 1
      // Predicated region
      $region13: #{ca3d_forward.5} parent=11 // pred_check
        %p234 = pneg %p62
      $region14: #{ca3d_forward.5} parent=11 // pred_check_branch
        %236 = sbr.rel (%p234) target = $region16
      $region15: #{ca3d_forward.5} parent=11 // pred_region
        _
      $region16: #{ca3d_forward.5} parent=11 // pred_fallthru
        _
      // Predicated region
      $region17: #{ca3d_forward.5} parent=11 // pred_check
        %p237 = pneg %p83
      $region18: #{ca3d_forward.5} parent=11 // pred_check_branch
        %239 = sbr.rel (%p237) target = $region20
      $region19: #{ca3d_forward.5} parent=11 // pred_region
        _
      $region20: #{ca3d_forward.5} parent=11 // pred_fallthru
        _
      // Predicated region
      $region21: #{ca3d_forward.5} parent=11 // pred_check
        %p240 = pneg %p104
      $region22: #{ca3d_forward.5} parent=11 // pred_check_branch
        %242 = sbr.rel (%p240) target = $region24
      $region23: #{ca3d_forward.5} parent=11 // pred_region
        _
      $region24: #{ca3d_forward.5} parent=11 // pred_fallthru
        _
      // Predicated region
      $region25: #{ca3d_forward.5} parent=11 // pred_check
        %p243 = pneg %p125
      $region26: #{ca3d_forward.5} parent=11 // pred_check_branch
        %245 = sbr.rel (%p243) target = $region28
      $region27: #{ca3d_forward.5} parent=11 // pred_region
        _
      $region28: #{ca3d_forward.5} parent=11 // pred_fallthru
        _
      // Predicated region
      $region29: #{ca3d_forward.5} parent=11 // pred_check
        %p246 = pneg %p146
      $region30: #{ca3d_forward.5} parent=11 // pred_check_branch
        %248 = sbr.rel (%p246) target = $region32
      $region31: #{ca3d_forward.5} parent=11 // pred_region
        _
      $region32: #{ca3d_forward.5} parent=11 // pred_fallthru
        _
      // Predicated region
      $region33: #{ca3d_forward.5} parent=11 // pred_check
        %p249 = pneg %p167
      $region34: #{ca3d_forward.5} parent=11 // pred_check_branch
        %251 = sbr.rel (%p249) target = $region36
      $region35: #{ca3d_forward.5} parent=11 // pred_region
        _
      $region36: #{ca3d_forward.5} parent=11 // pred_fallthru
        _
    $region12: #{ca3d_forward.5} parent=5 // pred_fallthru
      _
    %p252 = scmp.lt.s32.totalorder %s15, 2
    // Predicated region
    $region37: #{ca3d_forward.5} parent=5 // pred_check
      %p253 = pneg %p252
    $region38: #{ca3d_forward.5} parent=5 // pred_check_branch
      %255 = sbr.rel (%p253) target = $region40
    $region39: #{ca3d_forward.5} parent=5 // pred_region
      // Predicated region
      $region41: #{ca3d_forward.5} parent=39 // pred_check
        %p256 = pneg %p35
      $region42: #{ca3d_forward.5} parent=39 // pred_check_branch
        %258 = sbr.rel (%p256) target = $region44
      $region43: #{ca3d_forward.5} parent=39 // pred_region
        %s259 = smul.u32 64, %s15
        %p260 = scmp.lt.s32.totalorder %s259, 127
        %s261 = scalar_select %p260, %s259, 127
        %s262 = smul.addr %s261, 8
        %s263 = scalar_lea.vmem %s0, %s262
        %s264 = smul.u32 64, %s15
      $region44: #{ca3d_forward.5} parent=39 // pred_fallthru
        _
    $region40: #{ca3d_forward.5} parent=5 // pred_fallthru
      _
    %p265 = scmp.le.s32.totalorder 1, %s15
    %p266 = scmp.lt.s32.totalorder %s15, 3
    %p267 = pnand %p265, %p266
    %p268 = pneg %p267
    // Predicated region
    $region45: #{ca3d_forward.5} parent=5 // pred_check
      _
    $region46: #{ca3d_forward.5} parent=5 // pred_check_branch
      %270 = sbr.rel (%p267) target = $region48
    $region47: #{ca3d_forward.5} parent=5 // pred_region
      %s271 = ssub.s32 %s15, 1
      %s272 = smul.u32 64, %s20
      %p273 = scmp.lt.s32.totalorder %s272, 127
      %s274 = scalar_select %p273, %s272, 127
      %s275 = smul.addr %s274, 8
      %s276 = scalar_lea.vmem %s0, %s275
      %p277 = pneg %p41
      %p278 = pneg %p38
      %p279 = pneg %p62
      %p280 = pneg %p59
      %p281 = pneg %p83
      %p282 = pneg %p80
      %p283 = pneg %p104
      %p284 = pneg %p101
      %p285 = pneg %p125
      %p286 = pneg %p122
      %p287 = pneg %p146
      %p288 = pneg %p143
      %p289 = pneg %p167
      %p290 = pneg %p164
      %p291 = pneg %p193
      %p292 = pneg %p190
      %s293 = smul.u32 64, %s20
      %p294 = scmp.lt.s32.totalorder %s293, 127
      %s295 = scalar_select %p294, %s293, 127
      %s296 = smul.addr %s295, 8
      %s297 = scalar_lea.vmem %s7, %s296
      %p298 = pneg %p219
      %p299 = pneg %p216
      %p300 = scmp.lt.s32.totalorder %s20, 1
      %s301 = scalar_select %p300, %s20, 1
      %s302 = scalar_lea.vmem %s8, %s301
      %s303 = smul.u32 64, %s20
      %p304 = scmp.lt.s32.totalorder %s303, 127
      %s305 = scalar_select %p304, %s303, 127
      %s306 = smul.addr %s305, 8
      %s307 = scalar_lea.vmem %s0, %s306
      %s308 = smul.u32 64, %s20
      %s309 = smul.u32 64, %s20
      %p310 = scmp.lt.s32.totalorder %s309, 127
      %s311 = scalar_select %p310, %s309, 127
      %s312 = smul.addr %s311, 8
      %s313 = scalar_lea.vmem %s7, %s312
      %s314 = smul.u32 64, %s20
      %p315 = scmp.lt.s32.totalorder %s20, 1
      %s316 = scalar_select %p315, %s20, 1
      %s317 = scalar_lea.vmem %s8, %s316
      %v318 = vld [vmem:[%s307] sm:$0xff]
      %v319 = vld [vmem:[%s307 + $0x8] sm:$0xff]
      %v320 = vld [vmem:[%s307 + $0x10] sm:$0xff]
      %v321 = vld [vmem:[%s307 + $0x18] sm:$0xff]
      %v322 = vld [vmem:[%s307 + $0x20] sm:$0xff]
      %v323 = vld [vmem:[%s307 + $0x28] sm:$0xff]
      %v324 = vld [vmem:[%s307 + $0x30] sm:$0xff]
      %v325 = vld [vmem:[%s307 + $0x38] sm:$0xff]
      %v326 = vld [vmem:[%s307 + $0x40] sm:$0xff]
      %v327 = vld [vmem:[%s307 + $0x48] sm:$0xff]
      %v328 = vld [vmem:[%s307 + $0x50] sm:$0xff]
      %v329 = vld [vmem:[%s307 + $0x58] sm:$0xff]
      %v330 = vld [vmem:[%s307 + $0x60] sm:$0xff]
      %v331 = vld [vmem:[%s307 + $0x68] sm:$0xff]
      %v332 = vld [vmem:[%s307 + $0x70] sm:$0xff]
      %v333 = vld [vmem:[%s307 + $0x78] sm:$0xff]
      %v334 = vld [vmem:[%s307 + $0x80] sm:$0xff]
      %v335 = vld [vmem:[%s307 + $0x88] sm:$0xff]
      %v336 = vld [vmem:[%s307 + $0x90] sm:$0xff]
      %v337 = vld [vmem:[%s307 + $0x98] sm:$0xff]
      %v338 = vld [vmem:[%s307 + $0xa0] sm:$0xff]
      %v339 = vld [vmem:[%s307 + $0xa8] sm:$0xff]
      %v340 = vld [vmem:[%s307 + $0xb0] sm:$0xff]
      %v341 = vld [vmem:[%s307 + $0xb8] sm:$0xff]
      %v342 = vld [vmem:[%s307 + $0xc0] sm:$0xff]
      %v343 = vld [vmem:[%s307 + $0xc8] sm:$0xff]
      %v344 = vld [vmem:[%s307 + $0xd0] sm:$0xff]
      %v345 = vld [vmem:[%s307 + $0xd8] sm:$0xff]
      %v346 = vld [vmem:[%s307 + $0xe0] sm:$0xff]
      %v347 = vld [vmem:[%s307 + $0xe8] sm:$0xff]
      %v348 = vld [vmem:[%s307 + $0xf0] sm:$0xff]
      %v349 = vld [vmem:[%s307 + $0xf8] sm:$0xff]
      %v350 = vld [vmem:[%s307 + $0x100] sm:$0xff]
      %v351 = vld [vmem:[%s307 + $0x108] sm:$0xff]
      %v352 = vld [vmem:[%s307 + $0x110] sm:$0xff]
      %v353 = vld [vmem:[%s307 + $0x118] sm:$0xff]
      %v354 = vld [vmem:[%s307 + $0x120] sm:$0xff]
      %v355 = vld [vmem:[%s307 + $0x128] sm:$0xff]
      %v356 = vld [vmem:[%s307 + $0x130] sm:$0xff]
      %v357 = vld [vmem:[%s307 + $0x138] sm:$0xff]
      %v358 = vld [vmem:[%s307 + $0x140] sm:$0xff]
      %v359 = vld [vmem:[%s307 + $0x148] sm:$0xff]
      %v360 = vld [vmem:[%s307 + $0x150] sm:$0xff]
      %v361 = vld [vmem:[%s307 + $0x158] sm:$0xff]
      %v362 = vld [vmem:[%s307 + $0x160] sm:$0xff]
      %v363 = vld [vmem:[%s307 + $0x168] sm:$0xff]
      %v364 = vld [vmem:[%s307 + $0x170] sm:$0xff]
      %v365 = vld [vmem:[%s307 + $0x178] sm:$0xff]
      %v366 = vld [vmem:[%s307 + $0x180] sm:$0xff]
      %v367 = vld [vmem:[%s307 + $0x188] sm:$0xff]
      %v368 = vld [vmem:[%s307 + $0x190] sm:$0xff]
      %v369 = vld [vmem:[%s307 + $0x198] sm:$0xff]
      %v370 = vld [vmem:[%s307 + $0x1a0] sm:$0xff]
      %v371 = vld [vmem:[%s307 + $0x1a8] sm:$0xff]
      %v372 = vld [vmem:[%s307 + $0x1b0] sm:$0xff]
      %v373 = vld [vmem:[%s307 + $0x1b8] sm:$0xff]
      %v374 = vld [vmem:[%s307 + $0x1c0] sm:$0xff]
      %v375 = vld [vmem:[%s307 + $0x1c8] sm:$0xff]
      %v376 = vld [vmem:[%s307 + $0x1d0] sm:$0xff]
      %v377 = vld [vmem:[%s307 + $0x1d8] sm:$0xff]
      %v378 = vld [vmem:[%s307 + $0x1e0] sm:$0xff]
      %v379 = vld [vmem:[%s307 + $0x1e8] sm:$0xff]
      %v380 = vld [vmem:[%s307 + $0x1f0] sm:$0xff]
      %v381 = vld [vmem:[%s307 + $0x1f8] sm:$0xff]
      %vm382 = vcmask 130048
      %v383 = vsel %vm382, %v318, 0.0
      %v384 = vsel %vm382, %v319, 0.0
      %v385 = vadd.f32 %v383, %v384
      %v386 = vsel %vm382, %v320, 0.0
      %v387 = vadd.f32 %v385, %v386
      %v388 = vsel %vm382, %v321, 0.0
      %v389 = vadd.f32 %v387, %v388
      %v390 = vsel %vm382, %v322, 0.0
      %v391 = vadd.f32 %v389, %v390
      %v392 = vsel %vm382, %v323, 0.0
      %v393 = vadd.f32 %v391, %v392
      %v394 = vsel %vm382, %v324, 0.0
      %v395 = vadd.f32 %v393, %v394
      %v396 = vsel %vm382, %v325, 0.0
      %v397 = vadd.f32 %v395, %v396
      %v398 = vsel %vm382, %v326, 0.0
      %v399 = vadd.f32 %v397, %v398
      %v400 = vsel %vm382, %v327, 0.0
      %v401 = vadd.f32 %v399, %v400
      %v402 = vsel %vm382, %v328, 0.0
      %v403 = vadd.f32 %v401, %v402
      %v404 = vsel %vm382, %v329, 0.0
      %v405 = vadd.f32 %v403, %v404
      %v406 = vsel %vm382, %v330, 0.0
      %v407 = vadd.f32 %v405, %v406
      %v408 = vsel %vm382, %v331, 0.0
      %v409 = vadd.f32 %v407, %v408
      %v410 = vsel %vm382, %v332, 0.0
      %v411 = vadd.f32 %v409, %v410
      %v412 = vsel %vm382, %v333, 0.0
      %v413 = vadd.f32 %v411, %v412
      %v414 = vsel %vm382, %v334, 0.0
      %v415 = vadd.f32 %v413, %v414
      %v416 = vsel %vm382, %v335, 0.0
      %v417 = vadd.f32 %v415, %v416
      %v418 = vsel %vm382, %v336, 0.0
      %v419 = vadd.f32 %v417, %v418
      %v420 = vsel %vm382, %v337, 0.0
      %v421 = vadd.f32 %v419, %v420
      %v422 = vsel %vm382, %v338, 0.0
      %v423 = vadd.f32 %v421, %v422
      %v424 = vsel %vm382, %v339, 0.0
      %v425 = vadd.f32 %v423, %v424
      %v426 = vsel %vm382, %v340, 0.0
      %v427 = vadd.f32 %v425, %v426
      %v428 = vsel %vm382, %v341, 0.0
      %v429 = vadd.f32 %v427, %v428
      %v430 = vsel %vm382, %v342, 0.0
      %v431 = vadd.f32 %v429, %v430
      %v432 = vsel %vm382, %v343, 0.0
      %v433 = vadd.f32 %v431, %v432
      %v434 = vsel %vm382, %v344, 0.0
      %v435 = vadd.f32 %v433, %v434
      %v436 = vsel %vm382, %v345, 0.0
      %v437 = vadd.f32 %v435, %v436
      %v438 = vsel %vm382, %v346, 0.0
      %v439 = vadd.f32 %v437, %v438
      %v440 = vsel %vm382, %v347, 0.0
      %v441 = vadd.f32 %v439, %v440
      %v442 = vsel %vm382, %v348, 0.0
      %v443 = vadd.f32 %v441, %v442
      %v444 = vsel %vm382, %v349, 0.0
      %v445 = vadd.f32 %v443, %v444
      %v446 = vsel %vm382, %v350, 0.0
      %v447 = vadd.f32 %v445, %v446
      %v448 = vsel %vm382, %v351, 0.0
      %v449 = vadd.f32 %v447, %v448
      %v450 = vsel %vm382, %v352, 0.0
      %v451 = vadd.f32 %v449, %v450
      %v452 = vsel %vm382, %v353, 0.0
      %v453 = vadd.f32 %v451, %v452
      %v454 = vsel %vm382, %v354, 0.0
      %v455 = vadd.f32 %v453, %v454
      %v456 = vsel %vm382, %v355, 0.0
      %v457 = vadd.f32 %v455, %v456
      %v458 = vsel %vm382, %v356, 0.0
      %v459 = vadd.f32 %v457, %v458
      %v460 = vsel %vm382, %v357, 0.0
      %v461 = vadd.f32 %v459, %v460
      %v462 = vsel %vm382, %v358, 0.0
      %v463 = vadd.f32 %v461, %v462
      %v464 = vsel %vm382, %v359, 0.0
      %v465 = vadd.f32 %v463, %v464
      %v466 = vsel %vm382, %v360, 0.0
      %v467 = vadd.f32 %v465, %v466
      %v468 = vsel %vm382, %v361, 0.0
      %v469 = vadd.f32 %v467, %v468
      %v470 = vsel %vm382, %v362, 0.0
      %v471 = vadd.f32 %v469, %v470
      %v472 = vsel %vm382, %v363, 0.0
      %v473 = vadd.f32 %v471, %v472
      %v474 = vsel %vm382, %v364, 0.0
      %v475 = vadd.f32 %v473, %v474
      %v476 = vsel %vm382, %v365, 0.0
      %v477 = vadd.f32 %v475, %v476
      %v478 = vsel %vm382, %v366, 0.0
      %v479 = vadd.f32 %v477, %v478
      %v480 = vsel %vm382, %v367, 0.0
      %v481 = vadd.f32 %v479, %v480
      %v482 = vsel %vm382, %v368, 0.0
      %v483 = vadd.f32 %v481, %v482
      %v484 = vsel %vm382, %v369, 0.0
      %v485 = vadd.f32 %v483, %v484
      %v486 = vsel %vm382, %v370, 0.0
      %v487 = vadd.f32 %v485, %v486
      %v488 = vsel %vm382, %v371, 0.0
      %v489 = vadd.f32 %v487, %v488
      %v490 = vsel %vm382, %v372, 0.0
      %v491 = vadd.f32 %v489, %v490
      %v492 = vsel %vm382, %v373, 0.0
      %v493 = vadd.f32 %v491, %v492
      %v494 = vsel %vm382, %v374, 0.0
      %v495 = vadd.f32 %v493, %v494
      %v496 = vsel %vm382, %v375, 0.0
      %v497 = vadd.f32 %v495, %v496
      %v498 = vsel %vm382, %v376, 0.0
      %v499 = vadd.f32 %v497, %v498
      %v500 = vsel %vm382, %v377, 0.0
      %v501 = vadd.f32 %v499, %v500
      %v502 = vsel %vm382, %v378, 0.0
      %v503 = vadd.f32 %v501, %v502
      %v504 = vsel %vm382, %v379, 0.0
      %v505 = vadd.f32 %v503, %v504
      %v506 = vsel %vm382, %v380, 0.0
      %v507 = vadd.f32 %v505, %v506
      %v508 = vsel %vm382, %v381, 0.0
      %v509 = vadd.f32 %v507, %v508
      %v510 = vrot.slane %v509, 4
      %v511 = vadd.f32 %v509, %v510
      %v512 = vrot.slane %v511, 2
      %v513 = vadd.f32 %v511, %v512
      %v514 = vrot.slane %v513, 1
      %v515 = vadd.f32 %v513, %v514
      %vm516 = vcmask 122880
      %v517 = vsel %vm516, %v515, 0.0
      %518 = vadd.xlane.f32.xlu0 %v517
      %v519 = vpop.xlane.xlu0 %518
      %v520 = vrot.slane %v519, 4
      %v521 = vadd.f32 %v519, %v520
      %v522 = vrot.slane %v521, 2
      %v523 = vadd.f32 %v521, %v522
      %v524 = vrot.slane %v523, 1
      %v525 = vadd.f32 %v523, %v524
      %s526 = vtos %v525
      %v527 = vmul.f32 %v318, %v318
      %v528 = vmul.f32 %v319, %v319
      %v529 = vmul.f32 %v320, %v320
      %v530 = vmul.f32 %v321, %v321
      %v531 = vmul.f32 %v322, %v322
      %v532 = vmul.f32 %v323, %v323
      %v533 = vmul.f32 %v324, %v324
      %v534 = vmul.f32 %v325, %v325
      %v535 = vmul.f32 %v326, %v326
      %v536 = vmul.f32 %v327, %v327
      %v537 = vmul.f32 %v328, %v328
      %v538 = vmul.f32 %v329, %v329
      %v539 = vmul.f32 %v330, %v330
      %v540 = vmul.f32 %v331, %v331
      %v541 = vmul.f32 %v332, %v332
      %v542 = vmul.f32 %v333, %v333
      %v543 = vmul.f32 %v334, %v334
      %v544 = vmul.f32 %v335, %v335
      %v545 = vmul.f32 %v336, %v336
      %v546 = vmul.f32 %v337, %v337
      %v547 = vmul.f32 %v338, %v338
      %v548 = vmul.f32 %v339, %v339
      %v549 = vmul.f32 %v340, %v340
      %v550 = vmul.f32 %v341, %v341
      %v551 = vmul.f32 %v342, %v342
      %v552 = vmul.f32 %v343, %v343
      %v553 = vmul.f32 %v344, %v344
      %v554 = vmul.f32 %v345, %v345
      %v555 = vmul.f32 %v346, %v346
      %v556 = vmul.f32 %v347, %v347
      %v557 = vmul.f32 %v348, %v348
      %v558 = vmul.f32 %v349, %v349
      %v559 = vmul.f32 %v350, %v350
      %v560 = vmul.f32 %v351, %v351
      %v561 = vmul.f32 %v352, %v352
      %v562 = vmul.f32 %v353, %v353
      %v563 = vmul.f32 %v354, %v354
      %v564 = vmul.f32 %v355, %v355
      %v565 = vmul.f32 %v356, %v356
      %v566 = vmul.f32 %v357, %v357
      %v567 = vmul.f32 %v358, %v358
      %v568 = vmul.f32 %v359, %v359
      %v569 = vmul.f32 %v360, %v360
      %v570 = vmul.f32 %v361, %v361
      %v571 = vmul.f32 %v362, %v362
      %v572 = vmul.f32 %v363, %v363
      %v573 = vmul.f32 %v364, %v364
      %v574 = vmul.f32 %v365, %v365
      %v575 = vmul.f32 %v366, %v366
      %v576 = vmul.f32 %v367, %v367
      %v577 = vmul.f32 %v368, %v368
      %v578 = vmul.f32 %v369, %v369
      %v579 = vmul.f32 %v370, %v370
      %v580 = vmul.f32 %v371, %v371
      %v581 = vmul.f32 %v372, %v372
      %v582 = vmul.f32 %v373, %v373
      %v583 = vmul.f32 %v374, %v374
      %v584 = vmul.f32 %v375, %v375
      %v585 = vmul.f32 %v376, %v376
      %v586 = vmul.f32 %v377, %v377
      %v587 = vmul.f32 %v378, %v378
      %v588 = vmul.f32 %v379, %v379
      %v589 = vmul.f32 %v380, %v380
      %v590 = vmul.f32 %v381, %v381
      %v591 = vsel %vm382, %v527, 0.0
      %v592 = vsel %vm382, %v528, 0.0
      %v593 = vadd.f32 %v591, %v592
      %v594 = vsel %vm382, %v529, 0.0
      %v595 = vadd.f32 %v593, %v594
      %v596 = vsel %vm382, %v530, 0.0
      %v597 = vadd.f32 %v595, %v596
      %v598 = vsel %vm382, %v531, 0.0
      %v599 = vadd.f32 %v597, %v598
      %v600 = vsel %vm382, %v532, 0.0
      %v601 = vadd.f32 %v599, %v600
      %v602 = vsel %vm382, %v533, 0.0
      %v603 = vadd.f32 %v601, %v602
      %v604 = vsel %vm382, %v534, 0.0
      %v605 = vadd.f32 %v603, %v604
      %v606 = vsel %vm382, %v535, 0.0
      %v607 = vadd.f32 %v605, %v606
      %v608 = vsel %vm382, %v536, 0.0
      %v609 = vadd.f32 %v607, %v608
      %v610 = vsel %vm382, %v537, 0.0
      %v611 = vadd.f32 %v609, %v610
      %v612 = vsel %vm382, %v538, 0.0
      %v613 = vadd.f32 %v611, %v612
      %v614 = vsel %vm382, %v539, 0.0
      %v615 = vadd.f32 %v613, %v614
      %v616 = vsel %vm382, %v540, 0.0
      %v617 = vadd.f32 %v615, %v616
      %v618 = vsel %vm382, %v541, 0.0
      %v619 = vadd.f32 %v617, %v618
      %v620 = vsel %vm382, %v542, 0.0
      %v621 = vadd.f32 %v619, %v620
      %v622 = vsel %vm382, %v543, 0.0
      %v623 = vadd.f32 %v621, %v622
      %v624 = vsel %vm382, %v544, 0.0
      %v625 = vadd.f32 %v623, %v624
      %v626 = vsel %vm382, %v545, 0.0
      %v627 = vadd.f32 %v625, %v626
      %v628 = vsel %vm382, %v546, 0.0
      %v629 = vadd.f32 %v627, %v628
      %v630 = vsel %vm382, %v547, 0.0
      %v631 = vadd.f32 %v629, %v630
      %v632 = vsel %vm382, %v548, 0.0
      %v633 = vadd.f32 %v631, %v632
      %v634 = vsel %vm382, %v549, 0.0
      %v635 = vadd.f32 %v633, %v634
      %v636 = vsel %vm382, %v550, 0.0
      %v637 = vadd.f32 %v635, %v636
      %v638 = vsel %vm382, %v551, 0.0
      %v639 = vadd.f32 %v637, %v638
      %v640 = vsel %vm382, %v552, 0.0
      %v641 = vadd.f32 %v639, %v640
      %v642 = vsel %vm382, %v553, 0.0
      %v643 = vadd.f32 %v641, %v642
      %v644 = vsel %vm382, %v554, 0.0
      %v645 = vadd.f32 %v643, %v644
      %v646 = vsel %vm382, %v555, 0.0
      %v647 = vadd.f32 %v645, %v646
      %v648 = vsel %vm382, %v556, 0.0
      %v649 = vadd.f32 %v647, %v648
      %v650 = vsel %vm382, %v557, 0.0
      %v651 = vadd.f32 %v649, %v650
      %v652 = vsel %vm382, %v558, 0.0
      %v653 = vadd.f32 %v651, %v652
      %v654 = vsel %vm382, %v559, 0.0
      %v655 = vadd.f32 %v653, %v654
      %v656 = vsel %vm382, %v560, 0.0
      %v657 = vadd.f32 %v655, %v656
      %v658 = vsel %vm382, %v561, 0.0
      %v659 = vadd.f32 %v657, %v658
      %v660 = vsel %vm382, %v562, 0.0
      %v661 = vadd.f32 %v659, %v660
      %v662 = vsel %vm382, %v563, 0.0
      %v663 = vadd.f32 %v661, %v662
      %v664 = vsel %vm382, %v564, 0.0
      %v665 = vadd.f32 %v663, %v664
      %v666 = vsel %vm382, %v565, 0.0
      %v667 = vadd.f32 %v665, %v666
      %v668 = vsel %vm382, %v566, 0.0
      %v669 = vadd.f32 %v667, %v668
      %v670 = vsel %vm382, %v567, 0.0
      %v671 = vadd.f32 %v669, %v670
      %v672 = vsel %vm382, %v568, 0.0
      %v673 = vadd.f32 %v671, %v672
      %v674 = vsel %vm382, %v569, 0.0
      %v675 = vadd.f32 %v673, %v674
      %v676 = vsel %vm382, %v570, 0.0
      %v677 = vadd.f32 %v675, %v676
      %v678 = vsel %vm382, %v571, 0.0
      %v679 = vadd.f32 %v677, %v678
      %v680 = vsel %vm382, %v572, 0.0
      %v681 = vadd.f32 %v679, %v680
      %v682 = vsel %vm382, %v573, 0.0
      %v683 = vadd.f32 %v681, %v682
      %v684 = vsel %vm382, %v574, 0.0
      %v685 = vadd.f32 %v683, %v684
      %v686 = vsel %vm382, %v575, 0.0
      %v687 = vadd.f32 %v685, %v686
      %v688 = vsel %vm382, %v576, 0.0
      %v689 = vadd.f32 %v687, %v688
      %v690 = vsel %vm382, %v577, 0.0
      %v691 = vadd.f32 %v689, %v690
      %v692 = vsel %vm382, %v578, 0.0
      %v693 = vadd.f32 %v691, %v692
      %v694 = vsel %vm382, %v579, 0.0
      %v695 = vadd.f32 %v693, %v694
      %v696 = vsel %vm382, %v580, 0.0
      %v697 = vadd.f32 %v695, %v696
      %v698 = vsel %vm382, %v581, 0.0
      %v699 = vadd.f32 %v697, %v698
      %v700 = vsel %vm382, %v582, 0.0
      %v701 = vadd.f32 %v699, %v700
      %v702 = vsel %vm382, %v583, 0.0
      %v703 = vadd.f32 %v701, %v702
      %v704 = vsel %vm382, %v584, 0.0
      %v705 = vadd.f32 %v703, %v704
      %v706 = vsel %vm382, %v585, 0.0
      %v707 = vadd.f32 %v705, %v706
      %v708 = vsel %vm382, %v586, 0.0
      %v709 = vadd.f32 %v707, %v708
      %v710 = vsel %vm382, %v587, 0.0
      %v711 = vadd.f32 %v709, %v710
      %v712 = vsel %vm382, %v588, 0.0
      %v713 = vadd.f32 %v711, %v712
      %v714 = vsel %vm382, %v589, 0.0
      %v715 = vadd.f32 %v713, %v714
      %v716 = vsel %vm382, %v590, 0.0
      %v717 = vadd.f32 %v715, %v716
      %718 = vadd.xlane.f32.xlu0 %v717
      %v719 = vpop.xlane.xlu0 %718
      %v720 = vrot.slane %v719, 4
      %v721 = vadd.f32 %v719, %v720
      %v722 = vrot.slane %v721, 2
      %v723 = vadd.f32 %v721, %v722
      %v724 = vrot.slane %v723, 1
      %v725 = vadd.f32 %v723, %v724
      %s726 = vtos %v725
      %v727 = vrcp.pop 8192.0
      %s728 = vtos %v727
      %s729 = smul.f32 %s526, %s728
      %v730 = vrcp.pop 8192.0
      %s731 = vtos %v730
      %s732 = smul.f32 %s726, %s731
      %s733 = smul.f32 %s729, %s729
      %s734 = ssub.f32 %s732, %s733
      %s735 = sadd.f32 %s734, 1e-05
      %v736 = vstv %s735
      %v737 = vrsqrt.pop %v736
      %s738 = vtos %v737
      %v739 = vld [vmem:[%s1] sm:$0x1]
      %v740 = vld [vmem:[%s2] sm:$0x1]
      %v741 = vstv %s729
      %v742 = vsub.f32 %v318, %v741
      %v743 = vsub.f32 %v319, %v741
      %v744 = vsub.f32 %v320, %v741
      %v745 = vsub.f32 %v321, %v741
      %v746 = vsub.f32 %v322, %v741
      %v747 = vsub.f32 %v323, %v741
      %v748 = vsub.f32 %v324, %v741
      %v749 = vsub.f32 %v325, %v741
      %v750 = vsub.f32 %v326, %v741
      %v751 = vsub.f32 %v327, %v741
      %v752 = vsub.f32 %v328, %v741
      %v753 = vsub.f32 %v329, %v741
      %v754 = vsub.f32 %v330, %v741
      %v755 = vsub.f32 %v331, %v741
      %v756 = vsub.f32 %v332, %v741
      %v757 = vsub.f32 %v333, %v741
      %v758 = vsub.f32 %v334, %v741
      %v759 = vsub.f32 %v335, %v741
      %v760 = vsub.f32 %v336, %v741
      %v761 = vsub.f32 %v337, %v741
      %v762 = vsub.f32 %v338, %v741
      %v763 = vsub.f32 %v339, %v741
      %v764 = vsub.f32 %v340, %v741
      %v765 = vsub.f32 %v341, %v741
      %v766 = vsub.f32 %v342, %v741
      %v767 = vsub.f32 %v343, %v741
      %v768 = vsub.f32 %v344, %v741
      %v769 = vsub.f32 %v345, %v741
      %v770 = vsub.f32 %v346, %v741
      %v771 = vsub.f32 %v347, %v741
      %v772 = vsub.f32 %v348, %v741
      %v773 = vsub.f32 %v349, %v741
      %v774 = vsub.f32 %v350, %v741
      %v775 = vsub.f32 %v351, %v741
      %v776 = vsub.f32 %v352, %v741
      %v777 = vsub.f32 %v353, %v741
      %v778 = vsub.f32 %v354, %v741
      %v779 = vsub.f32 %v355, %v741
      %v780 = vsub.f32 %v356, %v741
      %v781 = vsub.f32 %v357, %v741
      %v782 = vsub.f32 %v358, %v741
      %v783 = vsub.f32 %v359, %v741
      %v784 = vsub.f32 %v360, %v741
      %v785 = vsub.f32 %v361, %v741
      %v786 = vsub.f32 %v362, %v741
      %v787 = vsub.f32 %v363, %v741
      %v788 = vsub.f32 %v364, %v741
      %v789 = vsub.f32 %v365, %v741
      %v790 = vsub.f32 %v366, %v741
      %v791 = vsub.f32 %v367, %v741
      %v792 = vsub.f32 %v368, %v741
      %v793 = vsub.f32 %v369, %v741
      %v794 = vsub.f32 %v370, %v741
      %v795 = vsub.f32 %v371, %v741
      %v796 = vsub.f32 %v372, %v741
      %v797 = vsub.f32 %v373, %v741
      %v798 = vsub.f32 %v374, %v741
      %v799 = vsub.f32 %v375, %v741
      %v800 = vsub.f32 %v376, %v741
      %v801 = vsub.f32 %v377, %v741
      %v802 = vsub.f32 %v378, %v741
      %v803 = vsub.f32 %v379, %v741
      %v804 = vsub.f32 %v380, %v741
      %v805 = vsub.f32 %v381, %v741
      %v806 = vstv %s738
      %v807 = vmul.f32 %v742, %v806
      %v808 = vmul.f32 %v743, %v806
      %v809 = vmul.f32 %v744, %v806
      %v810 = vmul.f32 %v745, %v806
      %v811 = vmul.f32 %v746, %v806
      %v812 = vmul.f32 %v747, %v806
      %v813 = vmul.f32 %v748, %v806
      %v814 = vmul.f32 %v749, %v806
      %v815 = vmul.f32 %v750, %v806
      %v816 = vmul.f32 %v751, %v806
      %v817 = vmul.f32 %v752, %v806
      %v818 = vmul.f32 %v753, %v806
      %v819 = vmul.f32 %v754, %v806
      %v820 = vmul.f32 %v755, %v806
      %v821 = vmul.f32 %v756, %v806
      %v822 = vmul.f32 %v757, %v806
      %v823 = vmul.f32 %v758, %v806
      %v824 = vmul.f32 %v759, %v806
      %v825 = vmul.f32 %v760, %v806
      %v826 = vmul.f32 %v761, %v806
      %v827 = vmul.f32 %v762, %v806
      %v828 = vmul.f32 %v763, %v806
      %v829 = vmul.f32 %v764, %v806
      %v830 = vmul.f32 %v765, %v806
      %v831 = vmul.f32 %v766, %v806
      %v832 = vmul.f32 %v767, %v806
      %v833 = vmul.f32 %v768, %v806
      %v834 = vmul.f32 %v769, %v806
      %v835 = vmul.f32 %v770, %v806
      %v836 = vmul.f32 %v771, %v806
      %v837 = vmul.f32 %v772, %v806
      %v838 = vmul.f32 %v773, %v806
      %v839 = vmul.f32 %v774, %v806
      %v840 = vmul.f32 %v775, %v806
      %v841 = vmul.f32 %v776, %v806
      %v842 = vmul.f32 %v777, %v806
      %v843 = vmul.f32 %v778, %v806
      %v844 = vmul.f32 %v779, %v806
      %v845 = vmul.f32 %v780, %v806
      %v846 = vmul.f32 %v781, %v806
      %v847 = vmul.f32 %v782, %v806
      %v848 = vmul.f32 %v783, %v806
      %v849 = vmul.f32 %v784, %v806
      %v850 = vmul.f32 %v785, %v806
      %v851 = vmul.f32 %v786, %v806
      %v852 = vmul.f32 %v787, %v806
      %v853 = vmul.f32 %v788, %v806
      %v854 = vmul.f32 %v789, %v806
      %v855 = vmul.f32 %v790, %v806
      %v856 = vmul.f32 %v791, %v806
      %v857 = vmul.f32 %v792, %v806
      %v858 = vmul.f32 %v793, %v806
      %v859 = vmul.f32 %v794, %v806
      %v860 = vmul.f32 %v795, %v806
      %v861 = vmul.f32 %v796, %v806
      %v862 = vmul.f32 %v797, %v806
      %v863 = vmul.f32 %v798, %v806
      %v864 = vmul.f32 %v799, %v806
      %v865 = vmul.f32 %v800, %v806
      %v866 = vmul.f32 %v801, %v806
      %v867 = vmul.f32 %v802, %v806
      %v868 = vmul.f32 %v803, %v806
      %v869 = vmul.f32 %v804, %v806
      %v870 = vmul.f32 %v805, %v806
      %v872 = vlaneseq
      %v873 = vshrl.u32 %v872, 7
      %v874 = vsub.s32 0, %v873
      %v875 = vrot.slane %v739, %v874
      %v877 = vmul.f32 %v807, %v875
      %v878 = vmul.f32 %v808, %v875
      %v879 = vmul.f32 %v809, %v875
      %v880 = vmul.f32 %v810, %v875
      %v881 = vmul.f32 %v811, %v875
      %v882 = vmul.f32 %v812, %v875
      %v883 = vmul.f32 %v813, %v875
      %v884 = vmul.f32 %v814, %v875
      %v885 = vmul.f32 %v815, %v875
      %v886 = vmul.f32 %v816, %v875
      %v887 = vmul.f32 %v817, %v875
      %v888 = vmul.f32 %v818, %v875
      %v889 = vmul.f32 %v819, %v875
      %v890 = vmul.f32 %v820, %v875
      %v891 = vmul.f32 %v821, %v875
      %v892 = vmul.f32 %v822, %v875
      %v893 = vmul.f32 %v823, %v875
      %v894 = vmul.f32 %v824, %v875
      %v895 = vmul.f32 %v825, %v875
      %v896 = vmul.f32 %v826, %v875
      %v897 = vmul.f32 %v827, %v875
      %v898 = vmul.f32 %v828, %v875
      %v899 = vmul.f32 %v829, %v875
      %v900 = vmul.f32 %v830, %v875
      %v901 = vmul.f32 %v831, %v875
      %v902 = vmul.f32 %v832, %v875
      %v903 = vmul.f32 %v833, %v875
      %v904 = vmul.f32 %v834, %v875
      %v905 = vmul.f32 %v835, %v875
      %v906 = vmul.f32 %v836, %v875
      %v907 = vmul.f32 %v837, %v875
      %v908 = vmul.f32 %v838, %v875
      %v909 = vmul.f32 %v839, %v875
      %v910 = vmul.f32 %v840, %v875
      %v911 = vmul.f32 %v841, %v875
      %v912 = vmul.f32 %v842, %v875
      %v913 = vmul.f32 %v843, %v875
      %v914 = vmul.f32 %v844, %v875
      %v915 = vmul.f32 %v845, %v875
      %v916 = vmul.f32 %v846, %v875
      %v917 = vmul.f32 %v847, %v875
      %v918 = vmul.f32 %v848, %v875
      %v919 = vmul.f32 %v849, %v875
      %v920 = vmul.f32 %v850, %v875
      %v921 = vmul.f32 %v851, %v875
      %v922 = vmul.f32 %v852, %v875
      %v923 = vmul.f32 %v853, %v875
      %v924 = vmul.f32 %v854, %v875
      %v925 = vmul.f32 %v855, %v875
      %v926 = vmul.f32 %v856, %v875
      %v927 = vmul.f32 %v857, %v875
      %v928 = vmul.f32 %v858, %v875
      %v929 = vmul.f32 %v859, %v875
      %v930 = vmul.f32 %v860, %v875
      %v931 = vmul.f32 %v861, %v875
      %v932 = vmul.f32 %v862, %v875
      %v933 = vmul.f32 %v863, %v875
      %v934 = vmul.f32 %v864, %v875
      %v935 = vmul.f32 %v865, %v875
      %v936 = vmul.f32 %v866, %v875
      %v937 = vmul.f32 %v867, %v875
      %v938 = vmul.f32 %v868, %v875
      %v939 = vmul.f32 %v869, %v875
      %v940 = vmul.f32 %v870, %v875
      %v942 = vlaneseq
      %v943 = vshrl.u32 %v942, 7
      %v944 = vsub.s32 0, %v943
      %v945 = vrot.slane %v740, %v944
      %v947 = vadd.f32 %v877, %v945
      %v948 = vadd.f32 %v878, %v945
      %v949 = vadd.f32 %v879, %v945
      %v950 = vadd.f32 %v880, %v945
      %v951 = vadd.f32 %v881, %v945
      %v952 = vadd.f32 %v882, %v945
      %v953 = vadd.f32 %v883, %v945
      %v954 = vadd.f32 %v884, %v945
      %v955 = vadd.f32 %v885, %v945
      %v956 = vadd.f32 %v886, %v945
      %v957 = vadd.f32 %v887, %v945
      %v958 = vadd.f32 %v888, %v945
      %v959 = vadd.f32 %v889, %v945
      %v960 = vadd.f32 %v890, %v945
      %v961 = vadd.f32 %v891, %v945
      %v962 = vadd.f32 %v892, %v945
      %v963 = vadd.f32 %v893, %v945
      %v964 = vadd.f32 %v894, %v945
      %v965 = vadd.f32 %v895, %v945
      %v966 = vadd.f32 %v896, %v945
      %v967 = vadd.f32 %v897, %v945
      %v968 = vadd.f32 %v898, %v945
      %v969 = vadd.f32 %v899, %v945
      %v970 = vadd.f32 %v900, %v945
      %v971 = vadd.f32 %v901, %v945
      %v972 = vadd.f32 %v902, %v945
      %v973 = vadd.f32 %v903, %v945
      %v974 = vadd.f32 %v904, %v945
      %v975 = vadd.f32 %v905, %v945
      %v976 = vadd.f32 %v906, %v945
      %v977 = vadd.f32 %v907, %v945
      %v978 = vadd.f32 %v908, %v945
      %v979 = vadd.f32 %v909, %v945
      %v980 = vadd.f32 %v910, %v945
      %v981 = vadd.f32 %v911, %v945
      %v982 = vadd.f32 %v912, %v945
      %v983 = vadd.f32 %v913, %v945
      %v984 = vadd.f32 %v914, %v945
      %v985 = vadd.f32 %v915, %v945
      %v986 = vadd.f32 %v916, %v945
      %v987 = vadd.f32 %v917, %v945
      %v988 = vadd.f32 %v918, %v945
      %v989 = vadd.f32 %v919, %v945
      %v990 = vadd.f32 %v920, %v945
      %v991 = vadd.f32 %v921, %v945
      %v992 = vadd.f32 %v922, %v945
      %v993 = vadd.f32 %v923, %v945
      %v994 = vadd.f32 %v924, %v945
      %v995 = vadd.f32 %v925, %v945
      %v996 = vadd.f32 %v926, %v945
      %v997 = vadd.f32 %v927, %v945
      %v998 = vadd.f32 %v928, %v945
      %v999 = vadd.f32 %v929, %v945
      %v1000 = vadd.f32 %v930, %v945
      %v1001 = vadd.f32 %v931, %v945
      %v1002 = vadd.f32 %v932, %v945
      %v1003 = vadd.f32 %v933, %v945
      %v1004 = vadd.f32 %v934, %v945
      %v1005 = vadd.f32 %v935, %v945
      %v1006 = vadd.f32 %v936, %v945
      %v1007 = vadd.f32 %v937, %v945
      %v1008 = vadd.f32 %v938, %v945
      %v1009 = vadd.f32 %v939, %v945
      %v1010 = vadd.f32 %v940, %v945
      %1011 = vst.msk [vmem:[%s313] sm:$0xff] %vm382, %v947
      %1012 = vst.msk [vmem:[%s313 + $0x8] sm:$0xff] %vm382, %v948
      %1013 = vst.msk [vmem:[%s313 + $0x10] sm:$0xff] %vm382, %v949
      %1014 = vst.msk [vmem:[%s313 + $0x18] sm:$0xff] %vm382, %v950
      %1015 = vst.msk [vmem:[%s313 + $0x20] sm:$0xff] %vm382, %v951
      %1016 = vst.msk [vmem:[%s313 + $0x28] sm:$0xff] %vm382, %v952
      %1017 = vst.msk [vmem:[%s313 + $0x30] sm:$0xff] %vm382, %v953
      %1018 = vst.msk [vmem:[%s313 + $0x38] sm:$0xff] %vm382, %v954
      %1019 = vst.msk [vmem:[%s313 + $0x40] sm:$0xff] %vm382, %v955
      %1020 = vst.msk [vmem:[%s313 + $0x48] sm:$0xff] %vm382, %v956
      %1021 = vst.msk [vmem:[%s313 + $0x50] sm:$0xff] %vm382, %v957
      %1022 = vst.msk [vmem:[%s313 + $0x58] sm:$0xff] %vm382, %v958
      %1023 = vst.msk [vmem:[%s313 + $0x60] sm:$0xff] %vm382, %v959
      %1024 = vst.msk [vmem:[%s313 + $0x68] sm:$0xff] %vm382, %v960
      %1025 = vst.msk [vmem:[%s313 + $0x70] sm:$0xff] %vm382, %v961
      %1026 = vst.msk [vmem:[%s313 + $0x78] sm:$0xff] %vm382, %v962
      %1027 = vst.msk [vmem:[%s313 + $0x80] sm:$0xff] %vm382, %v963
      %1028 = vst.msk [vmem:[%s313 + $0x88] sm:$0xff] %vm382, %v964
      %1029 = vst.msk [vmem:[%s313 + $0x90] sm:$0xff] %vm382, %v965
      %1030 = vst.msk [vmem:[%s313 + $0x98] sm:$0xff] %vm382, %v966
      %1031 = vst.msk [vmem:[%s313 + $0xa0] sm:$0xff] %vm382, %v967
      %1032 = vst.msk [vmem:[%s313 + $0xa8] sm:$0xff] %vm382, %v968
      %1033 = vst.msk [vmem:[%s313 + $0xb0] sm:$0xff] %vm382, %v969
      %1034 = vst.msk [vmem:[%s313 + $0xb8] sm:$0xff] %vm382, %v970
      %1035 = vst.msk [vmem:[%s313 + $0xc0] sm:$0xff] %vm382, %v971
      %1036 = vst.msk [vmem:[%s313 + $0xc8] sm:$0xff] %vm382, %v972
      %1037 = vst.msk [vmem:[%s313 + $0xd0] sm:$0xff] %vm382, %v973
      %1038 = vst.msk [vmem:[%s313 + $0xd8] sm:$0xff] %vm382, %v974
      %1039 = vst.msk [vmem:[%s313 + $0xe0] sm:$0xff] %vm382, %v975
      %1040 = vst.msk [vmem:[%s313 + $0xe8] sm:$0xff] %vm382, %v976
      %1041 = vst.msk [vmem:[%s313 + $0xf0] sm:$0xff] %vm382, %v977
      %1042 = vst.msk [vmem:[%s313 + $0xf8] sm:$0xff] %vm382, %v978
      %1043 = vst.msk [vmem:[%s313 + $0x100] sm:$0xff] %vm382, %v979
      %1044 = vst.msk [vmem:[%s313 + $0x108] sm:$0xff] %vm382, %v980
      %1045 = vst.msk [vmem:[%s313 + $0x110] sm:$0xff] %vm382, %v981
      %1046 = vst.msk [vmem:[%s313 + $0x118] sm:$0xff] %vm382, %v982
      %1047 = vst.msk [vmem:[%s313 + $0x120] sm:$0xff] %vm382, %v983
      %1048 = vst.msk [vmem:[%s313 + $0x128] sm:$0xff] %vm382, %v984
      %1049 = vst.msk [vmem:[%s313 + $0x130] sm:$0xff] %vm382, %v985
      %1050 = vst.msk [vmem:[%s313 + $0x138] sm:$0xff] %vm382, %v986
      %1051 = vst.msk [vmem:[%s313 + $0x140] sm:$0xff] %vm382, %v987
      %1052 = vst.msk [vmem:[%s313 + $0x148] sm:$0xff] %vm382, %v988
      %1053 = vst.msk [vmem:[%s313 + $0x150] sm:$0xff] %vm382, %v989
      %1054 = vst.msk [vmem:[%s313 + $0x158] sm:$0xff] %vm382, %v990
      %1055 = vst.msk [vmem:[%s313 + $0x160] sm:$0xff] %vm382, %v991
      %1056 = vst.msk [vmem:[%s313 + $0x168] sm:$0xff] %vm382, %v992
      %1057 = vst.msk [vmem:[%s313 + $0x170] sm:$0xff] %vm382, %v993
      %1058 = vst.msk [vmem:[%s313 + $0x178] sm:$0xff] %vm382, %v994
      %1059 = vst.msk [vmem:[%s313 + $0x180] sm:$0xff] %vm382, %v995
      %1060 = vst.msk [vmem:[%s313 + $0x188] sm:$0xff] %vm382, %v996
      %1061 = vst.msk [vmem:[%s313 + $0x190] sm:$0xff] %vm382, %v997
      %1062 = vst.msk [vmem:[%s313 + $0x198] sm:$0xff] %vm382, %v998
      %1063 = vst.msk [vmem:[%s313 + $0x1a0] sm:$0xff] %vm382, %v999
      %1064 = vst.msk [vmem:[%s313 + $0x1a8] sm:$0xff] %vm382, %v1000
      %1065 = vst.msk [vmem:[%s313 + $0x1b0] sm:$0xff] %vm382, %v1001
      %1066 = vst.msk [vmem:[%s313 + $0x1b8] sm:$0xff] %vm382, %v1002
      %1067 = vst.msk [vmem:[%s313 + $0x1c0] sm:$0xff] %vm382, %v1003
      %1068 = vst.msk [vmem:[%s313 + $0x1c8] sm:$0xff] %vm382, %v1004
      %1069 = vst.msk [vmem:[%s313 + $0x1d0] sm:$0xff] %vm382, %v1005
      %1070 = vst.msk [vmem:[%s313 + $0x1d8] sm:$0xff] %vm382, %v1006
      %1071 = vst.msk [vmem:[%s313 + $0x1e0] sm:$0xff] %vm382, %v1007
      %1072 = vst.msk [vmem:[%s313 + $0x1e8] sm:$0xff] %vm382, %v1008
      %1073 = vst.msk [vmem:[%s313 + $0x1f0] sm:$0xff] %vm382, %v1009
      %1074 = vst.msk [vmem:[%s313 + $0x1f8] sm:$0xff] %vm382, %v1010
      %v1075 = vmul.f32 %v515, 0.001953125
      %v1076 = vsub.f32 %v1075, %v741
      %v1077 = vmul.f32 %v1076, %v806
      %v1078 = vmul.f32 %v1077, %v739
      %v1079 = vadd.f32 %v1078, %v740
      %v1080 = vld [vmem:[%s3] sm:$0xff]
      %v1081 = vld [vmem:[%s3 + $0x8] sm:$0xff]
      %v1082 = vld [vmem:[%s4] sm:$0x1]
      %v1084 = vsel %vm382, %v1079, 0
      %1086 = vmatprep.subr.mxu0 0.0
      %1087 = vmatpush1.msra.mxu0 0.0
      %1088 = vmatprep.subr.mxu0 0.0
      %1089 = vmatpush1.msra.mxu0 0.0
      %1090 = vmatprep.subr.mxu0 0.0
      %1091 = vmatpush1.msra.mxu0 0.0
      %1092 = vmatprep.subr.mxu0 0.0
      %1093 = vmatpush1.msra.mxu0 0.0
      %1094 = vmatprep.subr.mxu0 0.0
      %1095 = vmatpush1.msra.mxu0 0.0
      %1096 = vmatprep.subr.mxu0 0.0
      %1097 = vmatpush1.msra.mxu0 0.0
      %1098 = vmatprep.subr.mxu0 0.0
      %1099 = vmatpush1.msra.mxu0 0.0
      %1100 = vmatprep.subr.mxu0 0.0
      %1101 = vmatpush1.msra.mxu0 0.0
      %1102 = vmatprep.subr.mxu0 0.0
      %1103 = vmatpush1.msra.mxu0 0.0
      %1104 = vmatprep.subr.mxu0 0.0
      %1105 = vmatpush1.msra.mxu0 0.0
      %1106 = vmatprep.subr.mxu0 0.0
      %1107 = vmatpush1.msra.mxu0 0.0
      %1108 = vmatprep.subr.mxu0 0.0
      %1109 = vmatpush1.msra.mxu0 0.0
      %1110 = vmatprep.subr.mxu0 0.0
      %1111 = vmatpush1.msra.mxu0 0.0
      %1112 = vmatprep.subr.mxu0 0.0
      %1113 = vmatpush1.msra.mxu0 0.0
      %1114 = vmatprep.subr.mxu0 0.0
      %1115 = vmatpush1.msra.mxu0 %v1081
      %1116 = vmatprep.subr.mxu0 0.0
      %1117 = vmatpush1.msra.mxu0 %v1080
      %1118 = vmatprep.subr.mxu0 0.0
      %1119 = vmatpush2.msra.mxu0 0.0
      %1120 = vmatprep.subr.mxu0 0.0
      %1121 = vmatpush2.msra.mxu0 0.0
      %1122 = vmatprep.subr.mxu0 0.0
      %1123 = vmatpush2.msra.mxu0 0.0
      %1124 = vmatprep.subr.mxu0 0.0
      %1125 = vmatpush2.msra.mxu0 0.0
      %1126 = vmatprep.subr.mxu0 0.0
      %1127 = vmatpush2.msra.mxu0 0.0
      %1128 = vmatprep.subr.mxu0 0.0
      %1129 = vmatpush2.msra.mxu0 0.0
      %1130 = vmatprep.subr.mxu0 0.0
      %1131 = vmatpush2.msra.mxu0 0.0
      %1132 = vmatprep.subr.mxu0 0.0
      %1133 = vmatpush2.msra.mxu0 0.0
      %1134 = vmatprep.subr.mxu0 0.0
      %1135 = vmatpush2.msra.mxu0 0.0
      %1136 = vmatprep.subr.mxu0 0.0
      %1137 = vmatpush2.msra.mxu0 0.0
      %1138 = vmatprep.subr.mxu0 0.0
      %1139 = vmatpush2.msra.mxu0 0.0
      %1140 = vmatprep.subr.mxu0 0.0
      %1141 = vmatpush2.msra.mxu0 0.0
      %1142 = vmatprep.subr.mxu0 0.0
      %1143 = vmatpush2.msra.mxu0 0.0
      %1144 = vmatprep.subr.mxu0 0.0
      %1145 = vmatpush2.msra.mxu0 0.0
      %1146 = vmatprep.subr.mxu0 0.0
      %1147 = vmatpush2.msra.mxu0 0.0
      %1148 = vmatprep.subr.mxu0 0.0
      %1149 = vmatpush2.msra.mxu0 0.0
      %1150 = vmatprep.mubr.f32.mxu0 0.0
      %1151 = vmatmul.mubr.f32.gmra.mxu0 %v1084
      %v1152 = vpop.f32.mrf.mxu0
      %v1153 = vadd.f32 %v1082, %v1152
      %v1154 = vpop.f32.mrf.mxu0
      %1155 = vdwg.mxu0
      %v1156 = vmul.f32 %v1153, 0.5
      %v1157 = vmul.f32 %v1153, 0.70710677
      %v1158 = vand.u32 2147483647, %v1157
      %v1159 = vmul.f32 %v1158, 0.3275911
      %v1160 = vadd.f32 %v1159, 1.0
      %v1161 = vrcp.pop %v1160
      %v1162 = vmul.f32 1.0, %v1161
      %v1163 = vmul.f32 %v1162, 1.0614054
      %v1164 = vadd.f32 %v1163, -1.4531521
      %v1165 = vmul.f32 %v1164, %v1162
      %v1166 = vadd.f32 %v1165, 1.4214138
      %v1167 = vmul.f32 %v1166, %v1162
      %v1168 = vadd.f32 %v1167, -0.28449672
      %v1169 = vmul.f32 %v1168, %v1162
      %v1170 = vadd.f32 %v1169, 0.2548296
      %v1171 = vmul.f32 %v1170, %v1162
      %v1172 = vsub.f32 0.0, %v1158
      %v1173 = vmul.f32 %v1172, %v1158
      %v1174 = vmul.f32 %v1173, 1.442695
      %v1175 = vpow.pop %v1174
      %v1176 = vmul.f32 %v1171, %v1175
      %v1177 = vsub.f32 1.0, %v1176
      %vm1178 = vcmp.lt.f32.partialorder %v1157, 0.0
      %v1179 = vsub.f32 0.0, %v1177
      %v1180 = vsel %vm1178, %v1179, %v1177
      %v1181 = vadd.f32 %v1180, 1.0
      %v1182 = vmul.f32 %v1156, %v1181
      %v1183 = vld [vmem:[%s5] sm:$0x3]
      %v1184 = vld [vmem:[%s6] sm:$0x1]
      %vm1185 = vcmask 15360
      %v1187 = vsel %vm1185, %v1182, 0
      %vm1189 = vcmask 1041408
      %v1191 = vsel %vm1189, %v1183, 0
      %1193 = vmatprep.subr.mxu0 0.0
      %1194 = vmatpush1.msra.mxu0 0.0
      %1195 = vmatprep.subr.mxu0 0.0
      %1196 = vmatpush1.msra.mxu0 0.0
      %1197 = vmatprep.subr.mxu0 0.0
      %1198 = vmatpush1.msra.mxu0 0.0
      %1199 = vmatprep.subr.mxu0 0.0
      %1200 = vmatpush1.msra.mxu0 0.0
      %1201 = vmatprep.subr.mxu0 0.0
      %1202 = vmatpush1.msra.mxu0 0.0
      %1203 = vmatprep.subr.mxu0 0.0
      %1204 = vmatpush1.msra.mxu0 0.0
      %1205 = vmatprep.subr.mxu0 0.0
      %1206 = vmatpush1.msra.mxu0 0.0
      %1207 = vmatprep.subr.mxu0 0.0
      %1208 = vmatpush1.msra.mxu0 0.0
      %1209 = vmatprep.subr.mxu0 0.0
      %1210 = vmatpush1.msra.mxu0 0.0
      %1211 = vmatprep.subr.mxu0 0.0
      %1212 = vmatpush1.msra.mxu0 0.0
      %1213 = vmatprep.subr.mxu0 0.0
      %1214 = vmatpush1.msra.mxu0 0.0
      %1215 = vmatprep.subr.mxu0 0.0
      %1216 = vmatpush1.msra.mxu0 0.0
      %1217 = vmatprep.subr.mxu0 0.0
      %1218 = vmatpush1.msra.mxu0 0.0
      %1219 = vmatprep.subr.mxu0 0.0
      %1220 = vmatpush1.msra.mxu0 0.0
      %1221 = vmatprep.subr.mxu0 0.0
      %1222 = vmatpush1.msra.mxu0 0.0
      %1223 = vmatprep.subr.mxu0 0.0
      %1224 = vmatpush1.msra.mxu0 %v1191
      %1225 = vmatprep.subr.mxu0 0.0
      %1226 = vmatpush2.msra.mxu0 0.0
      %1227 = vmatprep.subr.mxu0 0.0
      %1228 = vmatpush2.msra.mxu0 0.0
      %1229 = vmatprep.subr.mxu0 0.0
      %1230 = vmatpush2.msra.mxu0 0.0
      %1231 = vmatprep.subr.mxu0 0.0
      %1232 = vmatpush2.msra.mxu0 0.0
      %1233 = vmatprep.subr.mxu0 0.0
      %1234 = vmatpush2.msra.mxu0 0.0
      %1235 = vmatprep.subr.mxu0 0.0
      %1236 = vmatpush2.msra.mxu0 0.0
      %1237 = vmatprep.subr.mxu0 0.0
      %1238 = vmatpush2.msra.mxu0 0.0
      %1239 = vmatprep.subr.mxu0 0.0
      %1240 = vmatpush2.msra.mxu0 0.0
      %1241 = vmatprep.subr.mxu0 0.0
      %1242 = vmatpush2.msra.mxu0 0.0
      %1243 = vmatprep.subr.mxu0 0.0
      %1244 = vmatpush2.msra.mxu0 0.0
      %1245 = vmatprep.subr.mxu0 0.0
      %1246 = vmatpush2.msra.mxu0 0.0
      %1247 = vmatprep.subr.mxu0 0.0
      %1248 = vmatpush2.msra.mxu0 0.0
      %1249 = vmatprep.subr.mxu0 0.0
      %1250 = vmatpush2.msra.mxu0 0.0
      %1251 = vmatprep.subr.mxu0 0.0
      %1252 = vmatpush2.msra.mxu0 0.0
      %1253 = vmatprep.subr.mxu0 0.0
      %1254 = vmatpush2.msra.mxu0 0.0
      %1255 = vmatprep.subr.mxu0 0.0
      %1256 = vmatpush2.msra.mxu0 0.0
      %1257 = vmatprep.mubr.f32.mxu0 0.0
      %1258 = vmatmul.mubr.f32.gmra.mxu0 %v1187
      %v1259 = vpop.f32.mrf.mxu0
      %v1260 = vadd.f32 %v1184, %v1259
      %v1261 = vpop.f32.mrf.mxu0
      %1262 = vdwg.mxu0
      %v1263 = vmul.f32 %v1260, 0.5
      %v1264 = vmul.f32 %v1260, 0.70710677
      %v1265 = vand.u32 2147483647, %v1264
      %v1266 = vmul.f32 %v1265, 0.3275911
      %v1267 = vadd.f32 %v1266, 1.0
      %v1268 = vrcp.pop %v1267
      %v1269 = vmul.f32 1.0, %v1268
      %v1270 = vmul.f32 %v1269, 1.0614054
      %v1271 = vadd.f32 %v1270, -1.4531521
      %v1272 = vmul.f32 %v1271, %v1269
      %v1273 = vadd.f32 %v1272, 1.4214138
      %v1274 = vmul.f32 %v1273, %v1269
      %v1275 = vadd.f32 %v1274, -0.28449672
      %v1276 = vmul.f32 %v1275, %v1269
      %v1277 = vadd.f32 %v1276, 0.2548296
      %v1278 = vmul.f32 %v1277, %v1269
      %v1279 = vsub.f32 0.0, %v1265
      %v1280 = vmul.f32 %v1279, %v1265
      %v1281 = vmul.f32 %v1280, 1.442695
      %v1282 = vpow.pop %v1281
      %v1283 = vmul.f32 %v1278, %v1282
      %v1284 = vsub.f32 1.0, %v1283
      %vm1285 = vcmp.lt.f32.partialorder %v1264, 0.0
      %v1286 = vsub.f32 0.0, %v1284
      %v1287 = vsel %vm1285, %v1286, %v1284
      %v1288 = vadd.f32 %v1287, 1.0
      %v1289 = vmul.f32 %v1263, %v1288
      %v1290 = vsub.f32 0.0, %v1289
      %v1291 = vmul.f32 %v1290, 1.442695
      %v1292 = vpow.pop %v1291
      %v1293 = vadd.f32 %v1292, 1.0
      %v1294 = vrcp.pop %v1293
      %v1295 = vmul.f32 1.0, %v1294
      %1296 = vst.msk [vmem:[%s317] sm:$0x1] %vm516, %v1295
      %s1297 = smul.u32 64, %s20
      %p1298 = scmp.lt.s32.totalorder %s1297, 127
      %s1299 = scalar_select %p1298, %s1297, 127
      %s1300 = smul.addr %s1299, 8
      %s1301 = scalar_lea.vmem %s7, %s1300
      %p1302 = scmp.lt.s32.totalorder %s20, 1
      %s1303 = scalar_select %p1302, %s20, 1
      %s1304 = scalar_lea.vmem %s8, %s1303
      // Predicated region
      $region49: #{ca3d_forward.5} parent=47 // pred_check
        %p1305 = pneg %p190
      $region50: #{ca3d_forward.5} parent=47 // pred_check_branch
        %1307 = sbr.rel (%p1305) target = $region52
      $region51: #{ca3d_forward.5} parent=47 // pred_region
        %s1308 = smul.u32 64, %s20
      $region52: #{ca3d_forward.5} parent=47 // pred_fallthru
        _
      // Predicated region
      $region53: #{ca3d_forward.5} parent=47 // pred_check
        %p1309 = pneg %p216
      $region54: #{ca3d_forward.5} parent=47 // pred_check_branch
        %1311 = sbr.rel (%p1309) target = $region56
      $region55: #{ca3d_forward.5} parent=47 // pred_region
        _
      $region56: #{ca3d_forward.5} parent=47 // pred_fallthru
        _
    $region48: #{ca3d_forward.5} parent=5 // pred_fallthru
      _
    %p1312 = scmp.le.s32.totalorder 2, %s15
    // Predicated region
    $region57: #{ca3d_forward.5} parent=5 // pred_check
      %p1313 = pneg %p1312
    $region58: #{ca3d_forward.5} parent=5 // pred_check_branch
      %1315 = sbr.rel (%p1313) target = $region60
    $region59: #{ca3d_forward.5} parent=5 // pred_region
      %s1316 = ssub.s32 %s15, 2
      // Predicated region
      $region61: #{ca3d_forward.5} parent=59 // pred_check
        %p1317 = pneg %p196
      $region62: #{ca3d_forward.5} parent=59 // pred_check_branch
        %1319 = sbr.rel (%p1317) target = $region64
      $region63: #{ca3d_forward.5} parent=59 // pred_region
        %s1320 = smul.u32 64, %s21
        %p1321 = scmp.lt.s32.totalorder %s1320, 127
        %s1322 = scalar_select %p1321, %s1320, 127
        %s1323 = smul.addr %s1322, 8
        %s1324 = scalar_lea.vmem %s7, %s1323
      $region64: #{ca3d_forward.5} parent=59 // pred_fallthru
        _
      // Predicated region
      $region65: #{ca3d_forward.5} parent=59 // pred_check
        %p1325 = pneg %p222
      $region66: #{ca3d_forward.5} parent=59 // pred_check_branch
        %1327 = sbr.rel (%p1325) target = $region68
      $region67: #{ca3d_forward.5} parent=59 // pred_region
        %p1328 = scmp.lt.s32.totalorder %s21, 1
        %s1329 = scalar_select %p1328, %s21, 1
        %s1330 = scalar_lea.vmem %s8, %s1329
      $region68: #{ca3d_forward.5} parent=59 // pred_fallthru
        _
    $region60: #{ca3d_forward.5} parent=5 // pred_fallthru
      _
  $region6: #{ca3d_forward.5} parent=0 // loop_footer
    %s19 = sadd.s32 1, %s15
  $region7: #{ca3d_forward.5} parent=0 // loop_footer_branch
    %14 = sbr.rel target = $region3
  $region8: #{ca3d_forward.5} parent=0 // loop_exit
    _

// kernel: ca3d_forward.4
$region0: #{ca3d_forward.4}
  #allocation0 [shape = 'u32[]', space=smem, size = 0x4, offset = 0x4, fixed_abs, tag = 'smem constant byte address 0x4 - core index']
  #allocation1 [shape = 'u32[144,128]{1,0:T(1,128)}', space=vmem, size = 0x12000, scoped, tag = 'internal scratch']
  %s0 = inlined_call_operand.vmem [shape: bf16[2,1,432], index: 0, kind: input, shape index: {}]
  %s1 = inlined_call_operand.vmem [shape: bf16[1024,432], index: 1, kind: input, shape index: {}]
  %s2 = inlined_call_operand.vmem [shape: bf16[432,16], index: 2, kind: input, shape index: {}]
  %s3 = inlined_call_operand.vmem [shape: f32[1,16], index: 3, kind: input, shape index: {}]
  %s4 = inlined_call_operand.vmem [shape: f32[1024,16], index: 4, kind: output, shape index: {}]
  %s5 = sld [smem:[#allocation0]]
  $region49: #{ca3d_forward.4} parent=0
    _
  %s7 = ssub.s32 1, %s5
  %s8 = scalar_select 0, %s7, %s5
  loop: start=0, step=1, limit=6
  $region2: #{ca3d_forward.4} parent=0 // loop_pre_header
    _
  $region3: #{ca3d_forward.4} parent=0 // loop_header
    %s10 = sphi 0, %s14
    %p11 = scmp.ge.s32.totalorder %s10, 6
    %s17 = sphi 0, %s29
    %s18 = sphi 0, %s25
    %s19 = sphi 0, %s17
    %s20 = sphi 0, %s18
    %s21 = sphi 0, %s19
    %s22 = sphi 0, %s20
    %s32 = sphi 0, %s34
    %s35 = sphi 0, %s32
    %s36 = sphi 0, %s35
    %s52 = sphi 0, %s36
    %s62 = sphi 0, %s64
    %s65 = sphi 0, %s62
    %s66 = sphi 0, %s65
    %s82 = sphi 0, %s66
    %s86 = sphi 0, %s86
    %s88 = sphi 0, %s86
    %s89 = sphi 0, %s88
    %s103 = sphi 0, %s89
    %s107 = sphi 0, %s107
    %s109 = sphi 0, %s107
    %s110 = sphi 0, %s109
    %s124 = sphi 0, %s110
    %s134 = sphi 0, %s136
    %s137 = sphi 0, %s134
    %s138 = sphi 0, %s137
    %s154 = sphi 0, %s138
  $region4: #{ca3d_forward.4} parent=0 // loop_header_branch
    %13 = sbr.rel (%p11) target = $region8
  $region5: #{ca3d_forward.4} parent=0 // loop_body
    %s15 = ssub.s32 %s10, 1
    %s16 = ssub.s32 %s10, 2
    %s23 = sadd.s32 1, %s18
    %p24 = scmp.ge.s32.totalorder %s23, 2
    %s25 = scalar_select %p24, 0, %s23
    %s26 = sadd.s32 1, %s17
    %s27 = scalar_select %p24, %s26, %s17
    %p28 = scmp.ge.s32.totalorder %s27, 2
    %s29 = scalar_select %p28, 0, %s27
    %s30 = ssub.s32 %s17, %s29
    %p31 = scmp.eq.s32.totalorder %s30, 0
    %s33 = sadd.s32 %s32, 1
    %s34 = scalar_select %p31, %s32, %s33
    %p37 = pneg %p31
    %p38 = scmp.eq.s32.totalorder %s10, 3
    %p39 = por %p37, %p38
    %p40 = scmp.ne.s32.totalorder %s32, %s35
    %p41 = scmp.eq.s32.totalorder %s10, 0
    %p42 = por %p40, %p41
    %p43 = scmp.ne.s32.totalorder %s32, %s35
    %p44 = scmp.eq.s32.totalorder %s15, 3
    %p45 = por %p43, %p44
    %p46 = scmp.ne.s32.totalorder %s35, %s36
    %p47 = scmp.eq.s32.totalorder %s15, 0
    %p48 = por %p46, %p47
    %p49 = scmp.ne.s32.totalorder %s35, %s36
    %p50 = scmp.eq.s32.totalorder %s16, 3
    %p51 = por %p49, %p50
    %p53 = scmp.ne.s32.totalorder %s36, %s52
    %p54 = scmp.eq.s32.totalorder %s16, 0
    %p55 = por %p53, %p54
    %s56 = smul.u32 %s17, 2
    %s57 = sadd.s32 %s56, %s18
    %s58 = smul.u32 %s29, 2
    %s59 = sadd.s32 %s58, %s25
    %s60 = ssub.s32 %s57, %s59
    %p61 = scmp.eq.s32.totalorder %s60, 0
    %s63 = sadd.s32 %s62, 1
    %s64 = scalar_select %p61, %s62, %s63
    %p67 = pneg %p61
    %p68 = scmp.eq.s32.totalorder %s10, 3
    %p69 = por %p67, %p68
    %p70 = scmp.ne.s32.totalorder %s62, %s65
    %p71 = scmp.eq.s32.totalorder %s10, 0
    %p72 = por %p70, %p71
    %p73 = scmp.ne.s32.totalorder %s62, %s65
    %p74 = scmp.eq.s32.totalorder %s15, 3
    %p75 = por %p73, %p74
    %p76 = scmp.ne.s32.totalorder %s65, %s66
    %p77 = scmp.eq.s32.totalorder %s15, 0
    %p78 = por %p76, %p77
    %p79 = scmp.ne.s32.totalorder %s65, %s66
    %p80 = scmp.eq.s32.totalorder %s16, 3
    %p81 = por %p79, %p80
    %p83 = scmp.ne.s32.totalorder %s66, %s82
    %p84 = scmp.eq.s32.totalorder %s16, 0
    %p85 = por %p83, %p84
    %s87 = sadd.s32 %s86, 1
    %p90 = scmp.eq.s32.totalorder %s10, 3
    %p91 = scmp.ne.s32.totalorder %s86, %s88
    %p92 = scmp.eq.s32.totalorder %s10, 0
    %p93 = por %p91, %p92
    %p94 = scmp.ne.s32.totalorder %s86, %s88
    %p95 = scmp.eq.s32.totalorder %s15, 3
    %p96 = por %p94, %p95
    %p97 = scmp.ne.s32.totalorder %s88, %s89
    %p98 = scmp.eq.s32.totalorder %s15, 0
    %p99 = por %p97, %p98
    %p100 = scmp.ne.s32.totalorder %s88, %s89
    %p101 = scmp.eq.s32.totalorder %s16, 3
    %p102 = por %p100, %p101
    %p104 = scmp.ne.s32.totalorder %s89, %s103
    %p105 = scmp.eq.s32.totalorder %s16, 0
    %p106 = por %p104, %p105
    %s108 = sadd.s32 %s107, 1
    %p111 = scmp.eq.s32.totalorder %s10, 3
    %p112 = scmp.ne.s32.totalorder %s107, %s109
    %p113 = scmp.eq.s32.totalorder %s10, 0
    %p114 = por %p112, %p113
    %p115 = scmp.ne.s32.totalorder %s107, %s109
    %p116 = scmp.eq.s32.totalorder %s15, 3
    %p117 = por %p115, %p116
    %p118 = scmp.ne.s32.totalorder %s109, %s110
    %p119 = scmp.eq.s32.totalorder %s15, 0
    %p120 = por %p118, %p119
    %p121 = scmp.ne.s32.totalorder %s109, %s110
    %p122 = scmp.eq.s32.totalorder %s16, 3
    %p123 = por %p121, %p122
    %p125 = scmp.ne.s32.totalorder %s110, %s124
    %p126 = scmp.eq.s32.totalorder %s16, 0
    %p127 = por %p125, %p126
    %s128 = smul.u32 %s17, 2
    %s129 = sadd.s32 %s128, %s18
    %s130 = smul.u32 %s29, 2
    %s131 = sadd.s32 %s130, %s25
    %s132 = ssub.s32 %s129, %s131
    %p133 = scmp.eq.s32.totalorder %s132, 0
    %s135 = sadd.s32 %s134, 1
    %s136 = scalar_select %p133, %s134, %s135
    %p139 = pneg %p133
    %p140 = scmp.eq.s32.totalorder %s10, 3
    %p141 = por %p139, %p140
    %p142 = scmp.ne.s32.totalorder %s134, %s137
    %p143 = scmp.eq.s32.totalorder %s10, 0
    %p144 = por %p142, %p143
    %p145 = scmp.ne.s32.totalorder %s134, %s137
    %p146 = scmp.eq.s32.totalorder %s15, 3
    %p147 = por %p145, %p146
    %p148 = scmp.ne.s32.totalorder %s137, %s138
    %p149 = scmp.eq.s32.totalorder %s15, 0
    %p150 = por %p148, %p149
    %p151 = scmp.ne.s32.totalorder %s137, %s138
    %p152 = scmp.eq.s32.totalorder %s16, 3
    %p153 = por %p151, %p152
    %p155 = scmp.ne.s32.totalorder %s138, %s154
    %p156 = scmp.eq.s32.totalorder %s16, 0
    %p157 = por %p155, %p156
    %p158 = scmp.le.s32.totalorder 1, %s10
    %p159 = scmp.lt.s32.totalorder %s10, 5
    %p160 = pnand %p158, %p159
    %p161 = pneg %p160
    // Predicated region
    $region9: #{ca3d_forward.4} parent=5 // pred_check
      _
    $region10: #{ca3d_forward.4} parent=5 // pred_check_branch
      %163 = sbr.rel (%p160) target = $region12
    $region11: #{ca3d_forward.4} parent=5 // pred_region
      %s164 = ssub.s32 %s10, 1
      // Predicated region
      $region13: #{ca3d_forward.4} parent=11 // pred_check
        %p165 = pneg %p99
      $region14: #{ca3d_forward.4} parent=11 // pred_check_branch
        %167 = sbr.rel (%p165) target = $region16
      $region15: #{ca3d_forward.4} parent=11 // pred_region
        _
      $region16: #{ca3d_forward.4} parent=11 // pred_fallthru
        _
      // Predicated region
      $region17: #{ca3d_forward.4} parent=11 // pred_check
        %p168 = pneg %p120
      $region18: #{ca3d_forward.4} parent=11 // pred_check_branch
        %170 = sbr.rel (%p168) target = $region20
      $region19: #{ca3d_forward.4} parent=11 // pred_region
        _
      $region20: #{ca3d_forward.4} parent=11 // pred_fallthru
        _
    $region12: #{ca3d_forward.4} parent=5 // pred_fallthru
      _
    %p171 = scmp.lt.s32.totalorder %s10, 4
    // Predicated region
    $region21: #{ca3d_forward.4} parent=5 // pred_check
      %p172 = pneg %p171
    $region22: #{ca3d_forward.4} parent=5 // pred_check_branch
      %174 = sbr.rel (%p172) target = $region24
    $region23: #{ca3d_forward.4} parent=5 // pred_region
      // Predicated region
      $region25: #{ca3d_forward.4} parent=23 // pred_check
        %p175 = pneg %p42
      $region26: #{ca3d_forward.4} parent=23 // pred_check_branch
        %177 = sbr.rel (%p175) target = $region28
      $region27: #{ca3d_forward.4} parent=23 // pred_region
        %p178 = scmp.lt.s32.totalorder %s17, 1
        %s179 = scalar_select %p178, %s17, 1
        %s180 = smul.addr %s179, 4
        %s181 = scalar_lea.vmem %s0, %s180
      $region28: #{ca3d_forward.4} parent=23 // pred_fallthru
        _
      // Predicated region
      $region29: #{ca3d_forward.4} parent=23 // pred_check
        %p182 = pneg %p72
      $region30: #{ca3d_forward.4} parent=23 // pred_check_branch
        %184 = sbr.rel (%p182) target = $region32
      $region31: #{ca3d_forward.4} parent=23 // pred_region
        %s185 = smul.u32 %s17, 2
        %s186 = sadd.s32 %s185, %s18
        %s187 = smul.u32 32, %s186
        %p188 = scmp.lt.s32.totalorder %s187, 127
        %s189 = scalar_select %p188, %s187, 127
        %s190 = smul.addr %s189, 4
        %s191 = smul.addr %s190, 4
        %s192 = scalar_lea.vmem %s1, %s191
        %s193 = smul.u32 %s17, 2
        %s194 = sadd.s32 %s193, %s18
        %s195 = smul.u32 32, %s194
      $region32: #{ca3d_forward.4} parent=23 // pred_fallthru
        _
    $region24: #{ca3d_forward.4} parent=5 // pred_fallthru
      _
    %p196 = scmp.le.s32.totalorder 1, %s10
    %p197 = scmp.lt.s32.totalorder %s10, 5
    %p198 = pnand %p196, %p197
    %p199 = pneg %p198
    // Predicated region
    $region33: #{ca3d_forward.4} parent=5 // pred_check
      _
    $region34: #{ca3d_forward.4} parent=5 // pred_check_branch
      %201 = sbr.rel (%p198) target = $region36
    $region35: #{ca3d_forward.4} parent=5 // pred_region
      %s202 = ssub.s32 %s10, 1
      %p203 = scmp.lt.s32.totalorder %s19, 1
      %s204 = scalar_select %p203, %s19, 1
      %s205 = smul.addr %s204, 4
      %s206 = scalar_lea.vmem %s0, %s205
      %p207 = pneg %p48
      %p208 = pneg %p45
      %s209 = smul.u32 %s19, 2
      %s210 = sadd.s32 %s209, %s20
      %s211 = smul.u32 32, %s210
      %p212 = scmp.lt.s32.totalorder %s211, 127
      %s213 = scalar_select %p212, %s211, 127
      %s214 = smul.addr %s213, 4
      %s215 = smul.addr %s214, 4
      %s216 = scalar_lea.vmem %s1, %s215
      %p217 = pneg %p78
      %p218 = pneg %p75
      %p219 = pneg %p99
      %p220 = pneg %p96
      %p221 = pneg %p120
      %p222 = pneg %p117
      %p223 = pneg %p150
      %p224 = pneg %p147
      %s225 = smul.u32 %s19, 2
      %s226 = sadd.s32 %s225, %s20
      %s227 = smul.u32 32, %s226
      %p228 = scmp.lt.s32.totalorder %s227, 127
      %s229 = scalar_select %p228, %s227, 127
      %s230 = smul.addr %s229, 8
      %s231 = scalar_lea.vmem %s4, %s230
      %p232 = scmp.lt.s32.totalorder %s19, 1
      %s233 = scalar_select %p232, %s19, 1
      %s234 = smul.addr %s233, 4
      %s235 = scalar_lea.vmem %s0, %s234
      %s236 = smul.u32 %s19, 2
      %s237 = sadd.s32 %s236, %s20
      %s238 = smul.u32 32, %s237
      %p239 = scmp.lt.s32.totalorder %s238, 127
      %s240 = scalar_select %p239, %s238, 127
      %s241 = smul.addr %s240, 4
      %s242 = smul.addr %s241, 4
      %s243 = scalar_lea.vmem %s1, %s242
      %s244 = smul.u32 %s19, 2
      %s245 = sadd.s32 %s244, %s20
      %s246 = smul.u32 32, %s245
      %s247 = smul.u32 %s19, 2
      %s248 = sadd.s32 %s247, %s20
      %s249 = smul.u32 32, %s248
      %p250 = scmp.lt.s32.totalorder %s249, 127
      %s251 = scalar_select %p250, %s249, 127
      %s252 = smul.addr %s251, 8
      %s253 = scalar_lea.vmem %s4, %s252
      %s254 = smul.u32 %s19, 2
      %s255 = sadd.s32 %s254, %s20
      %s256 = smul.u32 32, %s255
      %v258 = vld [vmem:[%s243] sm:$0xff]
      %v259 = vld [vmem:[%s243 + $0x8] sm:$0xff]
      %v260 = vld [vmem:[%s243 + $0x10] sm:$0xff]
      %v261 = vld [vmem:[%s243 + $0x18] sm:$0xff]
      %v262 = vld [vmem:[%s243 + $0x20] sm:$0xff]
      %v263 = vld [vmem:[%s243 + $0x28] sm:$0xff]
      %v264 = vld [vmem:[%s243 + $0x30] sm:$0xff]
      %v265 = vld [vmem:[%s243 + $0x38] sm:$0xff]
      %v266 = vld [vmem:[%s243 + $0x40] sm:$0xff]
      %v267 = vld [vmem:[%s243 + $0x48] sm:$0xff]
      %v268 = vld [vmem:[%s243 + $0x50] sm:$0xff]
      %v269 = vld [vmem:[%s243 + $0x58] sm:$0xff]
      %v270 = vld [vmem:[%s243 + $0x60] sm:$0xff]
      %v271 = vld [vmem:[%s243 + $0x68] sm:$0xff]
      %v272 = vld [vmem:[%s243 + $0x70] sm:$0xff]
      %v273 = vld [vmem:[%s243 + $0x78] sm:$0xff]
      %v274 = vld [vmem:[%s243 + $0x80] sm:$0xff]
      %v275 = vld [vmem:[%s243 + $0x88] sm:$0xff]
      %v276 = vld [vmem:[%s243 + $0x90] sm:$0xff]
      %v277 = vld [vmem:[%s243 + $0x98] sm:$0xff]
      %v278 = vld [vmem:[%s243 + $0xa0] sm:$0xff]
      %v279 = vld [vmem:[%s243 + $0xa8] sm:$0xff]
      %v280 = vld [vmem:[%s243 + $0xb0] sm:$0xff]
      %v281 = vld [vmem:[%s243 + $0xb8] sm:$0xff]
      %v282 = vld [vmem:[%s243 + $0xc0] sm:$0xff]
      %v283 = vld [vmem:[%s243 + $0xc8] sm:$0xff]
      %v284 = vld [vmem:[%s243 + $0xd0] sm:$0xff]
      %v285 = vld [vmem:[%s243 + $0xd8] sm:$0xff]
      %v286 = vld [vmem:[%s243 + $0xe0] sm:$0xff]
      %v287 = vld [vmem:[%s243 + $0xe8] sm:$0xff]
      %v288 = vld [vmem:[%s243 + $0xf0] sm:$0xff]
      %v289 = vld [vmem:[%s243 + $0xf8] sm:$0xff]
      %v290 = vld [vmem:[%s243 + $0x100] sm:$0xff]
      %v291 = vld [vmem:[%s243 + $0x108] sm:$0xff]
      %v292 = vld [vmem:[%s243 + $0x110] sm:$0xff]
      %v293 = vld [vmem:[%s243 + $0x118] sm:$0xff]
      %v294 = vld [vmem:[%s243 + $0x120] sm:$0xff]
      %v295 = vld [vmem:[%s243 + $0x128] sm:$0xff]
      %v296 = vld [vmem:[%s243 + $0x130] sm:$0xff]
      %v297 = vld [vmem:[%s243 + $0x138] sm:$0xff]
      %v298 = vld [vmem:[%s243 + $0x140] sm:$0xff]
      %v299 = vld [vmem:[%s243 + $0x148] sm:$0xff]
      %v300 = vld [vmem:[%s243 + $0x150] sm:$0xff]
      %v301 = vld [vmem:[%s243 + $0x158] sm:$0xff]
      %v302 = vld [vmem:[%s243 + $0x160] sm:$0xff]
      %v303 = vld [vmem:[%s243 + $0x168] sm:$0xff]
      %v304 = vld [vmem:[%s243 + $0x170] sm:$0xff]
      %v305 = vld [vmem:[%s243 + $0x178] sm:$0xff]
      %v306 = vld [vmem:[%s243 + $0x180] sm:$0xff]
      %v307 = vld [vmem:[%s243 + $0x188] sm:$0xff]
      %v308 = vld [vmem:[%s243 + $0x190] sm:$0xff]
      %v309 = vld [vmem:[%s243 + $0x198] sm:$0xff]
      %v310 = vld [vmem:[%s243 + $0x1a0] sm:$0xff]
      %v311 = vld [vmem:[%s243 + $0x1a8] sm:$0xff]
      %v312 = vld [vmem:[%s243 + $0x1b0] sm:$0xff]
      %v313 = vld [vmem:[%s243 + $0x1b8] sm:$0xff]
      %v314 = vld [vmem:[%s243 + $0x1c0] sm:$0xff]
      %v315 = vld [vmem:[%s243 + $0x1c8] sm:$0xff]
      %v316 = vld [vmem:[%s243 + $0x1d0] sm:$0xff]
      %v317 = vld [vmem:[%s243 + $0x1d8] sm:$0xff]
      %v318 = vld [vmem:[%s243 + $0x1e0] sm:$0xff]
      %v319 = vld [vmem:[%s243 + $0x1e8] sm:$0xff]
      %v320 = vld [vmem:[%s243 + $0x1f0] sm:$0xff]
      %v321 = vld [vmem:[%s243 + $0x1f8] sm:$0xff]
      %v322 = vld [vmem:[%s235] sm:$0xf]
      %v325 = vunpack.c.l.s4 1966171168
      %v326 = vunpack.c.0.s8 %v325
      %v327 = vlaneseq
      %v328 = vshrl.u32 %v327, 7
      %v329 = vsub.s32 %v326, %v328
      %v330 = vrot.slane %v322, %v329
      %v331 = vcombine.high %v330, %v330
      %v333 = vunpack.c.l.s4 1966171168
      %v334 = vunpack.c.0.s8 %v333
      %v335 = vlaneseq
      %v336 = vshrl.u32 %v335, 7
      %v337 = vsub.s32 %v334, %v336
      %v338 = vrot.slane %v330, %v337
      %v340 = vunpack.c.l.s4 1966171168
      %v341 = vunpack.c.0.s8 %v340
      %v342 = vlaneseq
      %v343 = vshrl.u32 %v342, 7
      %v344 = vsub.s32 %v341, %v343
      %v345 = vrot.slane %v331, %v344
      %v346 = vcombine.high %v338, %v338
      %v347 = vcombine.high %v345, %v345
      %v349 = vpack.i.b16 %v338, %v338
      %v351 = vlaneseq
      %v352 = vshrl.u32 %v351, 7
      %v353 = vsub.s32 0, %v352
      %v354 = vrot.slane %v349, %v353
      %v356 = vpack.i.b16 %v345, %v345
      %v358 = vlaneseq
      %v359 = vshrl.u32 %v358, 7
      %v360 = vsub.s32 0, %v359
      %v361 = vrot.slane %v356, %v360
      %v363 = vpack.i.b16 %v346, %v346
      %v365 = vlaneseq
      %v366 = vshrl.u32 %v365, 7
      %v367 = vsub.s32 0, %v366
      %v368 = vrot.slane %v363, %v367
      %v370 = vpack.i.b16 %v347, %v347
      %v372 = vlaneseq
      %v373 = vshrl.u32 %v372, 7
      %v374 = vsub.s32 0, %v373
      %v375 = vrot.slane %v370, %v374
      %v380 = vunpack.c.l.b16 %v354
      %v381 = vunpack.c.l.b16 %v361
      %v382 = vunpack.c.l.b16 %v368
      %v383 = vunpack.c.l.b16 %v375
      %v384 = vpack.c.b16 %v381, %v380
      %v385 = vpack.c.b16 %v383, %v382
      %v388 = vmul.bf16 %v258, %v384
      %v389 = vmul.bf16 %v259, %v385
      %v390 = vmul.bf16 %v260, %v384
      %v391 = vmul.bf16 %v261, %v385
      %v392 = vmul.bf16 %v262, %v384
      %v393 = vmul.bf16 %v263, %v385
      %v394 = vmul.bf16 %v264, %v384
      %v395 = vmul.bf16 %v265, %v385
      %v396 = vmul.bf16 %v266, %v384
      %v397 = vmul.bf16 %v267, %v385
      %v398 = vmul.bf16 %v268, %v384
      %v399 = vmul.bf16 %v269, %v385
      %v400 = vmul.bf16 %v270, %v384
      %v401 = vmul.bf16 %v271, %v385
      %v402 = vmul.bf16 %v272, %v384
      %v403 = vmul.bf16 %v273, %v385
      %v404 = vmul.bf16 %v274, %v384
      %v405 = vmul.bf16 %v275, %v385
      %v406 = vmul.bf16 %v276, %v384
      %v407 = vmul.bf16 %v277, %v385
      %v408 = vmul.bf16 %v278, %v384
      %v409 = vmul.bf16 %v279, %v385
      %v410 = vmul.bf16 %v280, %v384
      %v411 = vmul.bf16 %v281, %v385
      %v412 = vmul.bf16 %v282, %v384
      %v413 = vmul.bf16 %v283, %v385
      %v414 = vmul.bf16 %v284, %v384
      %v415 = vmul.bf16 %v285, %v385
      %v416 = vmul.bf16 %v286, %v384
      %v417 = vmul.bf16 %v287, %v385
      %v418 = vmul.bf16 %v288, %v384
      %v419 = vmul.bf16 %v289, %v385
      %v420 = vmul.bf16 %v290, %v384
      %v421 = vmul.bf16 %v291, %v385
      %v422 = vmul.bf16 %v292, %v384
      %v423 = vmul.bf16 %v293, %v385
      %v424 = vmul.bf16 %v294, %v384
      %v425 = vmul.bf16 %v295, %v385
      %v426 = vmul.bf16 %v296, %v384
      %v427 = vmul.bf16 %v297, %v385
      %v428 = vmul.bf16 %v298, %v384
      %v429 = vmul.bf16 %v299, %v385
      %v430 = vmul.bf16 %v300, %v384
      %v431 = vmul.bf16 %v301, %v385
      %v432 = vmul.bf16 %v302, %v384
      %v433 = vmul.bf16 %v303, %v385
      %v434 = vmul.bf16 %v304, %v384
      %v435 = vmul.bf16 %v305, %v385
      %v436 = vmul.bf16 %v306, %v384
      %v437 = vmul.bf16 %v307, %v385
      %v438 = vmul.bf16 %v308, %v384
      %v439 = vmul.bf16 %v309, %v385
      %v440 = vmul.bf16 %v310, %v384
      %v441 = vmul.bf16 %v311, %v385
      %v442 = vmul.bf16 %v312, %v384
      %v443 = vmul.bf16 %v313, %v385
      %v444 = vmul.bf16 %v314, %v384
      %v445 = vmul.bf16 %v315, %v385
      %v446 = vmul.bf16 %v316, %v384
      %v447 = vmul.bf16 %v317, %v385
      %v448 = vmul.bf16 %v318, %v384
      %v449 = vmul.bf16 %v319, %v385
      %v450 = vmul.bf16 %v320, %v384
      %v451 = vmul.bf16 %v321, %v385
      %v452 = vld [vmem:[%s2] sm:$0xf]
      %v453 = vld [vmem:[%s2 + $0x4] sm:$0xf]
      %v454 = vld [vmem:[%s2 + $0x8] sm:$0xf]
      %v455 = vld [vmem:[%s2 + $0xc] sm:$0xf]
      %v456 = vld [vmem:[%s2 + $0x10] sm:$0xf]
      %v457 = vld [vmem:[%s2 + $0x14] sm:$0xf]
      %v458 = vld [vmem:[%s2 + $0x18] sm:$0xf]
      %v459 = vld [vmem:[%s2 + $0x1c] sm:$0xf]
      %v460 = vld [vmem:[%s2 + $0x20] sm:$0xf]
      %v461 = vld [vmem:[%s2 + $0x24] sm:$0xf]
      %v462 = vld [vmem:[%s2 + $0x28] sm:$0xf]
      %v463 = vld [vmem:[%s2 + $0x2c] sm:$0xf]
      %v464 = vld [vmem:[%s2 + $0x30] sm:$0xf]
      %v465 = vld [vmem:[%s2 + $0x34] sm:$0xf]
      %v466 = vld [vmem:[%s2 + $0x38] sm:$0xf]
      %v467 = vld [vmem:[%s2 + $0x3c] sm:$0xf]
      %v468 = vld [vmem:[%s2 + $0x40] sm:$0xf]
      %v469 = vld [vmem:[%s2 + $0x44] sm:$0xf]
      %v470 = vld [vmem:[%s2 + $0x48] sm:$0xf]
      %v471 = vld [vmem:[%s2 + $0x4c] sm:$0xf]
      %v472 = vld [vmem:[%s2 + $0x50] sm:$0xf]
      %v473 = vld [vmem:[%s2 + $0x54] sm:$0xf]
      %v474 = vld [vmem:[%s2 + $0x58] sm:$0xf]
      %v475 = vld [vmem:[%s2 + $0x5c] sm:$0xf]
      %v476 = vld [vmem:[%s2 + $0x60] sm:$0xf]
      %v477 = vld [vmem:[%s2 + $0x64] sm:$0xf]
      %v478 = vld [vmem:[%s2 + $0x68] sm:$0xf]
      %v479 = vld [vmem:[%s2 + $0x6c] sm:$0xf]
      %v480 = vld [vmem:[%s2 + $0x70] sm:$0xf]
      %v481 = vld [vmem:[%s2 + $0x74] sm:$0xf]
      %v482 = vld [vmem:[%s2 + $0x78] sm:$0xf]
      %v483 = vld [vmem:[%s2 + $0x7c] sm:$0xf]
      %v484 = vld [vmem:[%s2 + $0x80] sm:$0xf]
      %v485 = vld [vmem:[%s2 + $0x84] sm:$0xf]
      %v486 = vld [vmem:[%s2 + $0x88] sm:$0xf]
      %v487 = vld [vmem:[%s2 + $0x8c] sm:$0xf]
      %v488 = vld [vmem:[%s2 + $0x90] sm:$0xf]
      %v489 = vld [vmem:[%s2 + $0x94] sm:$0xf]
      %v490 = vld [vmem:[%s2 + $0x98] sm:$0xf]
      %v491 = vld [vmem:[%s2 + $0x9c] sm:$0xf]
      %v492 = vld [vmem:[%s2 + $0xa0] sm:$0xf]
      %v493 = vld [vmem:[%s2 + $0xa4] sm:$0xf]
      %v494 = vld [vmem:[%s2 + $0xa8] sm:$0xf]
      %v495 = vld [vmem:[%s2 + $0xac] sm:$0xf]
      %v496 = vld [vmem:[%s2 + $0xb0] sm:$0xf]
      %v497 = vld [vmem:[%s2 + $0xb4] sm:$0xf]
      %v498 = vld [vmem:[%s2 + $0xb8] sm:$0xf]
      %v499 = vld [vmem:[%s2 + $0xbc] sm:$0xf]
      %v500 = vld [vmem:[%s2 + $0xc0] sm:$0xf]
      %v501 = vld [vmem:[%s2 + $0xc4] sm:$0xf]
      %v502 = vld [vmem:[%s2 + $0xc8] sm:$0xf]
      %v503 = vld [vmem:[%s2 + $0xcc] sm:$0xf]
      %v504 = vld [vmem:[%s2 + $0xd0] sm:$0xf]
      %v505 = vld [vmem:[%s2 + $0xd4] sm:$0xf]
      %v506 = vld [vmem:[%s3] sm:$0x1]
      %v508 = vlaneseq
      %v509 = vshrl.u32 %v508, 7
      %v510 = vsub.s32 0, %v509
      %v511 = vrot.slane %v506, %v510
      %v577 = vunpack.c.l.b16 %v388
      %v578 = vunpack.c.h.b16 %v388
      %v579 = vunpack.c.l.b16 %v389
      %v580 = vunpack.c.h.b16 %v389
      %v581 = vunpack.c.l.b16 %v390
      %v582 = vunpack.c.h.b16 %v390
      %v583 = vunpack.c.l.b16 %v391
      %v584 = vunpack.c.h.b16 %v391
      %v585 = vunpack.c.l.b16 %v392
      %v586 = vunpack.c.h.b16 %v392
      %v587 = vunpack.c.l.b16 %v393
      %v588 = vunpack.c.h.b16 %v393
      %v589 = vunpack.c.l.b16 %v394
      %v590 = vunpack.c.h.b16 %v394
      %v591 = vunpack.c.l.b16 %v395
      %v592 = vunpack.c.h.b16 %v395
      %v593 = vunpack.c.l.b16 %v396
      %v594 = vunpack.c.h.b16 %v396
      %v595 = vunpack.c.l.b16 %v397
      %v596 = vunpack.c.h.b16 %v397
      %v597 = vunpack.c.l.b16 %v398
      %v598 = vunpack.c.h.b16 %v398
      %v599 = vunpack.c.l.b16 %v399
      %v600 = vunpack.c.h.b16 %v399
      %v601 = vunpack.c.l.b16 %v400
      %v602 = vunpack.c.h.b16 %v400
      %v603 = vunpack.c.l.b16 %v401
      %v604 = vunpack.c.h.b16 %v401
      %v605 = vunpack.c.l.b16 %v402
      %v606 = vunpack.c.h.b16 %v402
      %v607 = vunpack.c.l.b16 %v403
      %v608 = vunpack.c.h.b16 %v403
      %v609 = vunpack.c.l.b16 %v404
      %v610 = vunpack.c.h.b16 %v404
      %v611 = vunpack.c.l.b16 %v405
      %v612 = vunpack.c.h.b16 %v405
      %v613 = vunpack.c.l.b16 %v406
      %v614 = vunpack.c.h.b16 %v406
      %v615 = vunpack.c.l.b16 %v407
      %v616 = vunpack.c.h.b16 %v407
      %v617 = vunpack.c.l.b16 %v408
      %v618 = vunpack.c.h.b16 %v408
      %v619 = vunpack.c.l.b16 %v409
      %v620 = vunpack.c.h.b16 %v409
      %v621 = vunpack.c.l.b16 %v410
      %v622 = vunpack.c.h.b16 %v410
      %v623 = vunpack.c.l.b16 %v411
      %v624 = vunpack.c.h.b16 %v411
      %v625 = vunpack.c.l.b16 %v412
      %v626 = vunpack.c.h.b16 %v412
      %v627 = vunpack.c.l.b16 %v413
      %v628 = vunpack.c.h.b16 %v413
      %v629 = vunpack.c.l.b16 %v414
      %v630 = vunpack.c.h.b16 %v414
      %v631 = vunpack.c.l.b16 %v415
      %v632 = vunpack.c.h.b16 %v415
      %v633 = vunpack.c.l.b16 %v416
      %v634 = vunpack.c.h.b16 %v416
      %v635 = vunpack.c.l.b16 %v417
      %v636 = vunpack.c.h.b16 %v417
      %v637 = vunpack.c.l.b16 %v418
      %v638 = vunpack.c.h.b16 %v418
      %v639 = vunpack.c.l.b16 %v419
      %v640 = vunpack.c.h.b16 %v419
      %v641 = vunpack.c.l.b16 %v420
      %v642 = vunpack.c.h.b16 %v420
      %v643 = vunpack.c.l.b16 %v421
      %v644 = vunpack.c.h.b16 %v421
      %v645 = vunpack.c.l.b16 %v422
      %v646 = vunpack.c.h.b16 %v422
      %v647 = vunpack.c.l.b16 %v423
      %v648 = vunpack.c.h.b16 %v423
      %v649 = vunpack.c.l.b16 %v424
      %v650 = vunpack.c.h.b16 %v424
      %v651 = vunpack.c.l.b16 %v425
      %v652 = vunpack.c.h.b16 %v425
      %v653 = vunpack.c.l.b16 %v426
      %v654 = vunpack.c.h.b16 %v426
      %v655 = vunpack.c.l.b16 %v427
      %v656 = vunpack.c.h.b16 %v427
      %v657 = vunpack.c.l.b16 %v428
      %v658 = vunpack.c.h.b16 %v428
      %v659 = vunpack.c.l.b16 %v429
      %v660 = vunpack.c.h.b16 %v429
      %v661 = vunpack.c.l.b16 %v430
      %v662 = vunpack.c.h.b16 %v430
      %v663 = vunpack.c.l.b16 %v431
      %v664 = vunpack.c.h.b16 %v431
      %v665 = vunpack.c.l.b16 %v432
      %v666 = vunpack.c.h.b16 %v432
      %v667 = vunpack.c.l.b16 %v433
      %v668 = vunpack.c.h.b16 %v433
      %v669 = vunpack.c.l.b16 %v434
      %v670 = vunpack.c.h.b16 %v434
      %v671 = vunpack.c.l.b16 %v435
      %v672 = vunpack.c.h.b16 %v435
      %v673 = vunpack.c.l.b16 %v436
      %v674 = vunpack.c.h.b16 %v436
      %v675 = vunpack.c.l.b16 %v437
      %v676 = vunpack.c.h.b16 %v437
      %v677 = vunpack.c.l.b16 %v438
      %v678 = vunpack.c.h.b16 %v438
      %v679 = vunpack.c.l.b16 %v439
      %v680 = vunpack.c.h.b16 %v439
      %v681 = vunpack.c.l.b16 %v440
      %v682 = vunpack.c.h.b16 %v440
      %v683 = vunpack.c.l.b16 %v441
      %v684 = vunpack.c.h.b16 %v441
      %v685 = vunpack.c.l.b16 %v442
      %v686 = vunpack.c.h.b16 %v442
      %v687 = vunpack.c.l.b16 %v443
      %v688 = vunpack.c.h.b16 %v443
      %v689 = vunpack.c.l.b16 %v444
      %v690 = vunpack.c.h.b16 %v444
      %v691 = vunpack.c.l.b16 %v445
      %v692 = vunpack.c.h.b16 %v445
      %v693 = vunpack.c.l.b16 %v446
      %v694 = vunpack.c.h.b16 %v446
      %v695 = vunpack.c.l.b16 %v447
      %v696 = vunpack.c.h.b16 %v447
      %v697 = vunpack.c.l.b16 %v448
      %v698 = vunpack.c.h.b16 %v448
      %v699 = vunpack.c.l.b16 %v449
      %v700 = vunpack.c.h.b16 %v449
      %v701 = vunpack.c.l.b16 %v450
      %v702 = vunpack.c.h.b16 %v450
      %v703 = vunpack.c.l.b16 %v451
      %v704 = vunpack.c.h.b16 %v451
      %v705 = vpack.c.b16 %v581, %v577
      %v706 = vpack.c.b16 %v582, %v578
      %v707 = vpack.c.b16 %v583, %v579
      %v708 = vpack.c.b16 %v584, %v580
      %v709 = vpack.c.b16 %v589, %v585
      %v710 = vpack.c.b16 %v590, %v586
      %v711 = vpack.c.b16 %v591, %v587
      %v712 = vpack.c.b16 %v592, %v588
      %v713 = vpack.c.b16 %v597, %v593
      %v714 = vpack.c.b16 %v598, %v594
      %v715 = vpack.c.b16 %v599, %v595
      %v716 = vpack.c.b16 %v600, %v596
      %v717 = vpack.c.b16 %v605, %v601
      %v718 = vpack.c.b16 %v606, %v602
      %v719 = vpack.c.b16 %v607, %v603
      %v720 = vpack.c.b16 %v608, %v604
      %v721 = vpack.c.b16 %v613, %v609
      %v722 = vpack.c.b16 %v614, %v610
      %v723 = vpack.c.b16 %v615, %v611
      %v724 = vpack.c.b16 %v616, %v612
      %v725 = vpack.c.b16 %v621, %v617
      %v726 = vpack.c.b16 %v622, %v618
      %v727 = vpack.c.b16 %v623, %v619
      %v728 = vpack.c.b16 %v624, %v620
      %v729 = vpack.c.b16 %v629, %v625
      %v730 = vpack.c.b16 %v630, %v626
      %v731 = vpack.c.b16 %v631, %v627
      %v732 = vpack.c.b16 %v632, %v628
      %v733 = vpack.c.b16 %v637, %v633
      %v734 = vpack.c.b16 %v638, %v634
      %v735 = vpack.c.b16 %v639, %v635
      %v736 = vpack.c.b16 %v640, %v636
      %v737 = vpack.c.b16 %v645, %v641
      %v738 = vpack.c.b16 %v646, %v642
      %v739 = vpack.c.b16 %v647, %v643
      %v740 = vpack.c.b16 %v648, %v644
      %v741 = vpack.c.b16 %v653, %v649
      %v742 = vpack.c.b16 %v654, %v650
      %v743 = vpack.c.b16 %v655, %v651
      %v744 = vpack.c.b16 %v656, %v652
      %v745 = vpack.c.b16 %v661, %v657
      %v746 = vpack.c.b16 %v662, %v658
      %v747 = vpack.c.b16 %v663, %v659
      %v748 = vpack.c.b16 %v664, %v660
      %v749 = vpack.c.b16 %v669, %v665
      %v750 = vpack.c.b16 %v670, %v666
      %v751 = vpack.c.b16 %v671, %v667
      %v752 = vpack.c.b16 %v672, %v668
      %v753 = vpack.c.b16 %v677, %v673
      %v754 = vpack.c.b16 %v678, %v674
      %v755 = vpack.c.b16 %v679, %v675
      %v756 = vpack.c.b16 %v680, %v676
      %v757 = vpack.c.b16 %v685, %v681
      %v758 = vpack.c.b16 %v686, %v682
      %v759 = vpack.c.b16 %v687, %v683
      %v760 = vpack.c.b16 %v688, %v684
      %v761 = vpack.c.b16 %v693, %v689
      %v762 = vpack.c.b16 %v694, %v690
      %v763 = vpack.c.b16 %v695, %v691
      %v764 = vpack.c.b16 %v696, %v692
      %v765 = vpack.c.b16 %v701, %v697
      %v766 = vpack.c.b16 %v702, %v698
      %v767 = vpack.c.b16 %v703, %v699
      %v768 = vpack.c.b16 %v704, %v700
      %v871 = vunpack.c.l.b16 %v452
      %v872 = vunpack.c.l.b16 %v453
      %v873 = vunpack.c.l.b16 %v454
      %v874 = vunpack.c.l.b16 %v455
      %v875 = vunpack.c.l.b16 %v456
      %v876 = vunpack.c.l.b16 %v457
      %v877 = vunpack.c.l.b16 %v458
      %v878 = vunpack.c.l.b16 %v459
      %v879 = vunpack.c.l.b16 %v460
      %v880 = vunpack.c.l.b16 %v461
      %v881 = vunpack.c.l.b16 %v462
      %v882 = vunpack.c.l.b16 %v463
      %v883 = vunpack.c.l.b16 %v464
      %v884 = vunpack.c.l.b16 %v465
      %v885 = vunpack.c.l.b16 %v466
      %v886 = vunpack.c.l.b16 %v467
      %v887 = vunpack.c.l.b16 %v468
      %v888 = vunpack.c.l.b16 %v469
      %v889 = vunpack.c.l.b16 %v470
      %v890 = vunpack.c.l.b16 %v471
      %v891 = vunpack.c.l.b16 %v472
      %v892 = vunpack.c.l.b16 %v473
      %v893 = vunpack.c.l.b16 %v474
      %v894 = vunpack.c.l.b16 %v475
      %v895 = vunpack.c.l.b16 %v476
      %v896 = vunpack.c.l.b16 %v477
      %v897 = vunpack.c.l.b16 %v478
      %v898 = vunpack.c.l.b16 %v479
      %v899 = vunpack.c.l.b16 %v480
      %v900 = vunpack.c.l.b16 %v481
      %v901 = vunpack.c.l.b16 %v482
      %v902 = vunpack.c.l.b16 %v483
      %v903 = vunpack.c.l.b16 %v484
      %v904 = vunpack.c.l.b16 %v485
      %v905 = vunpack.c.l.b16 %v486
      %v906 = vunpack.c.l.b16 %v487
      %v907 = vunpack.c.l.b16 %v488
      %v908 = vunpack.c.l.b16 %v489
      %v909 = vunpack.c.l.b16 %v490
      %v910 = vunpack.c.l.b16 %v491
      %v911 = vunpack.c.l.b16 %v492
      %v912 = vunpack.c.l.b16 %v493
      %v913 = vunpack.c.l.b16 %v494
      %v914 = vunpack.c.l.b16 %v495
      %v915 = vunpack.c.l.b16 %v496
      %v916 = vunpack.c.l.b16 %v497
      %v917 = vunpack.c.l.b16 %v498
      %v918 = vunpack.c.l.b16 %v499
      %v919 = vunpack.c.l.b16 %v500
      %v920 = vunpack.c.l.b16 %v501
      %v921 = vunpack.c.l.b16 %v502
      %v922 = vunpack.c.l.b16 %v503
      %v923 = vunpack.c.l.b16 %v504
      %v924 = vunpack.c.l.b16 %v505
      %v925 = vpack.c.b16 %v872, %v871
      %v926 = vpack.c.b16 %v874, %v873
      %v927 = vpack.c.b16 %v876, %v875
      %v928 = vpack.c.b16 %v878, %v877
      %v929 = vpack.c.b16 %v880, %v879
      %v930 = vpack.c.b16 %v882, %v881
      %v931 = vpack.c.b16 %v884, %v883
      %v932 = vpack.c.b16 %v886, %v885
      %v933 = vpack.c.b16 %v888, %v887
      %v934 = vpack.c.b16 %v890, %v889
      %v935 = vpack.c.b16 %v892, %v891
      %v936 = vpack.c.b16 %v894, %v893
      %v937 = vpack.c.b16 %v896, %v895
      %v938 = vpack.c.b16 %v898, %v897
      %v939 = vpack.c.b16 %v900, %v899
      %v940 = vpack.c.b16 %v902, %v901
      %v941 = vpack.c.b16 %v904, %v903
      %v942 = vpack.c.b16 %v906, %v905
      %v943 = vpack.c.b16 %v908, %v907
      %v944 = vpack.c.b16 %v910, %v909
      %v945 = vpack.c.b16 %v912, %v911
      %v946 = vpack.c.b16 %v914, %v913
      %v947 = vpack.c.b16 %v916, %v915
      %v948 = vpack.c.b16 %v918, %v917
      %v949 = vpack.c.b16 %v920, %v919
      %v950 = vpack.c.b16 %v922, %v921
      %v951 = vpack.c.b16 %v924, %v923
      %vm979 = vcmask 392192
      %v981 = vsel %vm979, %v708, 0
      %v984 = vsel %vm979, %v712, 0
      %v987 = vsel %vm979, %v716, 0
      %v990 = vsel %vm979, %v720, 0
      %v993 = vsel %vm979, %v724, 0
      %v996 = vsel %vm979, %v728, 0
      %v999 = vsel %vm979, %v732, 0
      %v1002 = vsel %vm979, %v736, 0
      %v1005 = vsel %vm979, %v740, 0
      %v1008 = vsel %vm979, %v744, 0
      %v1011 = vsel %vm979, %v748, 0
      %v1014 = vsel %vm979, %v752, 0
      %v1017 = vsel %vm979, %v756, 0
      %v1020 = vsel %vm979, %v760, 0
      %v1023 = vsel %vm979, %v764, 0
      %v1026 = vsel %vm979, %v768, 0
      %1028 = vmatprep.subr.bf16.mxu0 0
      %1029 = vmatpush1.bf16.msra.mxu0 %v932
      %1030 = vmatprep.subr.bf16.mxu0 0
      %1031 = vmatpush1.bf16.msra.mxu0 %v931
      %1032 = vmatprep.subr.bf16.mxu0 0
      %1033 = vmatpush1.bf16.msra.mxu0 %v930
      %1034 = vmatprep.subr.bf16.mxu0 0
      %1035 = vmatpush1.bf16.msra.mxu0 %v929
      %1036 = vmatprep.subr.bf16.mxu0 0
      %1037 = vmatpush1.bf16.msra.mxu0 %v928
      %1038 = vmatprep.subr.bf16.mxu0 0
      %1039 = vmatpush1.bf16.msra.mxu0 %v927
      %1040 = vmatprep.subr.bf16.mxu0 0
      %1041 = vmatpush1.bf16.msra.mxu0 %v926
      %1042 = vmatprep.subr.bf16.mxu0 0
      %1043 = vmatpush1.bf16.msra.mxu0 %v925
      %1044 = vmatprep.subr.bf16.mxu0 0
      %1045 = vmatpush2.bf16.msra.mxu0 %v940
      %1046 = vmatprep.subr.bf16.mxu0 0
      %1047 = vmatpush2.bf16.msra.mxu0 %v939
      %1048 = vmatprep.subr.bf16.mxu0 0
      %1049 = vmatpush2.bf16.msra.mxu0 %v938
      %1050 = vmatprep.subr.bf16.mxu0 0
      %1051 = vmatpush2.bf16.msra.mxu0 %v937
      %1052 = vmatprep.subr.bf16.mxu0 0
      %1053 = vmatpush2.bf16.msra.mxu0 %v936
      %1054 = vmatprep.subr.bf16.mxu0 0
      %1055 = vmatpush2.bf16.msra.mxu0 %v935
      %1056 = vmatprep.subr.bf16.mxu0 0
      %1057 = vmatpush2.bf16.msra.mxu0 %v934
      %1058 = vmatprep.subr.bf16.mxu0 0
      %1059 = vmatpush2.bf16.msra.mxu0 %v933
      %1060 = vmatprep.mubr.bf16.mxu0 %v706
      %1061 = vmatmul.mubr.bf16.gmra.mxu0 %v705
      %v1062 = vpop.f32.mrf.mxu0
      %v1063 = vadd.f32 %v511, %v1062
      %v1064 = vpop.f32.mrf.mxu0
      %v1065 = vpop.f32.mrf.mxu0
      %v1066 = vadd.f32 %v511, %v1065
      %v1067 = vpop.f32.mrf.mxu0
      %1068 = vmatprep.mubr.bf16.mxu0 %v710
      %1069 = vmatmul.mubr.bf16.gmra.mxu0 %v709
      %v1070 = vpop.f32.mrf.mxu0
      %v1071 = vadd.f32 %v511, %v1070
      %v1072 = vpop.f32.mrf.mxu0
      %v1073 = vpop.f32.mrf.mxu0
      %v1074 = vadd.f32 %v511, %v1073
      %v1075 = vpop.f32.mrf.mxu0
      %1076 = vmatprep.mubr.bf16.mxu0 %v714
      %1077 = vmatmul.mubr.bf16.gmra.mxu0 %v713
      %v1078 = vpop.f32.mrf.mxu0
      %v1079 = vadd.f32 %v511, %v1078
      %v1080 = vpop.f32.mrf.mxu0
      %v1081 = vpop.f32.mrf.mxu0
      %v1082 = vadd.f32 %v511, %v1081
      %v1083 = vpop.f32.mrf.mxu0
      %1084 = vmatprep.mubr.bf16.mxu0 %v718
      %1085 = vmatmul.mubr.bf16.gmra.mxu0 %v717
      %v1086 = vpop.f32.mrf.mxu0
      %v1087 = vadd.f32 %v511, %v1086
      %v1088 = vpop.f32.mrf.mxu0
      %v1089 = vpop.f32.mrf.mxu0
      %v1090 = vadd.f32 %v511, %v1089
      %v1091 = vpop.f32.mrf.mxu0
      %1092 = vmatprep.mubr.bf16.mxu0 %v722
      %1093 = vmatmul.mubr.bf16.gmra.mxu0 %v721
      %v1094 = vpop.f32.mrf.mxu0
      %v1095 = vadd.f32 %v511, %v1094
      %v1096 = vpop.f32.mrf.mxu0
      %v1097 = vpop.f32.mrf.mxu0
      %v1098 = vadd.f32 %v511, %v1097
      %v1099 = vpop.f32.mrf.mxu0
      %1100 = vmatprep.mubr.bf16.mxu0 %v726
      %1101 = vmatmul.mubr.bf16.gmra.mxu0 %v725
      %v1102 = vpop.f32.mrf.mxu0
      %v1103 = vadd.f32 %v511, %v1102
      %v1104 = vpop.f32.mrf.mxu0
      %v1105 = vpop.f32.mrf.mxu0
      %v1106 = vadd.f32 %v511, %v1105
      %v1107 = vpop.f32.mrf.mxu0
      %1108 = vmatprep.mubr.bf16.mxu0 %v730
      %1109 = vmatmul.mubr.bf16.gmra.mxu0 %v729
      %v1110 = vpop.f32.mrf.mxu0
      %v1111 = vadd.f32 %v511, %v1110
      %v1112 = vpop.f32.mrf.mxu0
      %v1113 = vpop.f32.mrf.mxu0
      %v1114 = vadd.f32 %v511, %v1113
      %v1115 = vpop.f32.mrf.mxu0
      %1116 = vmatprep.mubr.bf16.mxu0 %v734
      %1117 = vmatmul.mubr.bf16.gmra.mxu0 %v733
      %v1118 = vpop.f32.mrf.mxu0
      %v1119 = vadd.f32 %v511, %v1118
      %v1120 = vpop.f32.mrf.mxu0
      %v1121 = vpop.f32.mrf.mxu0
      %v1122 = vadd.f32 %v511, %v1121
      %v1123 = vpop.f32.mrf.mxu0
      %1124 = vmatprep.mubr.bf16.mxu0 %v738
      %1125 = vmatmul.mubr.bf16.gmra.mxu0 %v737
      %v1126 = vpop.f32.mrf.mxu0
      %v1127 = vadd.f32 %v511, %v1126
      %v1128 = vpop.f32.mrf.mxu0
      %v1129 = vpop.f32.mrf.mxu0
      %v1130 = vadd.f32 %v511, %v1129
      %v1131 = vpop.f32.mrf.mxu0
      %1132 = vmatprep.mubr.bf16.mxu0 %v742
      %1133 = vmatmul.mubr.bf16.gmra.mxu0 %v741
      %v1134 = vpop.f32.mrf.mxu0
      %v1135 = vadd.f32 %v511, %v1134
      %v1136 = vpop.f32.mrf.mxu0
      %v1137 = vpop.f32.mrf.mxu0
      %v1138 = vadd.f32 %v511, %v1137
      %v1139 = vpop.f32.mrf.mxu0
      %1140 = vmatprep.mubr.bf16.mxu0 %v746
      %1141 = vmatmul.mubr.bf16.gmra.mxu0 %v745
      %v1142 = vpop.f32.mrf.mxu0
      %v1143 = vadd.f32 %v511, %v1142
      %v1144 = vpop.f32.mrf.mxu0
      %v1145 = vpop.f32.mrf.mxu0
      %v1146 = vadd.f32 %v511, %v1145
      %v1147 = vpop.f32.mrf.mxu0
      %1148 = vmatprep.mubr.bf16.mxu0 %v750
      %1149 = vmatmul.mubr.bf16.gmra.mxu0 %v749
      %v1150 = vpop.f32.mrf.mxu0
      %v1151 = vadd.f32 %v511, %v1150
      %v1152 = vpop.f32.mrf.mxu0
      %v1153 = vpop.f32.mrf.mxu0
      %v1154 = vadd.f32 %v511, %v1153
      %v1155 = vpop.f32.mrf.mxu0
      %1156 = vmatprep.mubr.bf16.mxu0 %v754
      %1157 = vmatmul.mubr.bf16.gmra.mxu0 %v753
      %v1158 = vpop.f32.mrf.mxu0
      %v1159 = vadd.f32 %v511, %v1158
      %v1160 = vpop.f32.mrf.mxu0
      %v1161 = vpop.f32.mrf.mxu0
      %v1162 = vadd.f32 %v511, %v1161
      %v1163 = vpop.f32.mrf.mxu0
      %1164 = vmatprep.mubr.bf16.mxu0 %v758
      %1165 = vmatmul.mubr.bf16.gmra.mxu0 %v757
      %v1166 = vpop.f32.mrf.mxu0
      %v1167 = vadd.f32 %v511, %v1166
      %v1168 = vpop.f32.mrf.mxu0
      %v1169 = vpop.f32.mrf.mxu0
      %v1170 = vadd.f32 %v511, %v1169
      %v1171 = vpop.f32.mrf.mxu0
      %1172 = vmatprep.mubr.bf16.mxu0 %v762
      %1173 = vmatmul.mubr.bf16.gmra.mxu0 %v761
      %v1174 = vpop.f32.mrf.mxu0
      %v1175 = vadd.f32 %v511, %v1174
      %v1176 = vpop.f32.mrf.mxu0
      %v1177 = vpop.f32.mrf.mxu0
      %v1178 = vadd.f32 %v511, %v1177
      %v1179 = vpop.f32.mrf.mxu0
      %1180 = vmatprep.mubr.bf16.mxu0 %v766
      %1181 = vmatmul.mubr.bf16.gmra.mxu0 %v765
      %v1182 = vpop.f32.mrf.mxu0
      %v1183 = vadd.f32 %v511, %v1182
      %v1184 = vpop.f32.mrf.mxu0
      %v1185 = vpop.f32.mrf.mxu0
      %v1186 = vadd.f32 %v511, %v1185
      %v1187 = vpop.f32.mrf.mxu0
      %1188 = vdwg.mxu0
      %1189 = vmatprep.subr.bf16.mxu0 0
      %1190 = vmatpush1.bf16.msra.mxu0 %v948
      %1191 = vmatprep.subr.bf16.mxu0 0
      %1192 = vmatpush1.bf16.msra.mxu0 %v947
      %1193 = vmatprep.subr.bf16.mxu0 0
      %1194 = vmatpush1.bf16.msra.mxu0 %v946
      %1195 = vmatprep.subr.bf16.mxu0 0
      %1196 = vmatpush1.bf16.msra.mxu0 %v945
      %1197 = vmatprep.subr.bf16.mxu0 0
      %1198 = vmatpush1.bf16.msra.mxu0 %v944
      %1199 = vmatprep.subr.bf16.mxu0 0
      %1200 = vmatpush1.bf16.msra.mxu0 %v943
      %1201 = vmatprep.subr.bf16.mxu0 0
      %1202 = vmatpush1.bf16.msra.mxu0 %v942
      %1203 = vmatprep.subr.bf16.mxu0 0
      %1204 = vmatpush1.bf16.msra.mxu0 %v941
      %1205 = vmatprep.subr.bf16.mxu0 0
      %1206 = vmatpush2.bf16.msra.mxu0 0
      %1207 = vmatprep.subr.bf16.mxu0 0
      %1208 = vmatpush2.bf16.msra.mxu0 0
      %1209 = vmatprep.subr.bf16.mxu0 0
      %1210 = vmatpush2.bf16.msra.mxu0 0
      %1211 = vmatprep.subr.bf16.mxu0 0
      %1212 = vmatpush2.bf16.msra.mxu0 0
      %1213 = vmatprep.subr.bf16.mxu0 0
      %1214 = vmatpush2.bf16.msra.mxu0 0
      %1215 = vmatprep.subr.bf16.mxu0 0
      %1216 = vmatpush2.bf16.msra.mxu0 %v951
      %1217 = vmatprep.subr.bf16.mxu0 0
      %1218 = vmatpush2.bf16.msra.mxu0 %v950
      %1219 = vmatprep.subr.bf16.mxu0 0
      %1220 = vmatpush2.bf16.msra.mxu0 %v949
      %1221 = vmatprep.mubr.bf16.mxu0 %v981
      %1222 = vmatmul.mubr.bf16.gmra.mxu0 %v707
      %v1223 = vpop.f32.mrf.mxu0
      %v1224 = vadd.f32 %v1063, %v1223
      %v1225 = vpop.f32.mrf.mxu0
      %v1226 = vpop.f32.mrf.mxu0
      %v1227 = vadd.f32 %v1066, %v1226
      %v1228 = vpop.f32.mrf.mxu0
      %1229 = vmatprep.mubr.bf16.mxu0 %v984
      %1230 = vmatmul.mubr.bf16.gmra.mxu0 %v711
      %v1231 = vpop.f32.mrf.mxu0
      %v1232 = vadd.f32 %v1071, %v1231
      %v1233 = vpop.f32.mrf.mxu0
      %v1234 = vpop.f32.mrf.mxu0
      %v1235 = vadd.f32 %v1074, %v1234
      %v1236 = vpop.f32.mrf.mxu0
      %1237 = vmatprep.mubr.bf16.mxu0 %v987
      %1238 = vmatmul.mubr.bf16.gmra.mxu0 %v715
      %v1239 = vpop.f32.mrf.mxu0
      %v1240 = vadd.f32 %v1079, %v1239
      %v1241 = vpop.f32.mrf.mxu0
      %v1242 = vpop.f32.mrf.mxu0
      %v1243 = vadd.f32 %v1082, %v1242
      %v1244 = vpop.f32.mrf.mxu0
      %1245 = vmatprep.mubr.bf16.mxu0 %v990
      %1246 = vmatmul.mubr.bf16.gmra.mxu0 %v719
      %v1247 = vpop.f32.mrf.mxu0
      %v1248 = vadd.f32 %v1087, %v1247
      %v1249 = vpop.f32.mrf.mxu0
      %v1250 = vpop.f32.mrf.mxu0
      %v1251 = vadd.f32 %v1090, %v1250
      %v1252 = vpop.f32.mrf.mxu0
      %1253 = vmatprep.mubr.bf16.mxu0 %v993
      %1254 = vmatmul.mubr.bf16.gmra.mxu0 %v723
      %v1255 = vpop.f32.mrf.mxu0
      %v1256 = vadd.f32 %v1095, %v1255
      %v1257 = vpop.f32.mrf.mxu0
      %v1258 = vpop.f32.mrf.mxu0
      %v1259 = vadd.f32 %v1098, %v1258
      %v1260 = vpop.f32.mrf.mxu0
      %1261 = vmatprep.mubr.bf16.mxu0 %v996
      %1262 = vmatmul.mubr.bf16.gmra.mxu0 %v727
      %v1263 = vpop.f32.mrf.mxu0
      %v1264 = vadd.f32 %v1103, %v1263
      %v1265 = vpop.f32.mrf.mxu0
      %v1266 = vpop.f32.mrf.mxu0
      %v1267 = vadd.f32 %v1106, %v1266
      %v1268 = vpop.f32.mrf.mxu0
      %1269 = vmatprep.mubr.bf16.mxu0 %v999
      %1270 = vmatmul.mubr.bf16.gmra.mxu0 %v731
      %v1271 = vpop.f32.mrf.mxu0
      %v1272 = vadd.f32 %v1111, %v1271
      %v1273 = vpop.f32.mrf.mxu0
      %v1274 = vpop.f32.mrf.mxu0
      %v1275 = vadd.f32 %v1114, %v1274
      %v1276 = vpop.f32.mrf.mxu0
      %1277 = vmatprep.mubr.bf16.mxu0 %v1002
      %1278 = vmatmul.mubr.bf16.gmra.mxu0 %v735
      %v1279 = vpop.f32.mrf.mxu0
      %v1280 = vadd.f32 %v1119, %v1279
      %v1281 = vpop.f32.mrf.mxu0
      %v1282 = vpop.f32.mrf.mxu0
      %v1283 = vadd.f32 %v1122, %v1282
      %v1284 = vpop.f32.mrf.mxu0
      %1285 = vmatprep.mubr.bf16.mxu0 %v1005
      %1286 = vmatmul.mubr.bf16.gmra.mxu0 %v739
      %v1287 = vpop.f32.mrf.mxu0
      %v1288 = vadd.f32 %v1127, %v1287
      %v1289 = vpop.f32.mrf.mxu0
      %v1290 = vpop.f32.mrf.mxu0
      %v1291 = vadd.f32 %v1130, %v1290
      %v1292 = vpop.f32.mrf.mxu0
      %1293 = vmatprep.mubr.bf16.mxu0 %v1008
      %1294 = vmatmul.mubr.bf16.gmra.mxu0 %v743
      %v1295 = vpop.f32.mrf.mxu0
      %v1296 = vadd.f32 %v1135, %v1295
      %v1297 = vpop.f32.mrf.mxu0
      %v1298 = vpop.f32.mrf.mxu0
      %v1299 = vadd.f32 %v1138, %v1298
      %v1300 = vpop.f32.mrf.mxu0
      %1301 = vmatprep.mubr.bf16.mxu0 %v1011
      %1302 = vmatmul.mubr.bf16.gmra.mxu0 %v747
      %v1303 = vpop.f32.mrf.mxu0
      %v1304 = vadd.f32 %v1143, %v1303
      %v1305 = vpop.f32.mrf.mxu0
      %v1306 = vpop.f32.mrf.mxu0
      %v1307 = vadd.f32 %v1146, %v1306
      %v1308 = vpop.f32.mrf.mxu0
      %1309 = vmatprep.mubr.bf16.mxu0 %v1014
      %1310 = vmatmul.mubr.bf16.gmra.mxu0 %v751
      %v1311 = vpop.f32.mrf.mxu0
      %v1312 = vadd.f32 %v1151, %v1311
      %v1313 = vpop.f32.mrf.mxu0
      %v1314 = vpop.f32.mrf.mxu0
      %v1315 = vadd.f32 %v1154, %v1314
      %v1316 = vpop.f32.mrf.mxu0
      %1317 = vmatprep.mubr.bf16.mxu0 %v1017
      %1318 = vmatmul.mubr.bf16.gmra.mxu0 %v755
      %v1319 = vpop.f32.mrf.mxu0
      %v1320 = vadd.f32 %v1159, %v1319
      %v1321 = vpop.f32.mrf.mxu0
      %v1322 = vpop.f32.mrf.mxu0
      %v1323 = vadd.f32 %v1162, %v1322
      %v1324 = vpop.f32.mrf.mxu0
      %1325 = vmatprep.mubr.bf16.mxu0 %v1020
      %1326 = vmatmul.mubr.bf16.gmra.mxu0 %v759
      %v1327 = vpop.f32.mrf.mxu0
      %v1328 = vadd.f32 %v1167, %v1327
      %v1329 = vpop.f32.mrf.mxu0
      %v1330 = vpop.f32.mrf.mxu0
      %v1331 = vadd.f32 %v1170, %v1330
      %v1332 = vpop.f32.mrf.mxu0
      %1333 = vmatprep.mubr.bf16.mxu0 %v1023
      %1334 = vmatmul.mubr.bf16.gmra.mxu0 %v763
      %v1335 = vpop.f32.mrf.mxu0
      %v1336 = vadd.f32 %v1175, %v1335
      %v1337 = vpop.f32.mrf.mxu0
      %v1338 = vpop.f32.mrf.mxu0
      %v1339 = vadd.f32 %v1178, %v1338
      %v1340 = vpop.f32.mrf.mxu0
      %1341 = vmatprep.mubr.bf16.mxu0 %v1026
      %1342 = vmatmul.mubr.bf16.gmra.mxu0 %v767
      %v1343 = vpop.f32.mrf.mxu0
      %v1344 = vadd.f32 %v1183, %v1343
      %v1345 = vpop.f32.mrf.mxu0
      %v1346 = vpop.f32.mrf.mxu0
      %v1347 = vadd.f32 %v1186, %v1346
      %v1348 = vpop.f32.mrf.mxu0
      %1349 = vdwg.mxu0
      %v1350 = vmul.f32 %v1224, 0.5
      %v1351 = vmul.f32 %v1227, 0.5
      %v1352 = vmul.f32 %v1232, 0.5
      %v1353 = vmul.f32 %v1235, 0.5
      %v1354 = vmul.f32 %v1240, 0.5
      %v1355 = vmul.f32 %v1243, 0.5
      %v1356 = vmul.f32 %v1248, 0.5
      %v1357 = vmul.f32 %v1251, 0.5
      %v1358 = vmul.f32 %v1256, 0.5
      %v1359 = vmul.f32 %v1259, 0.5
      %v1360 = vmul.f32 %v1264, 0.5
      %v1361 = vmul.f32 %v1267, 0.5
      %v1362 = vmul.f32 %v1272, 0.5
      %v1363 = vmul.f32 %v1275, 0.5
      %v1364 = vmul.f32 %v1280, 0.5
      %v1365 = vmul.f32 %v1283, 0.5
      %v1366 = vmul.f32 %v1288, 0.5
      %v1367 = vmul.f32 %v1291, 0.5
      %v1368 = vmul.f32 %v1296, 0.5
      %v1369 = vmul.f32 %v1299, 0.5
      %v1370 = vmul.f32 %v1304, 0.5
      %v1371 = vmul.f32 %v1307, 0.5
      %v1372 = vmul.f32 %v1312, 0.5
      %v1373 = vmul.f32 %v1315, 0.5
      %v1374 = vmul.f32 %v1320, 0.5
      %v1375 = vmul.f32 %v1323, 0.5
      %v1376 = vmul.f32 %v1328, 0.5
      %v1377 = vmul.f32 %v1331, 0.5
      %v1378 = vmul.f32 %v1336, 0.5
      %v1379 = vmul.f32 %v1339, 0.5
      %v1380 = vmul.f32 %v1344, 0.5
      %v1381 = vmul.f32 %v1347, 0.5
      %v1382 = vmul.f32 %v1224, 0.70710677
      %v1383 = vmul.f32 %v1227, 0.70710677
      %v1384 = vmul.f32 %v1232, 0.70710677
      %v1385 = vmul.f32 %v1235, 0.70710677
      %v1386 = vmul.f32 %v1240, 0.70710677
      %v1387 = vmul.f32 %v1243, 0.70710677
      %v1388 = vmul.f32 %v1248, 0.70710677
      %v1389 = vmul.f32 %v1251, 0.70710677
      %v1390 = vmul.f32 %v1256, 0.70710677
      %v1391 = vmul.f32 %v1259, 0.70710677
      %v1392 = vmul.f32 %v1264, 0.70710677
      %v1393 = vmul.f32 %v1267, 0.70710677
      %v1394 = vmul.f32 %v1272, 0.70710677
      %v1395 = vmul.f32 %v1275, 0.70710677
      %v1396 = vmul.f32 %v1280, 0.70710677
      %v1397 = vmul.f32 %v1283, 0.70710677
      %v1398 = vmul.f32 %v1288, 0.70710677
      %v1399 = vmul.f32 %v1291, 0.70710677
      %v1400 = vmul.f32 %v1296, 0.70710677
      %v1401 = vmul.f32 %v1299, 0.70710677
      %v1402 = vmul.f32 %v1304, 0.70710677
      %v1403 = vmul.f32 %v1307, 0.70710677
      %v1404 = vmul.f32 %v1312, 0.70710677
      %v1405 = vmul.f32 %v1315, 0.70710677
      %v1406 = vmul.f32 %v1320, 0.70710677
      %v1407 = vmul.f32 %v1323, 0.70710677
      %v1408 = vmul.f32 %v1328, 0.70710677
      %v1409 = vmul.f32 %v1331, 0.70710677
      %v1410 = vmul.f32 %v1336, 0.70710677
      %v1411 = vmul.f32 %v1339, 0.70710677
      %v1412 = vmul.f32 %v1344, 0.70710677
      %v1413 = vmul.f32 %v1347, 0.70710677
      %v1414 = vand.u32 2147483647, %v1382
      %v1415 = vand.u32 2147483647, %v1383
      %v1416 = vand.u32 2147483647, %v1384
      %v1417 = vand.u32 2147483647, %v1385
      %v1418 = vand.u32 2147483647, %v1386
      %v1419 = vand.u32 2147483647, %v1387
      %v1420 = vand.u32 2147483647, %v1388
      %v1421 = vand.u32 2147483647, %v1389
      %v1422 = vand.u32 2147483647, %v1390
      %v1423 = vand.u32 2147483647, %v1391
      %v1424 = vand.u32 2147483647, %v1392
      %v1425 = vand.u32 2147483647, %v1393
      %v1426 = vand.u32 2147483647, %v1394
      %v1427 = vand.u32 2147483647, %v1395
      %v1428 = vand.u32 2147483647, %v1396
      %v1429 = vand.u32 2147483647, %v1397
      %v1430 = vand.u32 2147483647, %v1398
      %v1431 = vand.u32 2147483647, %v1399
      %v1432 = vand.u32 2147483647, %v1400
      %v1433 = vand.u32 2147483647, %v1401
      %v1434 = vand.u32 2147483647, %v1402
      %v1435 = vand.u32 2147483647, %v1403
      %v1436 = vand.u32 2147483647, %v1404
      %v1437 = vand.u32 2147483647, %v1405
      %v1438 = vand.u32 2147483647, %v1406
      %v1439 = vand.u32 2147483647, %v1407
      %v1440 = vand.u32 2147483647, %v1408
      %v1441 = vand.u32 2147483647, %v1409
      %v1442 = vand.u32 2147483647, %v1410
      %v1443 = vand.u32 2147483647, %v1411
      %v1444 = vand.u32 2147483647, %v1412
      %v1445 = vand.u32 2147483647, %v1413
      %v1446 = vmul.f32 %v1414, 0.3275911
      %v1447 = vmul.f32 %v1415, 0.3275911
      %v1448 = vmul.f32 %v1416, 0.3275911
      %v1449 = vmul.f32 %v1417, 0.3275911
      %v1450 = vmul.f32 %v1418, 0.3275911
      %v1451 = vmul.f32 %v1419, 0.3275911
      %v1452 = vmul.f32 %v1420, 0.3275911
      %v1453 = vmul.f32 %v1421, 0.3275911
      %v1454 = vmul.f32 %v1422, 0.3275911
      %v1455 = vmul.f32 %v1423, 0.3275911
      %v1456 = vmul.f32 %v1424, 0.3275911
      %v1457 = vmul.f32 %v1425, 0.3275911
      %v1458 = vmul.f32 %v1426, 0.3275911
      %v1459 = vmul.f32 %v1427, 0.3275911
      %v1460 = vmul.f32 %v1428, 0.3275911
      %v1461 = vmul.f32 %v1429, 0.3275911
      %v1462 = vmul.f32 %v1430, 0.3275911
      %v1463 = vmul.f32 %v1431, 0.3275911
      %v1464 = vmul.f32 %v1432, 0.3275911
      %v1465 = vmul.f32 %v1433, 0.3275911
      %v1466 = vmul.f32 %v1434, 0.3275911
      %v1467 = vmul.f32 %v1435, 0.3275911
      %v1468 = vmul.f32 %v1436, 0.3275911
      %v1469 = vmul.f32 %v1437, 0.3275911
      %v1470 = vmul.f32 %v1438, 0.3275911
      %v1471 = vmul.f32 %v1439, 0.3275911
      %v1472 = vmul.f32 %v1440, 0.3275911
      %v1473 = vmul.f32 %v1441, 0.3275911
      %v1474 = vmul.f32 %v1442, 0.3275911
      %v1475 = vmul.f32 %v1443, 0.3275911
      %v1476 = vmul.f32 %v1444, 0.3275911
      %v1477 = vmul.f32 %v1445, 0.3275911
      %v1478 = vadd.f32 %v1446, 1.0
      %v1479 = vadd.f32 %v1447, 1.0
      %v1480 = vadd.f32 %v1448, 1.0
      %v1481 = vadd.f32 %v1449, 1.0
      %v1482 = vadd.f32 %v1450, 1.0
      %v1483 = vadd.f32 %v1451, 1.0
      %v1484 = vadd.f32 %v1452, 1.0
      %v1485 = vadd.f32 %v1453, 1.0
      %v1486 = vadd.f32 %v1454, 1.0
      %v1487 = vadd.f32 %v1455, 1.0
      %v1488 = vadd.f32 %v1456, 1.0
      %v1489 = vadd.f32 %v1457, 1.0
      %v1490 = vadd.f32 %v1458, 1.0
      %v1491 = vadd.f32 %v1459, 1.0
      %v1492 = vadd.f32 %v1460, 1.0
      %v1493 = vadd.f32 %v1461, 1.0
      %v1494 = vadd.f32 %v1462, 1.0
      %v1495 = vadd.f32 %v1463, 1.0
      %v1496 = vadd.f32 %v1464, 1.0
      %v1497 = vadd.f32 %v1465, 1.0
      %v1498 = vadd.f32 %v1466, 1.0
      %v1499 = vadd.f32 %v1467, 1.0
      %v1500 = vadd.f32 %v1468, 1.0
      %v1501 = vadd.f32 %v1469, 1.0
      %v1502 = vadd.f32 %v1470, 1.0
      %v1503 = vadd.f32 %v1471, 1.0
      %v1504 = vadd.f32 %v1472, 1.0
      %v1505 = vadd.f32 %v1473, 1.0
      %v1506 = vadd.f32 %v1474, 1.0
      %v1507 = vadd.f32 %v1475, 1.0
      %v1508 = vadd.f32 %v1476, 1.0
      %v1509 = vadd.f32 %v1477, 1.0
      %v1510 = vrcp.pop %v1478
      %v1511 = vmul.f32 1.0, %v1510
      %v1512 = vrcp.pop %v1479
      %v1513 = vmul.f32 1.0, %v1512
      %v1514 = vrcp.pop %v1480
      %v1515 = vmul.f32 1.0, %v1514
      %v1516 = vrcp.pop %v1481
      %v1517 = vmul.f32 1.0, %v1516
      %v1518 = vrcp.pop %v1482
      %v1519 = vmul.f32 1.0, %v1518
      %v1520 = vrcp.pop %v1483
      %v1521 = vmul.f32 1.0, %v1520
      %v1522 = vrcp.pop %v1484
      %v1523 = vmul.f32 1.0, %v1522
      %v1524 = vrcp.pop %v1485
      %v1525 = vmul.f32 1.0, %v1524
      %v1526 = vrcp.pop %v1486
      %v1527 = vmul.f32 1.0, %v1526
      %v1528 = vrcp.pop %v1487
      %v1529 = vmul.f32 1.0, %v1528
      %v1530 = vrcp.pop %v1488
      %v1531 = vmul.f32 1.0, %v1530
      %v1532 = vrcp.pop %v1489
      %v1533 = vmul.f32 1.0, %v1532
      %v1534 = vrcp.pop %v1490
      %v1535 = vmul.f32 1.0, %v1534
      %v1536 = vrcp.pop %v1491
      %v1537 = vmul.f32 1.0, %v1536
      %v1538 = vrcp.pop %v1492
      %v1539 = vmul.f32 1.0, %v1538
      %v1540 = vrcp.pop %v1493
      %v1541 = vmul.f32 1.0, %v1540
      %v1542 = vrcp.pop %v1494
      %v1543 = vmul.f32 1.0, %v1542
      %v1544 = vrcp.pop %v1495
      %v1545 = vmul.f32 1.0, %v1544
      %v1546 = vrcp.pop %v1496
      %v1547 = vmul.f32 1.0, %v1546
      %v1548 = vrcp.pop %v1497
      %v1549 = vmul.f32 1.0, %v1548
      %v1550 = vrcp.pop %v1498
      %v1551 = vmul.f32 1.0, %v1550
      %v1552 = vrcp.pop %v1499
      %v1553 = vmul.f32 1.0, %v1552
      %v1554 = vrcp.pop %v1500
      %v1555 = vmul.f32 1.0, %v1554
      %v1556 = vrcp.pop %v1501
      %v1557 = vmul.f32 1.0, %v1556
      %v1558 = vrcp.pop %v1502
      %v1559 = vmul.f32 1.0, %v1558
      %v1560 = vrcp.pop %v1503
      %v1561 = vmul.f32 1.0, %v1560
      %v1562 = vrcp.pop %v1504
      %v1563 = vmul.f32 1.0, %v1562
      %v1564 = vrcp.pop %v1505
      %v1565 = vmul.f32 1.0, %v1564
      %v1566 = vrcp.pop %v1506
      %v1567 = vmul.f32 1.0, %v1566
      %v1568 = vrcp.pop %v1507
      %v1569 = vmul.f32 1.0, %v1568
      %v1570 = vrcp.pop %v1508
      %v1571 = vmul.f32 1.0, %v1570
      %v1572 = vrcp.pop %v1509
      %v1573 = vmul.f32 1.0, %v1572
      %v1574 = vmul.f32 %v1511, 1.0614054
      %v1575 = vmul.f32 %v1513, 1.0614054
      %v1576 = vmul.f32 %v1515, 1.0614054
      %v1577 = vmul.f32 %v1517, 1.0614054
      %v1578 = vmul.f32 %v1519, 1.0614054
      %v1579 = vmul.f32 %v1521, 1.0614054
      %v1580 = vmul.f32 %v1523, 1.0614054
      %v1581 = vmul.f32 %v1525, 1.0614054
      %v1582 = vmul.f32 %v1527, 1.0614054
      %v1583 = vmul.f32 %v1529, 1.0614054
      %v1584 = vmul.f32 %v1531, 1.0614054
      %v1585 = vmul.f32 %v1533, 1.0614054
      %v1586 = vmul.f32 %v1535, 1.0614054
      %v1587 = vmul.f32 %v1537, 1.0614054
      %v1588 = vmul.f32 %v1539, 1.0614054
      %v1589 = vmul.f32 %v1541, 1.0614054
      %v1590 = vmul.f32 %v1543, 1.0614054
      %v1591 = vmul.f32 %v1545, 1.0614054
      %v1592 = vmul.f32 %v1547, 1.0614054
      %v1593 = vmul.f32 %v1549, 1.0614054
      %v1594 = vmul.f32 %v1551, 1.0614054
      %v1595 = vmul.f32 %v1553, 1.0614054
      %v1596 = vmul.f32 %v1555, 1.0614054
      %v1597 = vmul.f32 %v1557, 1.0614054
      %v1598 = vmul.f32 %v1559, 1.0614054
      %v1599 = vmul.f32 %v1561, 1.0614054
      %v1600 = vmul.f32 %v1563, 1.0614054
      %v1601 = vmul.f32 %v1565, 1.0614054
      %v1602 = vmul.f32 %v1567, 1.0614054
      %v1603 = vmul.f32 %v1569, 1.0614054
      %v1604 = vmul.f32 %v1571, 1.0614054
      %v1605 = vmul.f32 %v1573, 1.0614054
      %v1606 = vadd.f32 %v1574, -1.4531521
      %v1607 = vadd.f32 %v1575, -1.4531521
      %v1608 = vadd.f32 %v1576, -1.4531521
      %v1609 = vadd.f32 %v1577, -1.4531521
      %v1610 = vadd.f32 %v1578, -1.4531521
      %v1611 = vadd.f32 %v1579, -1.4531521
      %v1612 = vadd.f32 %v1580, -1.4531521
      %v1613 = vadd.f32 %v1581, -1.4531521
      %v1614 = vadd.f32 %v1582, -1.4531521
      %v1615 = vadd.f32 %v1583, -1.4531521
      %v1616 = vadd.f32 %v1584, -1.4531521
      %v1617 = vadd.f32 %v1585, -1.4531521
      %v1618 = vadd.f32 %v1586, -1.4531521
      %v1619 = vadd.f32 %v1587, -1.4531521
      %v1620 = vadd.f32 %v1588, -1.4531521
      %v1621 = vadd.f32 %v1589, -1.4531521
      %v1622 = vadd.f32 %v1590, -1.4531521
      %v1623 = vadd.f32 %v1591, -1.4531521
      %v1624 = vadd.f32 %v1592, -1.4531521
      %v1625 = vadd.f32 %v1593, -1.4531521
      %v1626 = vadd.f32 %v1594, -1.4531521
      %v1627 = vadd.f32 %v1595, -1.4531521
      %v1628 = vadd.f32 %v1596, -1.4531521
      %v1629 = vadd.f32 %v1597, -1.4531521
      %v1630 = vadd.f32 %v1598, -1.4531521
      %v1631 = vadd.f32 %v1599, -1.4531521
      %v1632 = vadd.f32 %v1600, -1.4531521
      %v1633 = vadd.f32 %v1601, -1.4531521
      %v1634 = vadd.f32 %v1602, -1.4531521
      %v1635 = vadd.f32 %v1603, -1.4531521
      %v1636 = vadd.f32 %v1604, -1.4531521
      %v1637 = vadd.f32 %v1605, -1.4531521
      %v1638 = vmul.f32 %v1606, %v1511
      %v1639 = vmul.f32 %v1607, %v1513
      %v1640 = vmul.f32 %v1608, %v1515
      %v1641 = vmul.f32 %v1609, %v1517
      %v1642 = vmul.f32 %v1610, %v1519
      %v1643 = vmul.f32 %v1611, %v1521
      %v1644 = vmul.f32 %v1612, %v1523
      %v1645 = vmul.f32 %v1613, %v1525
      %v1646 = vmul.f32 %v1614, %v1527
      %v1647 = vmul.f32 %v1615, %v1529
      %v1648 = vmul.f32 %v1616, %v1531
      %v1649 = vmul.f32 %v1617, %v1533
      %v1650 = vmul.f32 %v1618, %v1535
      %v1651 = vmul.f32 %v1619, %v1537
      %v1652 = vmul.f32 %v1620, %v1539
      %v1653 = vmul.f32 %v1621, %v1541
      %v1654 = vmul.f32 %v1622, %v1543
      %v1655 = vmul.f32 %v1623, %v1545
      %v1656 = vmul.f32 %v1624, %v1547
      %v1657 = vmul.f32 %v1625, %v1549
      %v1658 = vmul.f32 %v1626, %v1551
      %v1659 = vmul.f32 %v1627, %v1553
      %v1660 = vmul.f32 %v1628, %v1555
      %v1661 = vmul.f32 %v1629, %v1557
      %v1662 = vmul.f32 %v1630, %v1559
      %v1663 = vmul.f32 %v1631, %v1561
      %v1664 = vmul.f32 %v1632, %v1563
      %v1665 = vmul.f32 %v1633, %v1565
      %v1666 = vmul.f32 %v1634, %v1567
      %v1667 = vmul.f32 %v1635, %v1569
      %v1668 = vmul.f32 %v1636, %v1571
      %v1669 = vmul.f32 %v1637, %v1573
      %v1670 = vadd.f32 %v1638, 1.4214138
      %v1671 = vadd.f32 %v1639, 1.4214138
      %v1672 = vadd.f32 %v1640, 1.4214138
      %v1673 = vadd.f32 %v1641, 1.4214138
      %v1674 = vadd.f32 %v1642, 1.4214138
      %v1675 = vadd.f32 %v1643, 1.4214138
      %v1676 = vadd.f32 %v1644, 1.4214138
      %v1677 = vadd.f32 %v1645, 1.4214138
      %v1678 = vadd.f32 %v1646, 1.4214138
      %v1679 = vadd.f32 %v1647, 1.4214138
      %v1680 = vadd.f32 %v1648, 1.4214138
      %v1681 = vadd.f32 %v1649, 1.4214138
      %v1682 = vadd.f32 %v1650, 1.4214138
      %v1683 = vadd.f32 %v1651, 1.4214138
      %v1684 = vadd.f32 %v1652, 1.4214138
      %v1685 = vadd.f32 %v1653, 1.4214138
      %v1686 = vadd.f32 %v1654, 1.4214138
      %v1687 = vadd.f32 %v1655, 1.4214138
      %v1688 = vadd.f32 %v1656, 1.4214138
      %v1689 = vadd.f32 %v1657, 1.4214138
      %v1690 = vadd.f32 %v1658, 1.4214138
      %v1691 = vadd.f32 %v1659, 1.4214138
      %v1692 = vadd.f32 %v1660, 1.4214138
      %v1693 = vadd.f32 %v1661, 1.4214138
      %v1694 = vadd.f32 %v1662, 1.4214138
      %v1695 = vadd.f32 %v1663, 1.4214138
      %v1696 = vadd.f32 %v1664, 1.4214138
      %v1697 = vadd.f32 %v1665, 1.4214138
      %v1698 = vadd.f32 %v1666, 1.4214138
      %v1699 = vadd.f32 %v1667, 1.4214138
      %v1700 = vadd.f32 %v1668, 1.4214138
      %v1701 = vadd.f32 %v1669, 1.4214138
      %v1702 = vmul.f32 %v1670, %v1511
      %v1703 = vmul.f32 %v1671, %v1513
      %v1704 = vmul.f32 %v1672, %v1515
      %v1705 = vmul.f32 %v1673, %v1517
      %v1706 = vmul.f32 %v1674, %v1519
      %v1707 = vmul.f32 %v1675, %v1521
      %v1708 = vmul.f32 %v1676, %v1523
      %v1709 = vmul.f32 %v1677, %v1525
      %v1710 = vmul.f32 %v1678, %v1527
      %v1711 = vmul.f32 %v1679, %v1529
      %v1712 = vmul.f32 %v1680, %v1531
      %v1713 = vmul.f32 %v1681, %v1533
      %v1714 = vmul.f32 %v1682, %v1535
      %v1715 = vmul.f32 %v1683, %v1537
      %v1716 = vmul.f32 %v1684, %v1539
      %v1717 = vmul.f32 %v1685, %v1541
      %v1718 = vmul.f32 %v1686, %v1543
      %v1719 = vmul.f32 %v1687, %v1545
      %v1720 = vmul.f32 %v1688, %v1547
      %v1721 = vmul.f32 %v1689, %v1549
      %v1722 = vmul.f32 %v1690, %v1551
      %v1723 = vmul.f32 %v1691, %v1553
      %v1724 = vmul.f32 %v1692, %v1555
      %v1725 = vmul.f32 %v1693, %v1557
      %v1726 = vmul.f32 %v1694, %v1559
      %v1727 = vmul.f32 %v1695, %v1561
      %v1728 = vmul.f32 %v1696, %v1563
      %v1729 = vmul.f32 %v1697, %v1565
      %v1730 = vmul.f32 %v1698, %v1567
      %v1731 = vmul.f32 %v1699, %v1569
      %v1732 = vmul.f32 %v1700, %v1571
      %v1733 = vmul.f32 %v1701, %v1573
      %v1734 = vadd.f32 %v1702, -0.28449672
      %v1735 = vadd.f32 %v1703, -0.28449672
      %v1736 = vadd.f32 %v1704, -0.28449672
      %v1737 = vadd.f32 %v1705, -0.28449672
      %v1738 = vadd.f32 %v1706, -0.28449672
      %v1739 = vadd.f32 %v1707, -0.28449672
      %v1740 = vadd.f32 %v1708, -0.28449672
      %v1741 = vadd.f32 %v1709, -0.28449672
      %v1742 = vadd.f32 %v1710, -0.28449672
      %v1743 = vadd.f32 %v1711, -0.28449672
      %v1744 = vadd.f32 %v1712, -0.28449672
      %v1745 = vadd.f32 %v1713, -0.28449672
      %v1746 = vadd.f32 %v1714, -0.28449672
      %v1747 = vadd.f32 %v1715, -0.28449672
      %v1748 = vadd.f32 %v1716, -0.28449672
      %v1749 = vadd.f32 %v1717, -0.28449672
      %v1750 = vadd.f32 %v1718, -0.28449672
      %v1751 = vadd.f32 %v1719, -0.28449672
      %v1752 = vadd.f32 %v1720, -0.28449672
      %v1753 = vadd.f32 %v1721, -0.28449672
      %v1754 = vadd.f32 %v1722, -0.28449672
      %v1755 = vadd.f32 %v1723, -0.28449672
      %v1756 = vadd.f32 %v1724, -0.28449672
      %v1757 = vadd.f32 %v1725, -0.28449672
      %v1758 = vadd.f32 %v1726, -0.28449672
      %v1759 = vadd.f32 %v1727, -0.28449672
      %v1760 = vadd.f32 %v1728, -0.28449672
      %v1761 = vadd.f32 %v1729, -0.28449672
      %v1762 = vadd.f32 %v1730, -0.28449672
      %v1763 = vadd.f32 %v1731, -0.28449672
      %v1764 = vadd.f32 %v1732, -0.28449672
      %v1765 = vadd.f32 %v1733, -0.28449672
      %v1766 = vmul.f32 %v1734, %v1511
      %v1767 = vmul.f32 %v1735, %v1513
      %v1768 = vmul.f32 %v1736, %v1515
      %v1769 = vmul.f32 %v1737, %v1517
      %v1770 = vmul.f32 %v1738, %v1519
      %v1771 = vmul.f32 %v1739, %v1521
      %v1772 = vmul.f32 %v1740, %v1523
      %v1773 = vmul.f32 %v1741, %v1525
      %v1774 = vmul.f32 %v1742, %v1527
      %v1775 = vmul.f32 %v1743, %v1529
      %v1776 = vmul.f32 %v1744, %v1531
      %v1777 = vmul.f32 %v1745, %v1533
      %v1778 = vmul.f32 %v1746, %v1535
      %v1779 = vmul.f32 %v1747, %v1537
      %v1780 = vmul.f32 %v1748, %v1539
      %v1781 = vmul.f32 %v1749, %v1541
      %v1782 = vmul.f32 %v1750, %v1543
      %v1783 = vmul.f32 %v1751, %v1545
      %v1784 = vmul.f32 %v1752, %v1547
      %v1785 = vmul.f32 %v1753, %v1549
      %v1786 = vmul.f32 %v1754, %v1551
      %v1787 = vmul.f32 %v1755, %v1553
      %v1788 = vmul.f32 %v1756, %v1555
      %v1789 = vmul.f32 %v1757, %v1557
      %v1790 = vmul.f32 %v1758, %v1559
      %v1791 = vmul.f32 %v1759, %v1561
      %v1792 = vmul.f32 %v1760, %v1563
      %v1793 = vmul.f32 %v1761, %v1565
      %v1794 = vmul.f32 %v1762, %v1567
      %v1795 = vmul.f32 %v1763, %v1569
      %v1796 = vmul.f32 %v1764, %v1571
      %v1797 = vmul.f32 %v1765, %v1573
      %v1798 = vadd.f32 %v1766, 0.2548296
      %v1799 = vadd.f32 %v1767, 0.2548296
      %v1800 = vadd.f32 %v1768, 0.2548296
      %v1801 = vadd.f32 %v1769, 0.2548296
      %v1802 = vadd.f32 %v1770, 0.2548296
      %v1803 = vadd.f32 %v1771, 0.2548296
      %v1804 = vadd.f32 %v1772, 0.2548296
      %v1805 = vadd.f32 %v1773, 0.2548296
      %v1806 = vadd.f32 %v1774, 0.2548296
      %v1807 = vadd.f32 %v1775, 0.2548296
      %v1808 = vadd.f32 %v1776, 0.2548296
      %v1809 = vadd.f32 %v1777, 0.2548296
      %v1810 = vadd.f32 %v1778, 0.2548296
      %v1811 = vadd.f32 %v1779, 0.2548296
      %v1812 = vadd.f32 %v1780, 0.2548296
      %v1813 = vadd.f32 %v1781, 0.2548296
      %v1814 = vadd.f32 %v1782, 0.2548296
      %v1815 = vadd.f32 %v1783, 0.2548296
      %v1816 = vadd.f32 %v1784, 0.2548296
      %v1817 = vadd.f32 %v1785, 0.2548296
      %v1818 = vadd.f32 %v1786, 0.2548296
      %v1819 = vadd.f32 %v1787, 0.2548296
      %v1820 = vadd.f32 %v1788, 0.2548296
      %v1821 = vadd.f32 %v1789, 0.2548296
      %v1822 = vadd.f32 %v1790, 0.2548296
      %v1823 = vadd.f32 %v1791, 0.2548296
      %v1824 = vadd.f32 %v1792, 0.2548296
      %v1825 = vadd.f32 %v1793, 0.2548296
      %v1826 = vadd.f32 %v1794, 0.2548296
      %v1827 = vadd.f32 %v1795, 0.2548296
      %v1828 = vadd.f32 %v1796, 0.2548296
      %v1829 = vadd.f32 %v1797, 0.2548296
      %v1830 = vmul.f32 %v1798, %v1511
      %v1831 = vmul.f32 %v1799, %v1513
      %v1832 = vmul.f32 %v1800, %v1515
      %v1833 = vmul.f32 %v1801, %v1517
      %v1834 = vmul.f32 %v1802, %v1519
      %v1835 = vmul.f32 %v1803, %v1521
      %v1836 = vmul.f32 %v1804, %v1523
      %v1837 = vmul.f32 %v1805, %v1525
      %v1838 = vmul.f32 %v1806, %v1527
      %v1839 = vmul.f32 %v1807, %v1529
      %v1840 = vmul.f32 %v1808, %v1531
      %v1841 = vmul.f32 %v1809, %v1533
      %v1842 = vmul.f32 %v1810, %v1535
      %v1843 = vmul.f32 %v1811, %v1537
      %v1844 = vmul.f32 %v1812, %v1539
      %v1845 = vmul.f32 %v1813, %v1541
      %v1846 = vmul.f32 %v1814, %v1543
      %v1847 = vmul.f32 %v1815, %v1545
      %v1848 = vmul.f32 %v1816, %v1547
      %v1849 = vmul.f32 %v1817, %v1549
      %v1850 = vmul.f32 %v1818, %v1551
      %v1851 = vmul.f32 %v1819, %v1553
      %v1852 = vmul.f32 %v1820, %v1555
      %v1853 = vmul.f32 %v1821, %v1557
      %v1854 = vmul.f32 %v1822, %v1559
      %v1855 = vmul.f32 %v1823, %v1561
      %v1856 = vmul.f32 %v1824, %v1563
      %v1857 = vmul.f32 %v1825, %v1565
      %v1858 = vmul.f32 %v1826, %v1567
      %v1859 = vmul.f32 %v1827, %v1569
      %v1860 = vmul.f32 %v1828, %v1571
      %v1861 = vmul.f32 %v1829, %v1573
      %v1862 = vsub.f32 0.0, %v1414
      %v1863 = vsub.f32 0.0, %v1415
      %v1864 = vsub.f32 0.0, %v1416
      %v1865 = vsub.f32 0.0, %v1417
      %v1866 = vsub.f32 0.0, %v1418
      %v1867 = vsub.f32 0.0, %v1419
      %v1868 = vsub.f32 0.0, %v1420
      %v1869 = vsub.f32 0.0, %v1421
      %v1870 = vsub.f32 0.0, %v1422
      %v1871 = vsub.f32 0.0, %v1423
      %v1872 = vsub.f32 0.0, %v1424
      %v1873 = vsub.f32 0.0, %v1425
      %v1874 = vsub.f32 0.0, %v1426
      %v1875 = vsub.f32 0.0, %v1427
      %v1876 = vsub.f32 0.0, %v1428
      %v1877 = vsub.f32 0.0, %v1429
      %v1878 = vsub.f32 0.0, %v1430
      %v1879 = vsub.f32 0.0, %v1431
      %v1880 = vsub.f32 0.0, %v1432
      %v1881 = vsub.f32 0.0, %v1433
      %v1882 = vsub.f32 0.0, %v1434
      %v1883 = vsub.f32 0.0, %v1435
      %v1884 = vsub.f32 0.0, %v1436
      %v1885 = vsub.f32 0.0, %v1437
      %v1886 = vsub.f32 0.0, %v1438
      %v1887 = vsub.f32 0.0, %v1439
      %v1888 = vsub.f32 0.0, %v1440
      %v1889 = vsub.f32 0.0, %v1441
      %v1890 = vsub.f32 0.0, %v1442
      %v1891 = vsub.f32 0.0, %v1443
      %v1892 = vsub.f32 0.0, %v1444
      %v1893 = vsub.f32 0.0, %v1445
      %v1894 = vmul.f32 %v1862, %v1414
      %v1895 = vmul.f32 %v1863, %v1415
      %v1896 = vmul.f32 %v1864, %v1416
      %v1897 = vmul.f32 %v1865, %v1417
      %v1898 = vmul.f32 %v1866, %v1418
      %v1899 = vmul.f32 %v1867, %v1419
      %v1900 = vmul.f32 %v1868, %v1420
      %v1901 = vmul.f32 %v1869, %v1421
      %v1902 = vmul.f32 %v1870, %v1422
      %v1903 = vmul.f32 %v1871, %v1423
      %v1904 = vmul.f32 %v1872, %v1424
      %v1905 = vmul.f32 %v1873, %v1425
      %v1906 = vmul.f32 %v1874, %v1426
      %v1907 = vmul.f32 %v1875, %v1427
      %v1908 = vmul.f32 %v1876, %v1428
      %v1909 = vmul.f32 %v1877, %v1429
      %v1910 = vmul.f32 %v1878, %v1430
      %v1911 = vmul.f32 %v1879, %v1431
      %v1912 = vmul.f32 %v1880, %v1432
      %v1913 = vmul.f32 %v1881, %v1433
      %v1914 = vmul.f32 %v1882, %v1434
      %v1915 = vmul.f32 %v1883, %v1435
      %v1916 = vmul.f32 %v1884, %v1436
      %v1917 = vmul.f32 %v1885, %v1437
      %v1918 = vmul.f32 %v1886, %v1438
      %v1919 = vmul.f32 %v1887, %v1439
      %v1920 = vmul.f32 %v1888, %v1440
      %v1921 = vmul.f32 %v1889, %v1441
      %v1922 = vmul.f32 %v1890, %v1442
      %v1923 = vmul.f32 %v1891, %v1443
      %v1924 = vmul.f32 %v1892, %v1444
      %v1925 = vmul.f32 %v1893, %v1445
      %v1926 = vmul.f32 %v1894, 1.442695
      %v1927 = vpow.pop %v1926
      %v1928 = vmul.f32 %v1895, 1.442695
      %v1929 = vpow.pop %v1928
      %v1930 = vmul.f32 %v1896, 1.442695
      %v1931 = vpow.pop %v1930
      %v1932 = vmul.f32 %v1897, 1.442695
      %v1933 = vpow.pop %v1932
      %v1934 = vmul.f32 %v1898, 1.442695
      %v1935 = vpow.pop %v1934
      %v1936 = vmul.f32 %v1899, 1.442695
      %v1937 = vpow.pop %v1936
      %v1938 = vmul.f32 %v1900, 1.442695
      %v1939 = vpow.pop %v1938
      %v1940 = vmul.f32 %v1901, 1.442695
      %v1941 = vpow.pop %v1940
      %v1942 = vmul.f32 %v1902, 1.442695
      %v1943 = vpow.pop %v1942
      %v1944 = vmul.f32 %v1903, 1.442695
      %v1945 = vpow.pop %v1944
      %v1946 = vmul.f32 %v1904, 1.442695
      %v1947 = vpow.pop %v1946
      %v1948 = vmul.f32 %v1905, 1.442695
      %v1949 = vpow.pop %v1948
      %v1950 = vmul.f32 %v1906, 1.442695
      %v1951 = vpow.pop %v1950
      %v1952 = vmul.f32 %v1907, 1.442695
      %v1953 = vpow.pop %v1952
      %v1954 = vmul.f32 %v1908, 1.442695
      %v1955 = vpow.pop %v1954
      %v1956 = vmul.f32 %v1909, 1.442695
      %v1957 = vpow.pop %v1956
      %v1958 = vmul.f32 %v1910, 1.442695
      %v1959 = vpow.pop %v1958
      %v1960 = vmul.f32 %v1911, 1.442695
      %v1961 = vpow.pop %v1960
      %v1962 = vmul.f32 %v1912, 1.442695
      %v1963 = vpow.pop %v1962
      %v1964 = vmul.f32 %v1913, 1.442695
      %v1965 = vpow.pop %v1964
      %v1966 = vmul.f32 %v1914, 1.442695
      %v1967 = vpow.pop %v1966
      %v1968 = vmul.f32 %v1915, 1.442695
      %v1969 = vpow.pop %v1968
      %v1970 = vmul.f32 %v1916, 1.442695
      %v1971 = vpow.pop %v1970
      %v1972 = vmul.f32 %v1917, 1.442695
      %v1973 = vpow.pop %v1972
      %v1974 = vmul.f32 %v1918, 1.442695
      %v1975 = vpow.pop %v1974
      %v1976 = vmul.f32 %v1919, 1.442695
      %v1977 = vpow.pop %v1976
      %v1978 = vmul.f32 %v1920, 1.442695
      %v1979 = vpow.pop %v1978
      %v1980 = vmul.f32 %v1921, 1.442695
      %v1981 = vpow.pop %v1980
      %v1982 = vmul.f32 %v1922, 1.442695
      %v1983 = vpow.pop %v1982
      %v1984 = vmul.f32 %v1923, 1.442695
      %v1985 = vpow.pop %v1984
      %v1986 = vmul.f32 %v1924, 1.442695
      %v1987 = vpow.pop %v1986
      %v1988 = vmul.f32 %v1925, 1.442695
      %v1989 = vpow.pop %v1988
      %v1990 = vmul.f32 %v1830, %v1927
      %v1991 = vmul.f32 %v1831, %v1929
      %v1992 = vmul.f32 %v1832, %v1931
      %v1993 = vmul.f32 %v1833, %v1933
      %v1994 = vmul.f32 %v1834, %v1935
      %v1995 = vmul.f32 %v1835, %v1937
      %v1996 = vmul.f32 %v1836, %v1939
      %v1997 = vmul.f32 %v1837, %v1941
      %v1998 = vmul.f32 %v1838, %v1943
      %v1999 = vmul.f32 %v1839, %v1945
      %v2000 = vmul.f32 %v1840, %v1947
      %v2001 = vmul.f32 %v1841, %v1949
      %v2002 = vmul.f32 %v1842, %v1951
      %v2003 = vmul.f32 %v1843, %v1953
      %v2004 = vmul.f32 %v1844, %v1955
      %v2005 = vmul.f32 %v1845, %v1957
      %v2006 = vmul.f32 %v1846, %v1959
      %v2007 = vmul.f32 %v1847, %v1961
      %v2008 = vmul.f32 %v1848, %v1963
      %v2009 = vmul.f32 %v1849, %v1965
      %v2010 = vmul.f32 %v1850, %v1967
      %v2011 = vmul.f32 %v1851, %v1969
      %v2012 = vmul.f32 %v1852, %v1971
      %v2013 = vmul.f32 %v1853, %v1973
      %v2014 = vmul.f32 %v1854, %v1975
      %v2015 = vmul.f32 %v1855, %v1977
      %v2016 = vmul.f32 %v1856, %v1979
      %v2017 = vmul.f32 %v1857, %v1981
      %v2018 = vmul.f32 %v1858, %v1983
      %v2019 = vmul.f32 %v1859, %v1985
      %v2020 = vmul.f32 %v1860, %v1987
      %v2021 = vmul.f32 %v1861, %v1989
      %v2022 = vsub.f32 1.0, %v1990
      %v2023 = vsub.f32 1.0, %v1991
      %v2024 = vsub.f32 1.0, %v1992
      %v2025 = vsub.f32 1.0, %v1993
      %v2026 = vsub.f32 1.0, %v1994
      %v2027 = vsub.f32 1.0, %v1995
      %v2028 = vsub.f32 1.0, %v1996
      %v2029 = vsub.f32 1.0, %v1997
      %v2030 = vsub.f32 1.0, %v1998
      %v2031 = vsub.f32 1.0, %v1999
      %v2032 = vsub.f32 1.0, %v2000
      %v2033 = vsub.f32 1.0, %v2001
      %v2034 = vsub.f32 1.0, %v2002
      %v2035 = vsub.f32 1.0, %v2003
      %v2036 = vsub.f32 1.0, %v2004
      %v2037 = vsub.f32 1.0, %v2005
      %v2038 = vsub.f32 1.0, %v2006
      %v2039 = vsub.f32 1.0, %v2007
      %v2040 = vsub.f32 1.0, %v2008
      %v2041 = vsub.f32 1.0, %v2009
      %v2042 = vsub.f32 1.0, %v2010
      %v2043 = vsub.f32 1.0, %v2011
      %v2044 = vsub.f32 1.0, %v2012
      %v2045 = vsub.f32 1.0, %v2013
      %v2046 = vsub.f32 1.0, %v2014
      %v2047 = vsub.f32 1.0, %v2015
      %v2048 = vsub.f32 1.0, %v2016
      %v2049 = vsub.f32 1.0, %v2017
      %v2050 = vsub.f32 1.0, %v2018
      %v2051 = vsub.f32 1.0, %v2019
      %v2052 = vsub.f32 1.0, %v2020
      %v2053 = vsub.f32 1.0, %v2021
      %vm2054 = vcmp.lt.f32.partialorder %v1382, 0.0
      %vm2055 = vcmp.lt.f32.partialorder %v1383, 0.0
      %vm2056 = vcmp.lt.f32.partialorder %v1384, 0.0
      %vm2057 = vcmp.lt.f32.partialorder %v1385, 0.0
      %vm2058 = vcmp.lt.f32.partialorder %v1386, 0.0
      %vm2059 = vcmp.lt.f32.partialorder %v1387, 0.0
      %vm2060 = vcmp.lt.f32.partialorder %v1388, 0.0
      %vm2061 = vcmp.lt.f32.partialorder %v1389, 0.0
      %vm2062 = vcmp.lt.f32.partialorder %v1390, 0.0
      %vm2063 = vcmp.lt.f32.partialorder %v1391, 0.0
      %vm2064 = vcmp.lt.f32.partialorder %v1392, 0.0
      %vm2065 = vcmp.lt.f32.partialorder %v1393, 0.0
      %vm2066 = vcmp.lt.f32.partialorder %v1394, 0.0
      %vm2067 = vcmp.lt.f32.partialorder %v1395, 0.0
      %vm2068 = vcmp.lt.f32.partialorder %v1396, 0.0
      %vm2069 = vcmp.lt.f32.partialorder %v1397, 0.0
      %vm2070 = vcmp.lt.f32.partialorder %v1398, 0.0
      %vm2071 = vcmp.lt.f32.partialorder %v1399, 0.0
      %vm2072 = vcmp.lt.f32.partialorder %v1400, 0.0
      %vm2073 = vcmp.lt.f32.partialorder %v1401, 0.0
      %vm2074 = vcmp.lt.f32.partialorder %v1402, 0.0
      %vm2075 = vcmp.lt.f32.partialorder %v1403, 0.0
      %vm2076 = vcmp.lt.f32.partialorder %v1404, 0.0
      %vm2077 = vcmp.lt.f32.partialorder %v1405, 0.0
      %vm2078 = vcmp.lt.f32.partialorder %v1406, 0.0
      %vm2079 = vcmp.lt.f32.partialorder %v1407, 0.0
      %vm2080 = vcmp.lt.f32.partialorder %v1408, 0.0
      %vm2081 = vcmp.lt.f32.partialorder %v1409, 0.0
      %vm2082 = vcmp.lt.f32.partialorder %v1410, 0.0
      %vm2083 = vcmp.lt.f32.partialorder %v1411, 0.0
      %vm2084 = vcmp.lt.f32.partialorder %v1412, 0.0
      %vm2085 = vcmp.lt.f32.partialorder %v1413, 0.0
      %v2086 = vsub.f32 0.0, %v2022
      %v2087 = vsub.f32 0.0, %v2023
      %v2088 = vsub.f32 0.0, %v2024
      %v2089 = vsub.f32 0.0, %v2025
      %v2090 = vsub.f32 0.0, %v2026
      %v2091 = vsub.f32 0.0, %v2027
      %v2092 = vsub.f32 0.0, %v2028
      %v2093 = vsub.f32 0.0, %v2029
      %v2094 = vsub.f32 0.0, %v2030
      %v2095 = vsub.f32 0.0, %v2031
      %v2096 = vsub.f32 0.0, %v2032
      %v2097 = vsub.f32 0.0, %v2033
      %v2098 = vsub.f32 0.0, %v2034
      %v2099 = vsub.f32 0.0, %v2035
      %v2100 = vsub.f32 0.0, %v2036
      %v2101 = vsub.f32 0.0, %v2037
      %v2102 = vsub.f32 0.0, %v2038
      %v2103 = vsub.f32 0.0, %v2039
      %v2104 = vsub.f32 0.0, %v2040
      %v2105 = vsub.f32 0.0, %v2041
      %v2106 = vsub.f32 0.0, %v2042
      %v2107 = vsub.f32 0.0, %v2043
      %v2108 = vsub.f32 0.0, %v2044
      %v2109 = vsub.f32 0.0, %v2045
      %v2110 = vsub.f32 0.0, %v2046
      %v2111 = vsub.f32 0.0, %v2047
      %v2112 = vsub.f32 0.0, %v2048
      %v2113 = vsub.f32 0.0, %v2049
      %v2114 = vsub.f32 0.0, %v2050
      %v2115 = vsub.f32 0.0, %v2051
      %v2116 = vsub.f32 0.0, %v2052
      %v2117 = vsub.f32 0.0, %v2053
      %v2118 = vsel %vm2054, %v2086, %v2022
      %v2119 = vsel %vm2055, %v2087, %v2023
      %v2120 = vsel %vm2056, %v2088, %v2024
      %v2121 = vsel %vm2057, %v2089, %v2025
      %v2122 = vsel %vm2058, %v2090, %v2026
      %v2123 = vsel %vm2059, %v2091, %v2027
      %v2124 = vsel %vm2060, %v2092, %v2028
      %v2125 = vsel %vm2061, %v2093, %v2029
      %v2126 = vsel %vm2062, %v2094, %v2030
      %v2127 = vsel %vm2063, %v2095, %v2031
      %v2128 = vsel %vm2064, %v2096, %v2032
      %v2129 = vsel %vm2065, %v2097, %v2033
      %v2130 = vsel %vm2066, %v2098, %v2034
      %v2131 = vsel %vm2067, %v2099, %v2035
      %v2132 = vsel %vm2068, %v2100, %v2036
      %v2133 = vsel %vm2069, %v2101, %v2037
      %v2134 = vsel %vm2070, %v2102, %v2038
      %v2135 = vsel %vm2071, %v2103, %v2039
      %v2136 = vsel %vm2072, %v2104, %v2040
      %v2137 = vsel %vm2073, %v2105, %v2041
      %v2138 = vsel %vm2074, %v2106, %v2042
      %v2139 = vsel %vm2075, %v2107, %v2043
      %v2140 = vsel %vm2076, %v2108, %v2044
      %v2141 = vsel %vm2077, %v2109, %v2045
      %v2142 = vsel %vm2078, %v2110, %v2046
      %v2143 = vsel %vm2079, %v2111, %v2047
      %v2144 = vsel %vm2080, %v2112, %v2048
      %v2145 = vsel %vm2081, %v2113, %v2049
      %v2146 = vsel %vm2082, %v2114, %v2050
      %v2147 = vsel %vm2083, %v2115, %v2051
      %v2148 = vsel %vm2084, %v2116, %v2052
      %v2149 = vsel %vm2085, %v2117, %v2053
      %v2150 = vadd.f32 %v2118, 1.0
      %v2151 = vadd.f32 %v2119, 1.0
      %v2152 = vadd.f32 %v2120, 1.0
      %v2153 = vadd.f32 %v2121, 1.0
      %v2154 = vadd.f32 %v2122, 1.0
      %v2155 = vadd.f32 %v2123, 1.0
      %v2156 = vadd.f32 %v2124, 1.0
      %v2157 = vadd.f32 %v2125, 1.0
      %v2158 = vadd.f32 %v2126, 1.0
      %v2159 = vadd.f32 %v2127, 1.0
      %v2160 = vadd.f32 %v2128, 1.0
      %v2161 = vadd.f32 %v2129, 1.0
      %v2162 = vadd.f32 %v2130, 1.0
      %v2163 = vadd.f32 %v2131, 1.0
      %v2164 = vadd.f32 %v2132, 1.0
      %v2165 = vadd.f32 %v2133, 1.0
      %v2166 = vadd.f32 %v2134, 1.0
      %v2167 = vadd.f32 %v2135, 1.0
      %v2168 = vadd.f32 %v2136, 1.0
      %v2169 = vadd.f32 %v2137, 1.0
      %v2170 = vadd.f32 %v2138, 1.0
      %v2171 = vadd.f32 %v2139, 1.0
      %v2172 = vadd.f32 %v2140, 1.0
      %v2173 = vadd.f32 %v2141, 1.0
      %v2174 = vadd.f32 %v2142, 1.0
      %v2175 = vadd.f32 %v2143, 1.0
      %v2176 = vadd.f32 %v2144, 1.0
      %v2177 = vadd.f32 %v2145, 1.0
      %v2178 = vadd.f32 %v2146, 1.0
      %v2179 = vadd.f32 %v2147, 1.0
      %v2180 = vadd.f32 %v2148, 1.0
      %v2181 = vadd.f32 %v2149, 1.0
      %v2182 = vmul.f32 %v1350, %v2150
      %v2183 = vmul.f32 %v1351, %v2151
      %v2184 = vmul.f32 %v1352, %v2152
      %v2185 = vmul.f32 %v1353, %v2153
      %v2186 = vmul.f32 %v1354, %v2154
      %v2187 = vmul.f32 %v1355, %v2155
      %v2188 = vmul.f32 %v1356, %v2156
      %v2189 = vmul.f32 %v1357, %v2157
      %v2190 = vmul.f32 %v1358, %v2158
      %v2191 = vmul.f32 %v1359, %v2159
      %v2192 = vmul.f32 %v1360, %v2160
      %v2193 = vmul.f32 %v1361, %v2161
      %v2194 = vmul.f32 %v1362, %v2162
      %v2195 = vmul.f32 %v1363, %v2163
      %v2196 = vmul.f32 %v1364, %v2164
      %v2197 = vmul.f32 %v1365, %v2165
      %v2198 = vmul.f32 %v1366, %v2166
      %v2199 = vmul.f32 %v1367, %v2167
      %v2200 = vmul.f32 %v1368, %v2168
      %v2201 = vmul.f32 %v1369, %v2169
      %v2202 = vmul.f32 %v1370, %v2170
      %v2203 = vmul.f32 %v1371, %v2171
      %v2204 = vmul.f32 %v1372, %v2172
      %v2205 = vmul.f32 %v1373, %v2173
      %v2206 = vmul.f32 %v1374, %v2174
      %v2207 = vmul.f32 %v1375, %v2175
      %v2208 = vmul.f32 %v1376, %v2176
      %v2209 = vmul.f32 %v1377, %v2177
      %v2210 = vmul.f32 %v1378, %v2178
      %v2211 = vmul.f32 %v1379, %v2179
      %v2212 = vmul.f32 %v1380, %v2180
      %v2213 = vmul.f32 %v1381, %v2181
      %vm2214 = vcmask 130048
      %2215 = vst.msk [vmem:[%s253] sm:$0xff] %vm2214, %v2182
      %2216 = vst.msk [vmem:[%s253 + $0x8] sm:$0xff] %vm2214, %v2183
      %2217 = vst.msk [vmem:[%s253 + $0x10] sm:$0xff] %vm2214, %v2184
      %2218 = vst.msk [vmem:[%s253 + $0x18] sm:$0xff] %vm2214, %v2185
      %2219 = vst.msk [vmem:[%s253 + $0x20] sm:$0xff] %vm2214, %v2186
      %2220 = vst.msk [vmem:[%s253 + $0x28] sm:$0xff] %vm2214, %v2187
      %2221 = vst.msk [vmem:[%s253 + $0x30] sm:$0xff] %vm2214, %v2188
      %2222 = vst.msk [vmem:[%s253 + $0x38] sm:$0xff] %vm2214, %v2189
      %2223 = vst.msk [vmem:[%s253 + $0x40] sm:$0xff] %vm2214, %v2190
      %2224 = vst.msk [vmem:[%s253 + $0x48] sm:$0xff] %vm2214, %v2191
      %2225 = vst.msk [vmem:[%s253 + $0x50] sm:$0xff] %vm2214, %v2192
      %2226 = vst.msk [vmem:[%s253 + $0x58] sm:$0xff] %vm2214, %v2193
      %2227 = vst.msk [vmem:[%s253 + $0x60] sm:$0xff] %vm2214, %v2194
      %2228 = vst.msk [vmem:[%s253 + $0x68] sm:$0xff] %vm2214, %v2195
      %2229 = vst.msk [vmem:[%s253 + $0x70] sm:$0xff] %vm2214, %v2196
      %2230 = vst.msk [vmem:[%s253 + $0x78] sm:$0xff] %vm2214, %v2197
      %2231 = vst.msk [vmem:[%s253 + $0x80] sm:$0xff] %vm2214, %v2198
      %2232 = vst.msk [vmem:[%s253 + $0x88] sm:$0xff] %vm2214, %v2199
      %2233 = vst.msk [vmem:[%s253 + $0x90] sm:$0xff] %vm2214, %v2200
      %2234 = vst.msk [vmem:[%s253 + $0x98] sm:$0xff] %vm2214, %v2201
      %2235 = vst.msk [vmem:[%s253 + $0xa0] sm:$0xff] %vm2214, %v2202
      %2236 = vst.msk [vmem:[%s253 + $0xa8] sm:$0xff] %vm2214, %v2203
      %2237 = vst.msk [vmem:[%s253 + $0xb0] sm:$0xff] %vm2214, %v2204
      %2238 = vst.msk [vmem:[%s253 + $0xb8] sm:$0xff] %vm2214, %v2205
      %2239 = vst.msk [vmem:[%s253 + $0xc0] sm:$0xff] %vm2214, %v2206
      %2240 = vst.msk [vmem:[%s253 + $0xc8] sm:$0xff] %vm2214, %v2207
      %2241 = vst.msk [vmem:[%s253 + $0xd0] sm:$0xff] %vm2214, %v2208
      %2242 = vst.msk [vmem:[%s253 + $0xd8] sm:$0xff] %vm2214, %v2209
      %2243 = vst.msk [vmem:[%s253 + $0xe0] sm:$0xff] %vm2214, %v2210
      %2244 = vst.msk [vmem:[%s253 + $0xe8] sm:$0xff] %vm2214, %v2211
      %2245 = vst.msk [vmem:[%s253 + $0xf0] sm:$0xff] %vm2214, %v2212
      %2246 = vst.msk [vmem:[%s253 + $0xf8] sm:$0xff] %vm2214, %v2213
      %s2247 = smul.u32 %s19, 2
      %s2248 = sadd.s32 %s2247, %s20
      %s2249 = smul.u32 32, %s2248
      %p2250 = scmp.lt.s32.totalorder %s2249, 127
      %s2251 = scalar_select %p2250, %s2249, 127
      %s2252 = smul.addr %s2251, 8
      %s2253 = scalar_lea.vmem %s4, %s2252
      // Predicated region
      $region37: #{ca3d_forward.4} parent=35 // pred_check
        %p2254 = pneg %p147
      $region38: #{ca3d_forward.4} parent=35 // pred_check_branch
        %2256 = sbr.rel (%p2254) target = $region40
      $region39: #{ca3d_forward.4} parent=35 // pred_region
        %s2257 = smul.u32 %s19, 2
        %s2258 = sadd.s32 %s2257, %s20
        %s2259 = smul.u32 32, %s2258
      $region40: #{ca3d_forward.4} parent=35 // pred_fallthru
        _
    $region36: #{ca3d_forward.4} parent=5 // pred_fallthru
      _
    %p2260 = scmp.le.s32.totalorder 2, %s10
    // Predicated region
    $region41: #{ca3d_forward.4} parent=5 // pred_check
      %p2261 = pneg %p2260
    $region42: #{ca3d_forward.4} parent=5 // pred_check_branch
      %2263 = sbr.rel (%p2261) target = $region44
    $region43: #{ca3d_forward.4} parent=5 // pred_region
      %s2264 = ssub.s32 %s10, 2
      // Predicated region
      $region45: #{ca3d_forward.4} parent=43 // pred_check
        %p2265 = pneg %p153
      $region46: #{ca3d_forward.4} parent=43 // pred_check_branch
        %2267 = sbr.rel (%p2265) target = $region48
      $region47: #{ca3d_forward.4} parent=43 // pred_region
        %s2268 = smul.u32 %s21, 2
        %s2269 = sadd.s32 %s2268, %s22
        %s2270 = smul.u32 32, %s2269
        %p2271 = scmp.lt.s32.totalorder %s2270, 127
        %s2272 = scalar_select %p2271, %s2270, 127
        %s2273 = smul.addr %s2272, 8
        %s2274 = scalar_lea.vmem %s4, %s2273
      $region48: #{ca3d_forward.4} parent=43 // pred_fallthru
        _
    $region44: #{ca3d_forward.4} parent=5 // pred_fallthru
      _
  $region6: #{ca3d_forward.4} parent=0 // loop_footer
    %s14 = sadd.s32 1, %s10
  $region7: #{ca3d_forward.4} parent=0 // loop_footer_branch
    %9 = sbr.rel target = $region3
  $region8: #{ca3d_forward.4} parent=0 // loop_exit
    _

// kernel: ca3d_forward.7
$region0: #{ca3d_forward.7}
  #allocation0 [shape = 'u32[]', space=smem, size = 0x4, offset = 0x4, fixed_abs, tag = 'smem constant byte address 0x4 - core index']
  #allocation1 [shape = 'u32[144,128]{1,0:T(1,128)}', space=vmem, size = 0x12000, scoped, tag = 'internal scratch']
  %s0 = inlined_call_operand.vmem [shape: f32[1024,16], index: 0, kind: input, shape index: {}]
  %s1 = inlined_call_operand.vmem [shape: f32[1,16], index: 1, kind: input, shape index: {}]
  %s2 = inlined_call_operand.vmem [shape: f32[1,16], index: 2, kind: input, shape index: {}]
  %s3 = inlined_call_operand.hbm [shape: f32[1024,16], index: 3, kind: output, shape index: {}]
  %s4 = sld [smem:[#allocation0]]
  $region45: #{ca3d_forward.7} parent=0
    _
  %s6 = ssub.s32 1, %s4
  %s7 = scalar_select 0, %s6, %s4
  $region1: #{ca3d_forward.7} parent=0
    #allocation2 [shape = 'u8[524288]{0}', space=vmem, size = 0x80000, scoped, tag = 'output window, operand 0']
    #allocation3 [shape = 's32[2]{0}', space=sflag, size = 0x8, scoped, tag = 'scoped memory for ca3d_forward.7']
    %8 = vsyncpa [#allocation3], 0
    %s9 = scalar_lea.sflag [#allocation3], 1
    %10 = vsyncpa %s9, 0
    loop: start=0, step=1, limit=4
    $region2: #{ca3d_forward.7} parent=1 // loop_pre_header
      _
    $region3: #{ca3d_forward.7} parent=1 // loop_header
      %s12 = sphi 0, %s16
      %p13 = scmp.ge.s32.totalorder %s12, 4
      %s22 = sphi 0, %s24
      %s25 = sphi 0, %s22
      %s26 = sphi 0, %s25
      %s42 = sphi 0, %s26
      %s46 = sphi 0, %s46
      %s48 = sphi 0, %s46
      %s49 = sphi 0, %s48
      %s63 = sphi 0, %s49
      %s67 = sphi 0, %s67
      %s69 = sphi 0, %s67
      %s70 = sphi 0, %s69
      %s84 = sphi 0, %s70
      %s90 = sphi 0, %s92
      %s93 = sphi 0, %s90
      %s94 = sphi 0, %s93
      %s110 = sphi 0, %s94
    $region4: #{ca3d_forward.7} parent=1 // loop_header_branch
      %15 = sbr.rel (%p13) target = $region8
    $region5: #{ca3d_forward.7} parent=1 // loop_body
      %s17 = ssub.s32 %s12, 1
      %s18 = ssub.s32 %s12, 2
      %s19 = sadd.s32 %s12, 1
      %s20 = ssub.s32 %s12, %s19
      %p21 = scmp.eq.s32.totalorder %s20, 0
      %s23 = sadd.s32 %s22, 1
      %s24 = scalar_select %p21, %s22, %s23
      %p27 = pneg %p21
      %p28 = scmp.eq.s32.totalorder %s12, 1
      %p29 = por %p27, %p28
      %p30 = scmp.ne.s32.totalorder %s22, %s25
      %p31 = scmp.eq.s32.totalorder %s12, 0
      %p32 = por %p30, %p31
      %p33 = scmp.ne.s32.totalorder %s22, %s25
      %p34 = scmp.eq.s32.totalorder %s17, 1
      %p35 = por %p33, %p34
      %p36 = scmp.ne.s32.totalorder %s25, %s26
      %p37 = scmp.eq.s32.totalorder %s17, 0
      %p38 = por %p36, %p37
      %p39 = scmp.ne.s32.totalorder %s25, %s26
      %p40 = scmp.eq.s32.totalorder %s18, 1
      %p41 = por %p39, %p40
      %p43 = scmp.ne.s32.totalorder %s26, %s42
      %p44 = scmp.eq.s32.totalorder %s18, 0
      %p45 = por %p43, %p44
      %s47 = sadd.s32 %s46, 1
      %p50 = scmp.eq.s32.totalorder %s12, 1
      %p51 = scmp.ne.s32.totalorder %s46, %s48
      %p52 = scmp.eq.s32.totalorder %s12, 0
      %p53 = por %p51, %p52
      %p54 = scmp.ne.s32.totalorder %s46, %s48
      %p55 = scmp.eq.s32.totalorder %s17, 1
      %p56 = por %p54, %p55
      %p57 = scmp.ne.s32.totalorder %s48, %s49
      %p58 = scmp.eq.s32.totalorder %s17, 0
      %p59 = por %p57, %p58
      %p60 = scmp.ne.s32.totalorder %s48, %s49
      %p61 = scmp.eq.s32.totalorder %s18, 1
      %p62 = por %p60, %p61
      %p64 = scmp.ne.s32.totalorder %s49, %s63
      %p65 = scmp.eq.s32.totalorder %s18, 0
      %p66 = por %p64, %p65
      %s68 = sadd.s32 %s67, 1
      %p71 = scmp.eq.s32.totalorder %s12, 1
      %p72 = scmp.ne.s32.totalorder %s67, %s69
      %p73 = scmp.eq.s32.totalorder %s12, 0
      %p74 = por %p72, %p73
      %p75 = scmp.ne.s32.totalorder %s67, %s69
      %p76 = scmp.eq.s32.totalorder %s17, 1
      %p77 = por %p75, %p76
      %p78 = scmp.ne.s32.totalorder %s69, %s70
      %p79 = scmp.eq.s32.totalorder %s17, 0
      %p80 = por %p78, %p79
      %p81 = scmp.ne.s32.totalorder %s69, %s70
      %p82 = scmp.eq.s32.totalorder %s18, 1
      %p83 = por %p81, %p82
      %p85 = scmp.ne.s32.totalorder %s70, %s84
      %p86 = scmp.eq.s32.totalorder %s18, 0
      %p87 = por %p85, %p86
      %s88 = ssub.s32 %s12, %s19
      %p89 = scmp.eq.s32.totalorder %s88, 0
      %s91 = sadd.s32 %s90, 1
      %s92 = scalar_select %p89, %s90, %s91
      %p95 = pneg %p89
      %p96 = scmp.eq.s32.totalorder %s12, 1
      %p97 = por %p95, %p96
      %p98 = scmp.ne.s32.totalorder %s90, %s93
      %p99 = scmp.eq.s32.totalorder %s12, 0
      %p100 = por %p98, %p99
      %p101 = scmp.ne.s32.totalorder %s90, %s93
      %p102 = scmp.eq.s32.totalorder %s17, 1
      %p103 = por %p101, %p102
      %p104 = scmp.ne.s32.totalorder %s93, %s94
      %p105 = scmp.eq.s32.totalorder %s17, 0
      %p106 = por %p104, %p105
      %p107 = scmp.ne.s32.totalorder %s93, %s94
      %p108 = scmp.eq.s32.totalorder %s18, 1
      %p109 = por %p107, %p108
      %p111 = scmp.ne.s32.totalorder %s94, %s110
      %p112 = scmp.eq.s32.totalorder %s18, 0
      %p113 = por %p111, %p112
      %p114 = scmp.le.s32.totalorder 1, %s12
      %p115 = scmp.lt.s32.totalorder %s12, 3
      %p116 = pnand %p114, %p115
      %p117 = pneg %p116
      // Predicated region
      $region9: #{ca3d_forward.7} parent=5 // pred_check
        _
      $region10: #{ca3d_forward.7} parent=5 // pred_check_branch
        %119 = sbr.rel (%p116) target = $region12
      $region11: #{ca3d_forward.7} parent=5 // pred_region
        %s120 = ssub.s32 %s12, 1
        // Predicated region
        $region13: #{ca3d_forward.7} parent=11 // pred_check
          %p121 = pneg %p59
        $region14: #{ca3d_forward.7} parent=11 // pred_check_branch
          %123 = sbr.rel (%p121) target = $region16
        $region15: #{ca3d_forward.7} parent=11 // pred_region
          _
        $region16: #{ca3d_forward.7} parent=11 // pred_fallthru
          _
        // Predicated region
        $region17: #{ca3d_forward.7} parent=11 // pred_check
          %p124 = pneg %p80
        $region18: #{ca3d_forward.7} parent=11 // pred_check_branch
          %126 = sbr.rel (%p124) target = $region20
        $region19: #{ca3d_forward.7} parent=11 // pred_region
          _
        $region20: #{ca3d_forward.7} parent=11 // pred_fallthru
          _
      $region12: #{ca3d_forward.7} parent=5 // pred_fallthru
        _
      %p127 = scmp.lt.s32.totalorder %s12, 2
      // Predicated region
      $region21: #{ca3d_forward.7} parent=5 // pred_check
        %p128 = pneg %p127
      $region22: #{ca3d_forward.7} parent=5 // pred_check_branch
        %130 = sbr.rel (%p128) target = $region24
      $region23: #{ca3d_forward.7} parent=5 // pred_region
        // Predicated region
        $region25: #{ca3d_forward.7} parent=23 // pred_check
          %p131 = pneg %p32
        $region26: #{ca3d_forward.7} parent=23 // pred_check_branch
          %133 = sbr.rel (%p131) target = $region28
        $region27: #{ca3d_forward.7} parent=23 // pred_region
          %s134 = smul.u32 64, %s12
          %p135 = scmp.lt.s32.totalorder %s134, 127
          %s136 = scalar_select %p135, %s134, 127
          %s137 = smul.addr %s136, 8
          %s138 = scalar_lea.vmem %s0, %s137
          %s139 = smul.u32 64, %s12
        $region28: #{ca3d_forward.7} parent=23 // pred_fallthru
          _
      $region24: #{ca3d_forward.7} parent=5 // pred_fallthru
        _
      %p140 = scmp.le.s32.totalorder 1, %s12
      %p141 = scmp.lt.s32.totalorder %s12, 3
      %p142 = pnand %p140, %p141
      %p143 = pneg %p142
      // Predicated region
      $region29: #{ca3d_forward.7} parent=5 // pred_check
        _
      $region30: #{ca3d_forward.7} parent=5 // pred_check_branch
        %145 = sbr.rel (%p142) target = $region32
      $region31: #{ca3d_forward.7} parent=5 // pred_region
        %s146 = ssub.s32 %s12, 1
        %s147 = smul.u32 64, %s17
        %p148 = scmp.lt.s32.totalorder %s147, 127
        %s149 = scalar_select %p148, %s147, 127
        %s150 = smul.addr %s149, 8
        %s151 = scalar_lea.vmem %s0, %s150
        %p152 = pneg %p38
        %p153 = pneg %p35
        %p154 = pneg %p59
        %p155 = pneg %p56
        %p156 = pneg %p80
        %p157 = pneg %p77
        %p158 = pneg %p106
        %p159 = pneg %p103
        %s160 = sand.u32 %s93, 1
        %s161 = scalar_lea.sflag [#allocation3], %s160
        %s162 = sand.u32 %s93, 1
        %s163 = smul.addr %s162, 512
        %s164 = scalar_lea.vmem [#allocation2], %s163
        %s165 = smul.u32 64, %s17
        %p166 = scmp.lt.s32.totalorder %s165, 127
        %s167 = scalar_select %p166, %s165, 127
        %s168 = smul.addr %s167, 8
        %s169 = scalar_lea.vmem %s0, %s168
        %s170 = smul.u32 64, %s17
        %s171 = smul.u32 64, %s17
        %v172 = vld [vmem:[%s169] sm:$0xff]
        %v173 = vld [vmem:[%s169 + $0x8] sm:$0xff]
        %v174 = vld [vmem:[%s169 + $0x10] sm:$0xff]
        %v175 = vld [vmem:[%s169 + $0x18] sm:$0xff]
        %v176 = vld [vmem:[%s169 + $0x20] sm:$0xff]
        %v177 = vld [vmem:[%s169 + $0x28] sm:$0xff]
        %v178 = vld [vmem:[%s169 + $0x30] sm:$0xff]
        %v179 = vld [vmem:[%s169 + $0x38] sm:$0xff]
        %v180 = vld [vmem:[%s169 + $0x40] sm:$0xff]
        %v181 = vld [vmem:[%s169 + $0x48] sm:$0xff]
        %v182 = vld [vmem:[%s169 + $0x50] sm:$0xff]
        %v183 = vld [vmem:[%s169 + $0x58] sm:$0xff]
        %v184 = vld [vmem:[%s169 + $0x60] sm:$0xff]
        %v185 = vld [vmem:[%s169 + $0x68] sm:$0xff]
        %v186 = vld [vmem:[%s169 + $0x70] sm:$0xff]
        %v187 = vld [vmem:[%s169 + $0x78] sm:$0xff]
        %v188 = vld [vmem:[%s169 + $0x80] sm:$0xff]
        %v189 = vld [vmem:[%s169 + $0x88] sm:$0xff]
        %v190 = vld [vmem:[%s169 + $0x90] sm:$0xff]
        %v191 = vld [vmem:[%s169 + $0x98] sm:$0xff]
        %v192 = vld [vmem:[%s169 + $0xa0] sm:$0xff]
        %v193 = vld [vmem:[%s169 + $0xa8] sm:$0xff]
        %v194 = vld [vmem:[%s169 + $0xb0] sm:$0xff]
        %v195 = vld [vmem:[%s169 + $0xb8] sm:$0xff]
        %v196 = vld [vmem:[%s169 + $0xc0] sm:$0xff]
        %v197 = vld [vmem:[%s169 + $0xc8] sm:$0xff]
        %v198 = vld [vmem:[%s169 + $0xd0] sm:$0xff]
        %v199 = vld [vmem:[%s169 + $0xd8] sm:$0xff]
        %v200 = vld [vmem:[%s169 + $0xe0] sm:$0xff]
        %v201 = vld [vmem:[%s169 + $0xe8] sm:$0xff]
        %v202 = vld [vmem:[%s169 + $0xf0] sm:$0xff]
        %v203 = vld [vmem:[%s169 + $0xf8] sm:$0xff]
        %v204 = vld [vmem:[%s169 + $0x100] sm:$0xff]
        %v205 = vld [vmem:[%s169 + $0x108] sm:$0xff]
        %v206 = vld [vmem:[%s169 + $0x110] sm:$0xff]
        %v207 = vld [vmem:[%s169 + $0x118] sm:$0xff]
        %v208 = vld [vmem:[%s169 + $0x120] sm:$0xff]
        %v209 = vld [vmem:[%s169 + $0x128] sm:$0xff]
        %v210 = vld [vmem:[%s169 + $0x130] sm:$0xff]
        %v211 = vld [vmem:[%s169 + $0x138] sm:$0xff]
        %v212 = vld [vmem:[%s169 + $0x140] sm:$0xff]
        %v213 = vld [vmem:[%s169 + $0x148] sm:$0xff]
        %v214 = vld [vmem:[%s169 + $0x150] sm:$0xff]
        %v215 = vld [vmem:[%s169 + $0x158] sm:$0xff]
        %v216 = vld [vmem:[%s169 + $0x160] sm:$0xff]
        %v217 = vld [vmem:[%s169 + $0x168] sm:$0xff]
        %v218 = vld [vmem:[%s169 + $0x170] sm:$0xff]
        %v219 = vld [vmem:[%s169 + $0x178] sm:$0xff]
        %v220 = vld [vmem:[%s169 + $0x180] sm:$0xff]
        %v221 = vld [vmem:[%s169 + $0x188] sm:$0xff]
        %v222 = vld [vmem:[%s169 + $0x190] sm:$0xff]
        %v223 = vld [vmem:[%s169 + $0x198] sm:$0xff]
        %v224 = vld [vmem:[%s169 + $0x1a0] sm:$0xff]
        %v225 = vld [vmem:[%s169 + $0x1a8] sm:$0xff]
        %v226 = vld [vmem:[%s169 + $0x1b0] sm:$0xff]
        %v227 = vld [vmem:[%s169 + $0x1b8] sm:$0xff]
        %v228 = vld [vmem:[%s169 + $0x1c0] sm:$0xff]
        %v229 = vld [vmem:[%s169 + $0x1c8] sm:$0xff]
        %v230 = vld [vmem:[%s169 + $0x1d0] sm:$0xff]
        %v231 = vld [vmem:[%s169 + $0x1d8] sm:$0xff]
        %v232 = vld [vmem:[%s169 + $0x1e0] sm:$0xff]
        %v233 = vld [vmem:[%s169 + $0x1e8] sm:$0xff]
        %v234 = vld [vmem:[%s169 + $0x1f0] sm:$0xff]
        %v235 = vld [vmem:[%s169 + $0x1f8] sm:$0xff]
        %vm236 = vcmask 130048
        %v237 = vsel %vm236, %v172, 0.0
        %v238 = vsel %vm236, %v173, 0.0
        %v239 = vadd.f32 %v237, %v238
        %v240 = vsel %vm236, %v174, 0.0
        %v241 = vadd.f32 %v239, %v240
        %v242 = vsel %vm236, %v175, 0.0
        %v243 = vadd.f32 %v241, %v242
        %v244 = vsel %vm236, %v176, 0.0
        %v245 = vadd.f32 %v243, %v244
        %v246 = vsel %vm236, %v177, 0.0
        %v247 = vadd.f32 %v245, %v246
        %v248 = vsel %vm236, %v178, 0.0
        %v249 = vadd.f32 %v247, %v248
        %v250 = vsel %vm236, %v179, 0.0
        %v251 = vadd.f32 %v249, %v250
        %v252 = vsel %vm236, %v180, 0.0
        %v253 = vadd.f32 %v251, %v252
        %v254 = vsel %vm236, %v181, 0.0
        %v255 = vadd.f32 %v253, %v254
        %v256 = vsel %vm236, %v182, 0.0
        %v257 = vadd.f32 %v255, %v256
        %v258 = vsel %vm236, %v183, 0.0
        %v259 = vadd.f32 %v257, %v258
        %v260 = vsel %vm236, %v184, 0.0
        %v261 = vadd.f32 %v259, %v260
        %v262 = vsel %vm236, %v185, 0.0
        %v263 = vadd.f32 %v261, %v262
        %v264 = vsel %vm236, %v186, 0.0
        %v265 = vadd.f32 %v263, %v264
        %v266 = vsel %vm236, %v187, 0.0
        %v267 = vadd.f32 %v265, %v266
        %v268 = vsel %vm236, %v188, 0.0
        %v269 = vadd.f32 %v267, %v268
        %v270 = vsel %vm236, %v189, 0.0
        %v271 = vadd.f32 %v269, %v270
        %v272 = vsel %vm236, %v190, 0.0
        %v273 = vadd.f32 %v271, %v272
        %v274 = vsel %vm236, %v191, 0.0
        %v275 = vadd.f32 %v273, %v274
        %v276 = vsel %vm236, %v192, 0.0
        %v277 = vadd.f32 %v275, %v276
        %v278 = vsel %vm236, %v193, 0.0
        %v279 = vadd.f32 %v277, %v278
        %v280 = vsel %vm236, %v194, 0.0
        %v281 = vadd.f32 %v279, %v280
        %v282 = vsel %vm236, %v195, 0.0
        %v283 = vadd.f32 %v281, %v282
        %v284 = vsel %vm236, %v196, 0.0
        %v285 = vadd.f32 %v283, %v284
        %v286 = vsel %vm236, %v197, 0.0
        %v287 = vadd.f32 %v285, %v286
        %v288 = vsel %vm236, %v198, 0.0
        %v289 = vadd.f32 %v287, %v288
        %v290 = vsel %vm236, %v199, 0.0
        %v291 = vadd.f32 %v289, %v290
        %v292 = vsel %vm236, %v200, 0.0
        %v293 = vadd.f32 %v291, %v292
        %v294 = vsel %vm236, %v201, 0.0
        %v295 = vadd.f32 %v293, %v294
        %v296 = vsel %vm236, %v202, 0.0
        %v297 = vadd.f32 %v295, %v296
        %v298 = vsel %vm236, %v203, 0.0
        %v299 = vadd.f32 %v297, %v298
        %v300 = vsel %vm236, %v204, 0.0
        %v301 = vadd.f32 %v299, %v300
        %v302 = vsel %vm236, %v205, 0.0
        %v303 = vadd.f32 %v301, %v302
        %v304 = vsel %vm236, %v206, 0.0
        %v305 = vadd.f32 %v303, %v304
        %v306 = vsel %vm236, %v207, 0.0
        %v307 = vadd.f32 %v305, %v306
        %v308 = vsel %vm236, %v208, 0.0
        %v309 = vadd.f32 %v307, %v308
        %v310 = vsel %vm236, %v209, 0.0
        %v311 = vadd.f32 %v309, %v310
        %v312 = vsel %vm236, %v210, 0.0
        %v313 = vadd.f32 %v311, %v312
        %v314 = vsel %vm236, %v211, 0.0
        %v315 = vadd.f32 %v313, %v314
        %v316 = vsel %vm236, %v212, 0.0
        %v317 = vadd.f32 %v315, %v316
        %v318 = vsel %vm236, %v213, 0.0
        %v319 = vadd.f32 %v317, %v318
        %v320 = vsel %vm236, %v214, 0.0
        %v321 = vadd.f32 %v319, %v320
        %v322 = vsel %vm236, %v215, 0.0
        %v323 = vadd.f32 %v321, %v322
        %v324 = vsel %vm236, %v216, 0.0
        %v325 = vadd.f32 %v323, %v324
        %v326 = vsel %vm236, %v217, 0.0
        %v327 = vadd.f32 %v325, %v326
        %v328 = vsel %vm236, %v218, 0.0
        %v329 = vadd.f32 %v327, %v328
        %v330 = vsel %vm236, %v219, 0.0
        %v331 = vadd.f32 %v329, %v330
        %v332 = vsel %vm236, %v220, 0.0
        %v333 = vadd.f32 %v331, %v332
        %v334 = vsel %vm236, %v221, 0.0
        %v335 = vadd.f32 %v333, %v334
        %v336 = vsel %vm236, %v222, 0.0
        %v337 = vadd.f32 %v335, %v336
        %v338 = vsel %vm236, %v223, 0.0
        %v339 = vadd.f32 %v337, %v338
        %v340 = vsel %vm236, %v224, 0.0
        %v341 = vadd.f32 %v339, %v340
        %v342 = vsel %vm236, %v225, 0.0
        %v343 = vadd.f32 %v341, %v342
        %v344 = vsel %vm236, %v226, 0.0
        %v345 = vadd.f32 %v343, %v344
        %v346 = vsel %vm236, %v227, 0.0
        %v347 = vadd.f32 %v345, %v346
        %v348 = vsel %vm236, %v228, 0.0
        %v349 = vadd.f32 %v347, %v348
        %v350 = vsel %vm236, %v229, 0.0
        %v351 = vadd.f32 %v349, %v350
        %v352 = vsel %vm236, %v230, 0.0
        %v353 = vadd.f32 %v351, %v352
        %v354 = vsel %vm236, %v231, 0.0
        %v355 = vadd.f32 %v353, %v354
        %v356 = vsel %vm236, %v232, 0.0
        %v357 = vadd.f32 %v355, %v356
        %v358 = vsel %vm236, %v233, 0.0
        %v359 = vadd.f32 %v357, %v358
        %v360 = vsel %vm236, %v234, 0.0
        %v361 = vadd.f32 %v359, %v360
        %v362 = vsel %vm236, %v235, 0.0
        %v363 = vadd.f32 %v361, %v362
        %v364 = vrot.slane %v363, 4
        %v365 = vadd.f32 %v363, %v364
        %v366 = vrot.slane %v365, 2
        %v367 = vadd.f32 %v365, %v366
        %v368 = vrot.slane %v367, 1
        %v369 = vadd.f32 %v367, %v368
        %vm370 = vcmask 122880
        %v371 = vsel %vm370, %v369, 0.0
        %372 = vadd.xlane.f32.xlu0 %v371
        %v373 = vpop.xlane.xlu0 %372
        %v374 = vrot.slane %v373, 4
        %v375 = vadd.f32 %v373, %v374
        %v376 = vrot.slane %v375, 2
        %v377 = vadd.f32 %v375, %v376
        %v378 = vrot.slane %v377, 1
        %v379 = vadd.f32 %v377, %v378
        %s380 = vtos %v379
        %v381 = vmul.f32 %v172, %v172
        %v382 = vmul.f32 %v173, %v173
        %v383 = vmul.f32 %v174, %v174
        %v384 = vmul.f32 %v175, %v175
        %v385 = vmul.f32 %v176, %v176
        %v386 = vmul.f32 %v177, %v177
        %v387 = vmul.f32 %v178, %v178
        %v388 = vmul.f32 %v179, %v179
        %v389 = vmul.f32 %v180, %v180
        %v390 = vmul.f32 %v181, %v181
        %v391 = vmul.f32 %v182, %v182
        %v392 = vmul.f32 %v183, %v183
        %v393 = vmul.f32 %v184, %v184
        %v394 = vmul.f32 %v185, %v185
        %v395 = vmul.f32 %v186, %v186
        %v396 = vmul.f32 %v187, %v187
        %v397 = vmul.f32 %v188, %v188
        %v398 = vmul.f32 %v189, %v189
        %v399 = vmul.f32 %v190, %v190
        %v400 = vmul.f32 %v191, %v191
        %v401 = vmul.f32 %v192, %v192
        %v402 = vmul.f32 %v193, %v193
        %v403 = vmul.f32 %v194, %v194
        %v404 = vmul.f32 %v195, %v195
        %v405 = vmul.f32 %v196, %v196
        %v406 = vmul.f32 %v197, %v197
        %v407 = vmul.f32 %v198, %v198
        %v408 = vmul.f32 %v199, %v199
        %v409 = vmul.f32 %v200, %v200
        %v410 = vmul.f32 %v201, %v201
        %v411 = vmul.f32 %v202, %v202
        %v412 = vmul.f32 %v203, %v203
        %v413 = vmul.f32 %v204, %v204
        %v414 = vmul.f32 %v205, %v205
        %v415 = vmul.f32 %v206, %v206
        %v416 = vmul.f32 %v207, %v207
        %v417 = vmul.f32 %v208, %v208
        %v418 = vmul.f32 %v209, %v209
        %v419 = vmul.f32 %v210, %v210
        %v420 = vmul.f32 %v211, %v211
        %v421 = vmul.f32 %v212, %v212
        %v422 = vmul.f32 %v213, %v213
        %v423 = vmul.f32 %v214, %v214
        %v424 = vmul.f32 %v215, %v215
        %v425 = vmul.f32 %v216, %v216
        %v426 = vmul.f32 %v217, %v217
        %v427 = vmul.f32 %v218, %v218
        %v428 = vmul.f32 %v219, %v219
        %v429 = vmul.f32 %v220, %v220
        %v430 = vmul.f32 %v221, %v221
        %v431 = vmul.f32 %v222, %v222
        %v432 = vmul.f32 %v223, %v223
        %v433 = vmul.f32 %v224, %v224
        %v434 = vmul.f32 %v225, %v225
        %v435 = vmul.f32 %v226, %v226
        %v436 = vmul.f32 %v227, %v227
        %v437 = vmul.f32 %v228, %v228
        %v438 = vmul.f32 %v229, %v229
        %v439 = vmul.f32 %v230, %v230
        %v440 = vmul.f32 %v231, %v231
        %v441 = vmul.f32 %v232, %v232
        %v442 = vmul.f32 %v233, %v233
        %v443 = vmul.f32 %v234, %v234
        %v444 = vmul.f32 %v235, %v235
        %v445 = vsel %vm236, %v381, 0.0
        %v446 = vsel %vm236, %v382, 0.0
        %v447 = vadd.f32 %v445, %v446
        %v448 = vsel %vm236, %v383, 0.0
        %v449 = vadd.f32 %v447, %v448
        %v450 = vsel %vm236, %v384, 0.0
        %v451 = vadd.f32 %v449, %v450
        %v452 = vsel %vm236, %v385, 0.0
        %v453 = vadd.f32 %v451, %v452
        %v454 = vsel %vm236, %v386, 0.0
        %v455 = vadd.f32 %v453, %v454
        %v456 = vsel %vm236, %v387, 0.0
        %v457 = vadd.f32 %v455, %v456
        %v458 = vsel %vm236, %v388, 0.0
        %v459 = vadd.f32 %v457, %v458
        %v460 = vsel %vm236, %v389, 0.0
        %v461 = vadd.f32 %v459, %v460
        %v462 = vsel %vm236, %v390, 0.0
        %v463 = vadd.f32 %v461, %v462
        %v464 = vsel %vm236, %v391, 0.0
        %v465 = vadd.f32 %v463, %v464
        %v466 = vsel %vm236, %v392, 0.0
        %v467 = vadd.f32 %v465, %v466
        %v468 = vsel %vm236, %v393, 0.0
        %v469 = vadd.f32 %v467, %v468
        %v470 = vsel %vm236, %v394, 0.0
        %v471 = vadd.f32 %v469, %v470
        %v472 = vsel %vm236, %v395, 0.0
        %v473 = vadd.f32 %v471, %v472
        %v474 = vsel %vm236, %v396, 0.0
        %v475 = vadd.f32 %v473, %v474
        %v476 = vsel %vm236, %v397, 0.0
        %v477 = vadd.f32 %v475, %v476
        %v478 = vsel %vm236, %v398, 0.0
        %v479 = vadd.f32 %v477, %v478
        %v480 = vsel %vm236, %v399, 0.0
        %v481 = vadd.f32 %v479, %v480
        %v482 = vsel %vm236, %v400, 0.0
        %v483 = vadd.f32 %v481, %v482
        %v484 = vsel %vm236, %v401, 0.0
        %v485 = vadd.f32 %v483, %v484
        %v486 = vsel %vm236, %v402, 0.0
        %v487 = vadd.f32 %v485, %v486
        %v488 = vsel %vm236, %v403, 0.0
        %v489 = vadd.f32 %v487, %v488
        %v490 = vsel %vm236, %v404, 0.0
        %v491 = vadd.f32 %v489, %v490
        %v492 = vsel %vm236, %v405, 0.0
        %v493 = vadd.f32 %v491, %v492
        %v494 = vsel %vm236, %v406, 0.0
        %v495 = vadd.f32 %v493, %v494
        %v496 = vsel %vm236, %v407, 0.0
        %v497 = vadd.f32 %v495, %v496
        %v498 = vsel %vm236, %v408, 0.0
        %v499 = vadd.f32 %v497, %v498
        %v500 = vsel %vm236, %v409, 0.0
        %v501 = vadd.f32 %v499, %v500
        %v502 = vsel %vm236, %v410, 0.0
        %v503 = vadd.f32 %v501, %v502
        %v504 = vsel %vm236, %v411, 0.0
        %v505 = vadd.f32 %v503, %v504
        %v506 = vsel %vm236, %v412, 0.0
        %v507 = vadd.f32 %v505, %v506
        %v508 = vsel %vm236, %v413, 0.0
        %v509 = vadd.f32 %v507, %v508
        %v510 = vsel %vm236, %v414, 0.0
        %v511 = vadd.f32 %v509, %v510
        %v512 = vsel %vm236, %v415, 0.0
        %v513 = vadd.f32 %v511, %v512
        %v514 = vsel %vm236, %v416, 0.0
        %v515 = vadd.f32 %v513, %v514
        %v516 = vsel %vm236, %v417, 0.0
        %v517 = vadd.f32 %v515, %v516
        %v518 = vsel %vm236, %v418, 0.0
        %v519 = vadd.f32 %v517, %v518
        %v520 = vsel %vm236, %v419, 0.0
        %v521 = vadd.f32 %v519, %v520
        %v522 = vsel %vm236, %v420, 0.0
        %v523 = vadd.f32 %v521, %v522
        %v524 = vsel %vm236, %v421, 0.0
        %v525 = vadd.f32 %v523, %v524
        %v526 = vsel %vm236, %v422, 0.0
        %v527 = vadd.f32 %v525, %v526
        %v528 = vsel %vm236, %v423, 0.0
        %v529 = vadd.f32 %v527, %v528
        %v530 = vsel %vm236, %v424, 0.0
        %v531 = vadd.f32 %v529, %v530
        %v532 = vsel %vm236, %v425, 0.0
        %v533 = vadd.f32 %v531, %v532
        %v534 = vsel %vm236, %v426, 0.0
        %v535 = vadd.f32 %v533, %v534
        %v536 = vsel %vm236, %v427, 0.0
        %v537 = vadd.f32 %v535, %v536
        %v538 = vsel %vm236, %v428, 0.0
        %v539 = vadd.f32 %v537, %v538
        %v540 = vsel %vm236, %v429, 0.0
        %v541 = vadd.f32 %v539, %v540
        %v542 = vsel %vm236, %v430, 0.0
        %v543 = vadd.f32 %v541, %v542
        %v544 = vsel %vm236, %v431, 0.0
        %v545 = vadd.f32 %v543, %v544
        %v546 = vsel %vm236, %v432, 0.0
        %v547 = vadd.f32 %v545, %v546
        %v548 = vsel %vm236, %v433, 0.0
        %v549 = vadd.f32 %v547, %v548
        %v550 = vsel %vm236, %v434, 0.0
        %v551 = vadd.f32 %v549, %v550
        %v552 = vsel %vm236, %v435, 0.0
        %v553 = vadd.f32 %v551, %v552
        %v554 = vsel %vm236, %v436, 0.0
        %v555 = vadd.f32 %v553, %v554
        %v556 = vsel %vm236, %v437, 0.0
        %v557 = vadd.f32 %v555, %v556
        %v558 = vsel %vm236, %v438, 0.0
        %v559 = vadd.f32 %v557, %v558
        %v560 = vsel %vm236, %v439, 0.0
        %v561 = vadd.f32 %v559, %v560
        %v562 = vsel %vm236, %v440, 0.0
        %v563 = vadd.f32 %v561, %v562
        %v564 = vsel %vm236, %v441, 0.0
        %v565 = vadd.f32 %v563, %v564
        %v566 = vsel %vm236, %v442, 0.0
        %v567 = vadd.f32 %v565, %v566
        %v568 = vsel %vm236, %v443, 0.0
        %v569 = vadd.f32 %v567, %v568
        %v570 = vsel %vm236, %v444, 0.0
        %v571 = vadd.f32 %v569, %v570
        %572 = vadd.xlane.f32.xlu0 %v571
        %v573 = vpop.xlane.xlu0 %572
        %v574 = vrot.slane %v573, 4
        %v575 = vadd.f32 %v573, %v574
        %v576 = vrot.slane %v575, 2
        %v577 = vadd.f32 %v575, %v576
        %v578 = vrot.slane %v577, 1
        %v579 = vadd.f32 %v577, %v578
        %s580 = vtos %v579
        %v581 = vrcp.pop 8192.0
        %s582 = vtos %v581
        %s583 = smul.f32 %s380, %s582
        %v584 = vrcp.pop 8192.0
        %s585 = vtos %v584
        %s586 = smul.f32 %s580, %s585
        %s587 = smul.f32 %s583, %s583
        %s588 = ssub.f32 %s586, %s587
        %s589 = sadd.f32 %s588, 1e-05
        %v590 = vstv %s589
        %v591 = vrsqrt.pop %v590
        %s592 = vtos %v591
        %v593 = vstv %s583
        %v594 = vsub.f32 %v172, %v593
        %v595 = vsub.f32 %v173, %v593
        %v596 = vsub.f32 %v174, %v593
        %v597 = vsub.f32 %v175, %v593
        %v598 = vsub.f32 %v176, %v593
        %v599 = vsub.f32 %v177, %v593
        %v600 = vsub.f32 %v178, %v593
        %v601 = vsub.f32 %v179, %v593
        %v602 = vsub.f32 %v180, %v593
        %v603 = vsub.f32 %v181, %v593
        %v604 = vsub.f32 %v182, %v593
        %v605 = vsub.f32 %v183, %v593
        %v606 = vsub.f32 %v184, %v593
        %v607 = vsub.f32 %v185, %v593
        %v608 = vsub.f32 %v186, %v593
        %v609 = vsub.f32 %v187, %v593
        %v610 = vsub.f32 %v188, %v593
        %v611 = vsub.f32 %v189, %v593
        %v612 = vsub.f32 %v190, %v593
        %v613 = vsub.f32 %v191, %v593
        %v614 = vsub.f32 %v192, %v593
        %v615 = vsub.f32 %v193, %v593
        %v616 = vsub.f32 %v194, %v593
        %v617 = vsub.f32 %v195, %v593
        %v618 = vsub.f32 %v196, %v593
        %v619 = vsub.f32 %v197, %v593
        %v620 = vsub.f32 %v198, %v593
        %v621 = vsub.f32 %v199, %v593
        %v622 = vsub.f32 %v200, %v593
        %v623 = vsub.f32 %v201, %v593
        %v624 = vsub.f32 %v202, %v593
        %v625 = vsub.f32 %v203, %v593
        %v626 = vsub.f32 %v204, %v593
        %v627 = vsub.f32 %v205, %v593
        %v628 = vsub.f32 %v206, %v593
        %v629 = vsub.f32 %v207, %v593
        %v630 = vsub.f32 %v208, %v593
        %v631 = vsub.f32 %v209, %v593
        %v632 = vsub.f32 %v210, %v593
        %v633 = vsub.f32 %v211, %v593
        %v634 = vsub.f32 %v212, %v593
        %v635 = vsub.f32 %v213, %v593
        %v636 = vsub.f32 %v214, %v593
        %v637 = vsub.f32 %v215, %v593
        %v638 = vsub.f32 %v216, %v593
        %v639 = vsub.f32 %v217, %v593
        %v640 = vsub.f32 %v218, %v593
        %v641 = vsub.f32 %v219, %v593
        %v642 = vsub.f32 %v220, %v593
        %v643 = vsub.f32 %v221, %v593
        %v644 = vsub.f32 %v222, %v593
        %v645 = vsub.f32 %v223, %v593
        %v646 = vsub.f32 %v224, %v593
        %v647 = vsub.f32 %v225, %v593
        %v648 = vsub.f32 %v226, %v593
        %v649 = vsub.f32 %v227, %v593
        %v650 = vsub.f32 %v228, %v593
        %v651 = vsub.f32 %v229, %v593
        %v652 = vsub.f32 %v230, %v593
        %v653 = vsub.f32 %v231, %v593
        %v654 = vsub.f32 %v232, %v593
        %v655 = vsub.f32 %v233, %v593
        %v656 = vsub.f32 %v234, %v593
        %v657 = vsub.f32 %v235, %v593
        %v658 = vstv %s592
        %v659 = vmul.f32 %v594, %v658
        %v660 = vmul.f32 %v595, %v658
        %v661 = vmul.f32 %v596, %v658
        %v662 = vmul.f32 %v597, %v658
        %v663 = vmul.f32 %v598, %v658
        %v664 = vmul.f32 %v599, %v658
        %v665 = vmul.f32 %v600, %v658
        %v666 = vmul.f32 %v601, %v658
        %v667 = vmul.f32 %v602, %v658
        %v668 = vmul.f32 %v603, %v658
        %v669 = vmul.f32 %v604, %v658
        %v670 = vmul.f32 %v605, %v658
        %v671 = vmul.f32 %v606, %v658
        %v672 = vmul.f32 %v607, %v658
        %v673 = vmul.f32 %v608, %v658
        %v674 = vmul.f32 %v609, %v658
        %v675 = vmul.f32 %v610, %v658
        %v676 = vmul.f32 %v611, %v658
        %v677 = vmul.f32 %v612, %v658
        %v678 = vmul.f32 %v613, %v658
        %v679 = vmul.f32 %v614, %v658
        %v680 = vmul.f32 %v615, %v658
        %v681 = vmul.f32 %v616, %v658
        %v682 = vmul.f32 %v617, %v658
        %v683 = vmul.f32 %v618, %v658
        %v684 = vmul.f32 %v619, %v658
        %v685 = vmul.f32 %v620, %v658
        %v686 = vmul.f32 %v621, %v658
        %v687 = vmul.f32 %v622, %v658
        %v688 = vmul.f32 %v623, %v658
        %v689 = vmul.f32 %v624, %v658
        %v690 = vmul.f32 %v625, %v658
        %v691 = vmul.f32 %v626, %v658
        %v692 = vmul.f32 %v627, %v658
        %v693 = vmul.f32 %v628, %v658
        %v694 = vmul.f32 %v629, %v658
        %v695 = vmul.f32 %v630, %v658
        %v696 = vmul.f32 %v631, %v658
        %v697 = vmul.f32 %v632, %v658
        %v698 = vmul.f32 %v633, %v658
        %v699 = vmul.f32 %v634, %v658
        %v700 = vmul.f32 %v635, %v658
        %v701 = vmul.f32 %v636, %v658
        %v702 = vmul.f32 %v637, %v658
        %v703 = vmul.f32 %v638, %v658
        %v704 = vmul.f32 %v639, %v658
        %v705 = vmul.f32 %v640, %v658
        %v706 = vmul.f32 %v641, %v658
        %v707 = vmul.f32 %v642, %v658
        %v708 = vmul.f32 %v643, %v658
        %v709 = vmul.f32 %v644, %v658
        %v710 = vmul.f32 %v645, %v658
        %v711 = vmul.f32 %v646, %v658
        %v712 = vmul.f32 %v647, %v658
        %v713 = vmul.f32 %v648, %v658
        %v714 = vmul.f32 %v649, %v658
        %v715 = vmul.f32 %v650, %v658
        %v716 = vmul.f32 %v651, %v658
        %v717 = vmul.f32 %v652, %v658
        %v718 = vmul.f32 %v653, %v658
        %v719 = vmul.f32 %v654, %v658
        %v720 = vmul.f32 %v655, %v658
        %v721 = vmul.f32 %v656, %v658
        %v722 = vmul.f32 %v657, %v658
        %v723 = vld [vmem:[%s1] sm:$0x1]
        %v725 = vlaneseq
        %v726 = vshrl.u32 %v725, 7
        %v727 = vsub.s32 0, %v726
        %v728 = vrot.slane %v723, %v727
        %v730 = vmul.f32 %v659, %v728
        %v731 = vmul.f32 %v660, %v728
        %v732 = vmul.f32 %v661, %v728
        %v733 = vmul.f32 %v662, %v728
        %v734 = vmul.f32 %v663, %v728
        %v735 = vmul.f32 %v664, %v728
        %v736 = vmul.f32 %v665, %v728
        %v737 = vmul.f32 %v666, %v728
        %v738 = vmul.f32 %v667, %v728
        %v739 = vmul.f32 %v668, %v728
        %v740 = vmul.f32 %v669, %v728
        %v741 = vmul.f32 %v670, %v728
        %v742 = vmul.f32 %v671, %v728
        %v743 = vmul.f32 %v672, %v728
        %v744 = vmul.f32 %v673, %v728
        %v745 = vmul.f32 %v674, %v728
        %v746 = vmul.f32 %v675, %v728
        %v747 = vmul.f32 %v676, %v728
        %v748 = vmul.f32 %v677, %v728
        %v749 = vmul.f32 %v678, %v728
        %v750 = vmul.f32 %v679, %v728
        %v751 = vmul.f32 %v680, %v728
        %v752 = vmul.f32 %v681, %v728
        %v753 = vmul.f32 %v682, %v728
        %v754 = vmul.f32 %v683, %v728
        %v755 = vmul.f32 %v684, %v728
        %v756 = vmul.f32 %v685, %v728
        %v757 = vmul.f32 %v686, %v728
        %v758 = vmul.f32 %v687, %v728
        %v759 = vmul.f32 %v688, %v728
        %v760 = vmul.f32 %v689, %v728
        %v761 = vmul.f32 %v690, %v728
        %v762 = vmul.f32 %v691, %v728
        %v763 = vmul.f32 %v692, %v728
        %v764 = vmul.f32 %v693, %v728
        %v765 = vmul.f32 %v694, %v728
        %v766 = vmul.f32 %v695, %v728
        %v767 = vmul.f32 %v696, %v728
        %v768 = vmul.f32 %v697, %v728
        %v769 = vmul.f32 %v698, %v728
        %v770 = vmul.f32 %v699, %v728
        %v771 = vmul.f32 %v700, %v728
        %v772 = vmul.f32 %v701, %v728
        %v773 = vmul.f32 %v702, %v728
        %v774 = vmul.f32 %v703, %v728
        %v775 = vmul.f32 %v704, %v728
        %v776 = vmul.f32 %v705, %v728
        %v777 = vmul.f32 %v706, %v728
        %v778 = vmul.f32 %v707, %v728
        %v779 = vmul.f32 %v708, %v728
        %v780 = vmul.f32 %v709, %v728
        %v781 = vmul.f32 %v710, %v728
        %v782 = vmul.f32 %v711, %v728
        %v783 = vmul.f32 %v712, %v728
        %v784 = vmul.f32 %v713, %v728
        %v785 = vmul.f32 %v714, %v728
        %v786 = vmul.f32 %v715, %v728
        %v787 = vmul.f32 %v716, %v728
        %v788 = vmul.f32 %v717, %v728
        %v789 = vmul.f32 %v718, %v728
        %v790 = vmul.f32 %v719, %v728
        %v791 = vmul.f32 %v720, %v728
        %v792 = vmul.f32 %v721, %v728
        %v793 = vmul.f32 %v722, %v728
        %v794 = vld [vmem:[%s2] sm:$0x1]
        %v796 = vlaneseq
        %v797 = vshrl.u32 %v796, 7
        %v798 = vsub.s32 0, %v797
        %v799 = vrot.slane %v794, %v798
        %v801 = vadd.f32 %v730, %v799
        %v802 = vadd.f32 %v731, %v799
        %v803 = vadd.f32 %v732, %v799
        %v804 = vadd.f32 %v733, %v799
        %v805 = vadd.f32 %v734, %v799
        %v806 = vadd.f32 %v735, %v799
        %v807 = vadd.f32 %v736, %v799
        %v808 = vadd.f32 %v737, %v799
        %v809 = vadd.f32 %v738, %v799
        %v810 = vadd.f32 %v739, %v799
        %v811 = vadd.f32 %v740, %v799
        %v812 = vadd.f32 %v741, %v799
        %v813 = vadd.f32 %v742, %v799
        %v814 = vadd.f32 %v743, %v799
        %v815 = vadd.f32 %v744, %v799
        %v816 = vadd.f32 %v745, %v799
        %v817 = vadd.f32 %v746, %v799
        %v818 = vadd.f32 %v747, %v799
        %v819 = vadd.f32 %v748, %v799
        %v820 = vadd.f32 %v749, %v799
        %v821 = vadd.f32 %v750, %v799
        %v822 = vadd.f32 %v751, %v799
        %v823 = vadd.f32 %v752, %v799
        %v824 = vadd.f32 %v753, %v799
        %v825 = vadd.f32 %v754, %v799
        %v826 = vadd.f32 %v755, %v799
        %v827 = vadd.f32 %v756, %v799
        %v828 = vadd.f32 %v757, %v799
        %v829 = vadd.f32 %v758, %v799
        %v830 = vadd.f32 %v759, %v799
        %v831 = vadd.f32 %v760, %v799
        %v832 = vadd.f32 %v761, %v799
        %v833 = vadd.f32 %v762, %v799
        %v834 = vadd.f32 %v763, %v799
        %v835 = vadd.f32 %v764, %v799
        %v836 = vadd.f32 %v765, %v799
        %v837 = vadd.f32 %v766, %v799
        %v838 = vadd.f32 %v767, %v799
        %v839 = vadd.f32 %v768, %v799
        %v840 = vadd.f32 %v769, %v799
        %v841 = vadd.f32 %v770, %v799
        %v842 = vadd.f32 %v771, %v799
        %v843 = vadd.f32 %v772, %v799
        %v844 = vadd.f32 %v773, %v799
        %v845 = vadd.f32 %v774, %v799
        %v846 = vadd.f32 %v775, %v799
        %v847 = vadd.f32 %v776, %v799
        %v848 = vadd.f32 %v777, %v799
        %v849 = vadd.f32 %v778, %v799
        %v850 = vadd.f32 %v779, %v799
        %v851 = vadd.f32 %v780, %v799
        %v852 = vadd.f32 %v781, %v799
        %v853 = vadd.f32 %v782, %v799
        %v854 = vadd.f32 %v783, %v799
        %v855 = vadd.f32 %v784, %v799
        %v856 = vadd.f32 %v785, %v799
        %v857 = vadd.f32 %v786, %v799
        %v858 = vadd.f32 %v787, %v799
        %v859 = vadd.f32 %v788, %v799
        %v860 = vadd.f32 %v789, %v799
        %v861 = vadd.f32 %v790, %v799
        %v862 = vadd.f32 %v791, %v799
        %v863 = vadd.f32 %v792, %v799
        %v864 = vadd.f32 %v793, %v799
        %865 = vst.msk [vmem:[%s164] sm:$0xff] %vm236, %v801
        %866 = vst.msk [vmem:[%s164 + $0x8] sm:$0xff] %vm236, %v802
        %867 = vst.msk [vmem:[%s164 + $0x10] sm:$0xff] %vm236, %v803
        %868 = vst.msk [vmem:[%s164 + $0x18] sm:$0xff] %vm236, %v804
        %869 = vst.msk [vmem:[%s164 + $0x20] sm:$0xff] %vm236, %v805
        %870 = vst.msk [vmem:[%s164 + $0x28] sm:$0xff] %vm236, %v806
        %871 = vst.msk [vmem:[%s164 + $0x30] sm:$0xff] %vm236, %v807
        %872 = vst.msk [vmem:[%s164 + $0x38] sm:$0xff] %vm236, %v808
        %873 = vst.msk [vmem:[%s164 + $0x40] sm:$0xff] %vm236, %v809
        %874 = vst.msk [vmem:[%s164 + $0x48] sm:$0xff] %vm236, %v810
        %875 = vst.msk [vmem:[%s164 + $0x50] sm:$0xff] %vm236, %v811
        %876 = vst.msk [vmem:[%s164 + $0x58] sm:$0xff] %vm236, %v812
        %877 = vst.msk [vmem:[%s164 + $0x60] sm:$0xff] %vm236, %v813
        %878 = vst.msk [vmem:[%s164 + $0x68] sm:$0xff] %vm236, %v814
        %879 = vst.msk [vmem:[%s164 + $0x70] sm:$0xff] %vm236, %v815
        %880 = vst.msk [vmem:[%s164 + $0x78] sm:$0xff] %vm236, %v816
        %881 = vst.msk [vmem:[%s164 + $0x80] sm:$0xff] %vm236, %v817
        %882 = vst.msk [vmem:[%s164 + $0x88] sm:$0xff] %vm236, %v818
        %883 = vst.msk [vmem:[%s164 + $0x90] sm:$0xff] %vm236, %v819
        %884 = vst.msk [vmem:[%s164 + $0x98] sm:$0xff] %vm236, %v820
        %885 = vst.msk [vmem:[%s164 + $0xa0] sm:$0xff] %vm236, %v821
        %886 = vst.msk [vmem:[%s164 + $0xa8] sm:$0xff] %vm236, %v822
        %887 = vst.msk [vmem:[%s164 + $0xb0] sm:$0xff] %vm236, %v823
        %888 = vst.msk [vmem:[%s164 + $0xb8] sm:$0xff] %vm236, %v824
        %889 = vst.msk [vmem:[%s164 + $0xc0] sm:$0xff] %vm236, %v825
        %890 = vst.msk [vmem:[%s164 + $0xc8] sm:$0xff] %vm236, %v826
        %891 = vst.msk [vmem:[%s164 + $0xd0] sm:$0xff] %vm236, %v827
        %892 = vst.msk [vmem:[%s164 + $0xd8] sm:$0xff] %vm236, %v828
        %893 = vst.msk [vmem:[%s164 + $0xe0] sm:$0xff] %vm236, %v829
        %894 = vst.msk [vmem:[%s164 + $0xe8] sm:$0xff] %vm236, %v830
        %895 = vst.msk [vmem:[%s164 + $0xf0] sm:$0xff] %vm236, %v831
        %896 = vst.msk [vmem:[%s164 + $0xf8] sm:$0xff] %vm236, %v832
        %897 = vst.msk [vmem:[%s164 + $0x100] sm:$0xff] %vm236, %v833
        %898 = vst.msk [vmem:[%s164 + $0x108] sm:$0xff] %vm236, %v834
        %899 = vst.msk [vmem:[%s164 + $0x110] sm:$0xff] %vm236, %v835
        %900 = vst.msk [vmem:[%s164 + $0x118] sm:$0xff] %vm236, %v836
        %901 = vst.msk [vmem:[%s164 + $0x120] sm:$0xff] %vm236, %v837
        %902 = vst.msk [vmem:[%s164 + $0x128] sm:$0xff] %vm236, %v838
        %903 = vst.msk [vmem:[%s164 + $0x130] sm:$0xff] %vm236, %v839
        %904 = vst.msk [vmem:[%s164 + $0x138] sm:$0xff] %vm236, %v840
        %905 = vst.msk [vmem:[%s164 + $0x140] sm:$0xff] %vm236, %v841
        %906 = vst.msk [vmem:[%s164 + $0x148] sm:$0xff] %vm236, %v842
        %907 = vst.msk [vmem:[%s164 + $0x150] sm:$0xff] %vm236, %v843
        %908 = vst.msk [vmem:[%s164 + $0x158] sm:$0xff] %vm236, %v844
        %909 = vst.msk [vmem:[%s164 + $0x160] sm:$0xff] %vm236, %v845
        %910 = vst.msk [vmem:[%s164 + $0x168] sm:$0xff] %vm236, %v846
        %911 = vst.msk [vmem:[%s164 + $0x170] sm:$0xff] %vm236, %v847
        %912 = vst.msk [vmem:[%s164 + $0x178] sm:$0xff] %vm236, %v848
        %913 = vst.msk [vmem:[%s164 + $0x180] sm:$0xff] %vm236, %v849
        %914 = vst.msk [vmem:[%s164 + $0x188] sm:$0xff] %vm236, %v850
        %915 = vst.msk [vmem:[%s164 + $0x190] sm:$0xff] %vm236, %v851
        %916 = vst.msk [vmem:[%s164 + $0x198] sm:$0xff] %vm236, %v852
        %917 = vst.msk [vmem:[%s164 + $0x1a0] sm:$0xff] %vm236, %v853
        %918 = vst.msk [vmem:[%s164 + $0x1a8] sm:$0xff] %vm236, %v854
        %919 = vst.msk [vmem:[%s164 + $0x1b0] sm:$0xff] %vm236, %v855
        %920 = vst.msk [vmem:[%s164 + $0x1b8] sm:$0xff] %vm236, %v856
        %921 = vst.msk [vmem:[%s164 + $0x1c0] sm:$0xff] %vm236, %v857
        %922 = vst.msk [vmem:[%s164 + $0x1c8] sm:$0xff] %vm236, %v858
        %923 = vst.msk [vmem:[%s164 + $0x1d0] sm:$0xff] %vm236, %v859
        %924 = vst.msk [vmem:[%s164 + $0x1d8] sm:$0xff] %vm236, %v860
        %925 = vst.msk [vmem:[%s164 + $0x1e0] sm:$0xff] %vm236, %v861
        %926 = vst.msk [vmem:[%s164 + $0x1e8] sm:$0xff] %vm236, %v862
        %927 = vst.msk [vmem:[%s164 + $0x1f0] sm:$0xff] %vm236, %v863
        %928 = vst.msk [vmem:[%s164 + $0x1f8] sm:$0xff] %vm236, %v864
        %s929 = sand.u32 %s93, 1
        %s930 = scalar_lea.sflag [#allocation3], %s929
        %s931 = sand.u32 %s93, 1
        %s932 = smul.addr %s931, 512
        %s933 = scalar_lea.vmem [#allocation2], %s932
        // Predicated region
        $region33: #{ca3d_forward.7} parent=31 // pred_check
          %p934 = pneg %p103
        $region34: #{ca3d_forward.7} parent=31 // pred_check_branch
          %936 = sbr.rel (%p934) target = $region36
        $region35: #{ca3d_forward.7} parent=31 // pred_region
          %s937 = smul.u32 64, %s17
          %s939 = ssub.s32 8192, 8192
          %940 = vsyncadd %s930, %s939
          %s941 = smul.addr %s937, 128
          %s942 = scalar_lea.hbm %s3, %s941
          %s943 = sshll.u32 %s933, 4
          %s944 = int_to_ptr.vmem [resolvable:$true] %s943
          %949 = dma.vmem_to_hbm [thread:$0]  %s944, 8192, %s942, %s930, 128, 128, 8
        $region36: #{ca3d_forward.7} parent=31 // pred_fallthru
          _
      $region32: #{ca3d_forward.7} parent=5 // pred_fallthru
        _
      %p950 = scmp.le.s32.totalorder 2, %s12
      // Predicated region
      $region37: #{ca3d_forward.7} parent=5 // pred_check
        %p951 = pneg %p950
      $region38: #{ca3d_forward.7} parent=5 // pred_check_branch
        %953 = sbr.rel (%p951) target = $region40
      $region39: #{ca3d_forward.7} parent=5 // pred_region
        %s954 = ssub.s32 %s12, 2
        // Predicated region
        $region41: #{ca3d_forward.7} parent=39 // pred_check
          %p955 = pneg %p109
        $region42: #{ca3d_forward.7} parent=39 // pred_check_branch
          %957 = sbr.rel (%p955) target = $region44
        $region43: #{ca3d_forward.7} parent=39 // pred_region
          %s958 = sand.u32 %s94, 1
          %s959 = scalar_lea.sflag [#allocation3], %s958
          %s960 = sand.u32 %s94, 1
          %s961 = smul.addr %s960, 512
          %s962 = scalar_lea.vmem [#allocation2], %s961
          %963 = dma.done %s959, 8192
        $region44: #{ca3d_forward.7} parent=39 // pred_fallthru
          _
      $region40: #{ca3d_forward.7} parent=5 // pred_fallthru
        _
    $region6: #{ca3d_forward.7} parent=1 // loop_footer
      %s16 = sadd.s32 1, %s12
    $region7: #{ca3d_forward.7} parent=1 // loop_footer_branch
      %11 = sbr.rel target = $region3
    $region8: #{ca3d_forward.7} parent=1 // loop_exit
      _
    %964 = vsyncpa [#allocation3], 1
    %s965 = scalar_lea.sflag [#allocation3], 1
    %966 = vsyncpa %s965, 1

</llo_original>
